<compile_context>
chip_gen: v7x
topology: tpu7x:2x2x1
jax: 0.10.0
libtpu: 0.0.40
codegen_flags: <defaults>
</compile_context>

<pallas_src>
import numpy as np

import jax
import jax.numpy as jnp
from jax.experimental import pallas as pl
from jax.experimental.pallas import tpu as pltpu

LATENT_DIM = 2
MATMUL_DTYPE = jnp.bfloat16   # encoder MXU operand dtype (f32 accumulation)


# ----------------------------------------------------------------------------
# Pallas kernel 1: encoder conv1 (fused mu/logvar) as a transposed matmul.
#   out(10, 1849) = W(10, 25) @ patches(25, 1849)   (lane-dense pixel dim)
# ----------------------------------------------------------------------------
def _enc1_kernel(p_ref, w_ref, b_ref, o_ref):
    acc = jnp.dot(w_ref[...], p_ref[0], preferred_element_type=jnp.float32)
    acc = jnp.maximum(acc + b_ref[...], 0.0)          # (10,1) bias, lane bcast
    o_ref[0] = acc.astype(o_ref.dtype)


def pallas_enc1(patches, w, b):
    B, K, P = patches.shape
    OC = w.shape[0]
    cost = pl.CostEstimate(
        flops=int(2 * B * OC * K * P),
        transcendentals=0,
        bytes_accessed=int(B * K * P * 2 + OC * K * 2 + OC * 4 + B * OC * P * 2))
    return pl.pallas_call(
        _enc1_kernel,
        out_shape=jax.ShapeDtypeStruct((B, OC, P), MATMUL_DTYPE),
        grid=(B,),
        in_specs=[
            pl.BlockSpec((1, K, P), lambda i: (i, 0, 0)),
            pl.BlockSpec((OC, K), lambda i: (0, 0)),
            pl.BlockSpec((OC, 1), lambda i: (0, 0)),
        ],
        out_specs=pl.BlockSpec((1, OC, P), lambda i: (i, 0, 0)),
        compiler_params=pltpu.CompilerParams(dimension_semantics=("parallel",)),
        cost_estimate=cost,
    )(patches, w, b)


# ----------------------------------------------------------------------------
# Pallas kernel 2: enc conv2 + to_mu3/to_logvar3 + reparameterize + d1 +
#                  d2 (ConvTranspose) + d3 (ConvTranspose) + exact sigmoid.
# One batch element per grid step; every intermediate stays in VMEM.
# ----------------------------------------------------------------------------
def _fused_tail_decoder_kernel(
        p2_ref, eps_ref, w2_ref, b2_ref, w3_ref, b3_ref,
        wd1_ref, bd1_ref, t2_ref, bd2_ref, t3_ref, bd3_ref,
        xp_ref, mu_ref, lv_ref, z_ref, pad2_ref, pad3_ref):
    f32 = jnp.float32

    # ---- encoder conv2 (mu/logvar fused block-diagonal), relu ----
    h2 = jnp.dot(w2_ref[...], p2_ref[0], preferred_element_type=f32)
    h2 = jnp.maximum(h2 + b2_ref[...], 0.0)                       # (20,400) f32

    # ---- to_mu3 / to_logvar3: f32 VPU multiply + XLU reduce (K=8000, tiny) ----
    def lin_head(j):
        s = jnp.sum(h2 * w3_ref[j], axis=1, keepdims=True)        # (20, 1)
        s = jnp.sum(s, axis=0, keepdims=True)                     # (1, 1)
        return s + b3_ref[j]

    mu0, mu1, lv0, lv1 = lin_head(0), lin_head(1), lin_head(2), lin_head(3)

    # ---- reparameterize ----
    eps = eps_ref[0]                                               # (1, 2)
    z0 = mu0 + eps[:, 0:1] * jnp.exp(0.5 * lv0)                    # (1, 1)
    z1 = mu1 + eps[:, 1:2] * jnp.exp(0.5 * lv1)
    mu_ref[0] = jnp.concatenate([mu0, mu1], axis=1)
    lv_ref[0] = jnp.concatenate([lv0, lv1], axis=1)
    z_ref[0] = jnp.concatenate([z0, z1], axis=1)

    # ---- d1: Linear(2, 4000) as two scalar-times-matrix MACs, relu ----
    # output layout (h=20, w*10+c=200), i.e. ready for the row-Toeplitz d2 conv
    hd = jnp.maximum(z0 * wd1_ref[0] + z1 * wd1_ref[1] + bd1_ref[...], 0.0)

    # ---- d2: ConvTranspose2d(10, 5, 5) as 5 row-Toeplitz matmuls ----
    # H padding via zero-initialised VMEM scratch; W padding folded into T2.
    pad2_ref[...] = jnp.zeros_like(pad2_ref)
    pad2_ref[pl.ds(4, 20), :] = hd
    acc2 = jnp.zeros((24, 120), f32)
    for dh in range(5):
        acc2 = acc2 + jnp.dot(pad2_ref[pl.ds(dh, 24), :], t2_ref[dh],
                              preferred_element_type=f32)
    d2o = jnp.maximum(acc2 + bd2_ref[...], 0.0)                    # (24, 120)

    # ---- d3: ConvTranspose2d(5, 1, 5) + exact sigmoid ----
    pad3_ref[...] = jnp.zeros_like(pad3_ref)
    pad3_ref[pl.ds(4, 24), :] = d2o
    acc3 = jnp.zeros((28, 28), f32)
    for dh in range(5):
        acc3 = acc3 + jnp.dot(pad3_ref[pl.ds(dh, 28), :], t3_ref[dh],
                              preferred_element_type=f32)
    logits = acc3 + bd3_ref[...]
    # exact reciprocal (not approx) — this is the model's primary output.
    xp_ref[0] = 1.0 / (1.0 + jnp.exp(-logits))


def pallas_fused_tail_decoder(p2, eps3, q):
    B = p2.shape[0]
    f32 = jnp.float32
    args = (p2, eps3, q["enc2_w"], q["enc2_b"], q["mulv3_w"], q["mulv3_b"],
            q["d1_w"], q["d1_b"], q["d2_t"], q["d2_b"], q["d3_t"], q["d3_b"])
    flops = 2 * B * (20 * 250 * 400 + 4 * 20 * 400 + 2 * 20 * 200
                     + 5 * 24 * 200 * 120 + 5 * 28 * 120 * 28)
    in_bytes = sum(int(a.size) * jnp.dtype(a.dtype).itemsize for a in args)
    out_bytes = B * (28 * 28 + 3 * LATENT_DIM) * 4
    cost = pl.CostEstimate(flops=int(flops),
                           transcendentals=int(B * (2 + 2 * 28 * 28)),
                           bytes_accessed=int(in_bytes + out_bytes))
    const2 = lambda i: (0, 0)
    const3 = lambda i: (0, 0, 0)
    return pl.pallas_call(
        _fused_tail_decoder_kernel,
        out_shape=(
            jax.ShapeDtypeStruct((B, 28, 28), f32),           # x_pred (H, W)
            jax.ShapeDtypeStruct((B, 1, LATENT_DIM), f32),    # mu
            jax.ShapeDtypeStruct((B, 1, LATENT_DIM), f32),    # logvar
            jax.ShapeDtypeStruct((B, 1, LATENT_DIM), f32),    # z
        ),
        grid=(B,),
        in_specs=[
            pl.BlockSpec((1, 250, 400), lambda i: (i, 0, 0)),        # patches2
            pl.BlockSpec((1, 1, LATENT_DIM), lambda i: (i, 0, 0)),   # epsilon
            pl.BlockSpec((20, 250), const2),                         # enc2 W
            pl.BlockSpec((20, 1), const2),                           # enc2 b
            pl.BlockSpec((4, 20, 400), const3),                      # mu3/lv3 W
            pl.BlockSpec((4, 1, 1), const3),                         # mu3/lv3 b
            pl.BlockSpec((2, 20, 200), const3),                      # d1 W
            pl.BlockSpec((20, 200), const2),                         # d1 b
            pl.BlockSpec((5, 200, 120), const3),                     # d2 Toeplitz
            pl.BlockSpec((1, 120), const2),                          # d2 bias
            pl.BlockSpec((5, 120, 28), const3),                      # d3 Toeplitz
            pl.BlockSpec((1, 28), const2),                           # d3 bias
        ],
        out_specs=(
            pl.BlockSpec((1, 28, 28), lambda i: (i, 0, 0)),
            pl.BlockSpec((1, 1, LATENT_DIM), lambda i: (i, 0, 0)),
            pl.BlockSpec((1, 1, LATENT_DIM), lambda i: (i, 0, 0)),
            pl.BlockSpec((1, 1, LATENT_DIM), lambda i: (i, 0, 0)),
        ),
        scratch_shapes=[pltpu.VMEM((28, 200), f32),   # H-padded d1 output
                        pltpu.VMEM((32, 120), f32)],  # H-padded d2 output
        compiler_params=pltpu.CompilerParams(dimension_semantics=("parallel",)),
        cost_estimate=cost,
    )(*args)


# ----------------------------------------------------------------------------
# Forward pass (jitted).  Only XLA glue left: 2 im2col ops + trivial reshapes.
# ----------------------------------------------------------------------------
def vae_forward(q, x, eps):
    B = x.shape[0]
    xb = x.astype(MATMUL_DTYPE)                                   # NCHW bf16
    # im2col for the two strided encoder convs; feature order is (c, kh, kw).
    p1 = jax.lax.conv_general_dilated_patches(
        xb, (5, 5), (2, 2), "VALID",
        dimension_numbers=("NCHW", "OIHW", "NCHW"))               # (B,25,43,43)
    p1 = p1.reshape(B, 25, 43 * 43)
    h1 = pallas_enc1(p1, q["enc1_w"], q["enc1_b"])                # (B,10,1849)
    p2 = jax.lax.conv_general_dilated_patches(
        h1.reshape(B, 10, 43, 43), (5, 5), (2, 2), "VALID",
        dimension_numbers=("NCHW", "OIHW", "NCHW"))               # (B,250,20,20)
    p2 = p2.reshape(B, 250, 400)
    xp, mu, lv, z = pallas_fused_tail_decoder(
        p2, eps.reshape(B, 1, LATENT_DIM).astype(jnp.float32), q)
    return (xp.reshape(B, 1, 28, 28),
            z.reshape(B, LATENT_DIM),
            mu.reshape(B, LATENT_DIM),
            lv.reshape(B, LATENT_DIM))


# ----------------------------------------------------------------------------
# Parameter init (PyTorch layouts, f32) and one-time kernel-ready packing.
# ----------------------------------------------------------------------------
def init_params(key):
    ks = jax.random.split(key, 18)

    def conv_p(k1, k2, oc, ic, ksz):
        bound = 1.0 / (ic * ksz * ksz) ** 0.5
        w = jax.random.uniform(k1, (oc, ic, ksz, ksz), jnp.float32, -bound, bound)
        b = jax.random.uniform(k2, (oc,), jnp.float32, -bound, bound)
        return w, b

    def convT_p(k1, k2, ic, oc, ksz):
        bound = 1.0 / (oc * ksz * ksz) ** 0.5
        w = jax.random.uniform(k1, (ic, oc, ksz, ksz), jnp.float32, -bound, bound)
        b = jax.random.uniform(k2, (oc,), jnp.float32, -bound, bound)
        return w, b

    def lin_p(k1, k2, in_f, out_f):
        bound = 1.0 / in_f ** 0.5
        w = jax.random.uniform(k1, (in_f, out_f), jnp.float32, -bound, bound)
        b = jax.random.uniform(k2, (out_f,), jnp.float32, -bound, bound)
        return w, b

    p = {}
    p["mu1_w"], p["mu1_b"] = conv_p(ks[0], ks[1], 5, 1, 5)
    p["mu2_w"], p["mu2_b"] = conv_p(ks[2], ks[3], 10, 5, 5)
    p["mu3_w"], p["mu3_b"] = lin_p(ks[4], ks[5], 4000, LATENT_DIM)
    p["lv1_w"], p["lv1_b"] = conv_p(ks[6], ks[7], 5, 1, 5)
    p["lv2_w"], p["lv2_b"] = conv_p(ks[8], ks[9], 10, 5, 5)
    p["lv3_w"], p["lv3_b"] = lin_p(ks[10], ks[11], 4000, LATENT_DIM)
    p["d1_w"], p["d1_b"] = lin_p(ks[12], ks[13], LATENT_DIM, 4000)
    p["d2_w"], p["d2_b"] = convT_p(ks[14], ks[15], 10, 5, 5)
    p["d3_w"], p["d3_b"] = convT_p(ks[16], ks[17], 5, 1, 5)
    return p


def prepare_params(p):
    """One-time (outside jit) packing into kernel-ready layouts."""
    f32, mm = jnp.float32, MATMUL_DTYPE
    k = 5

    # enc conv1: mu/logvar branches concatenated along OC (ch 0..4 / 5..9).
    w_enc1 = jnp.concatenate([p["mu1_w"], p["lv1_w"]], axis=0).reshape(10, -1)
    b_enc1 = jnp.concatenate([p["mu1_b"], p["lv1_b"]], axis=0).reshape(10, 1)

    # enc conv2: block-diagonal over the fused channels (OC 0..9 mu, 10..19 lv).
    w_enc2 = jnp.zeros((20, 10, k, k), f32)
    w_enc2 = w_enc2.at[0:10, 0:5].set(p["mu2_w"]).at[10:20, 5:10].set(p["lv2_w"])
    w_enc2 = w_enc2.reshape(20, -1)
    b_enc2 = jnp.concatenate([p["mu2_b"], p["lv2_b"]], axis=0).reshape(20, 1)

    # to_mu3/to_logvar3 against the fused (20 ch, 400 px) activation.
    def head(w_lin, lo):
        wr = w_lin.T.reshape(LATENT_DIM, 10, 400)
        return jnp.zeros((LATENT_DIM, 20, 400), f32).at[:, lo:lo + 10, :].set(wr)

    w_mulv3 = jnp.concatenate([head(p["mu3_w"], 0), head(p["lv3_w"], 10)], axis=0)
    b_mulv3 = jnp.concatenate([p["mu3_b"], p["lv3_b"]]).reshape(4, 1, 1)

    # d1: Linear(2, 4000); output columns permuted (c,h,w) -> (h, (w,c)).
    w_d1 = p["d1_w"].reshape(LATENT_DIM, 10, 20, 20).transpose(0, 2, 3, 1)
    w_d1 = w_d1.reshape(LATENT_DIM, 20, 200)
    b_d1 = p["d1_b"].reshape(10, 20, 20).transpose(1, 2, 0).reshape(20, 200)

    # ConvTranspose -> per-kernel-row Toeplitz matrices (W padding folded in):
    #   T_dh[wi*C + ci, wo*OC + co] = Wconv[co, ci, dh, wi - wo + (k-1)]
    def toeplitz(wT, in_w):
        wT = np.asarray(wT, np.float32)                  # (IC, OC, k, k)
        ic, oc = wT.shape[0], wT.shape[1]
        wc = np.flip(wT, (2, 3)).transpose(1, 0, 2, 3)   # equivalent conv (OC,IC,k,k)
        out_w = in_w + k - 1
        t = np.zeros((k, in_w, ic, out_w, oc), np.float32)
        for dh in range(k):
            for wo in range(out_w):
                for dw in range(k):
                    wi = wo + dw - (k - 1)
                    if 0 <= wi < in_w:
                        t[dh, wi, :, wo, :] = wc[:, :, dh, dw].T
        return jnp.asarray(t.reshape(k, in_w * ic, out_w * oc))

    return dict(
        enc1_w=w_enc1.astype(mm), enc1_b=b_enc1.astype(f32),
        enc2_w=w_enc2.astype(mm), enc2_b=b_enc2.astype(f32),
        mulv3_w=w_mulv3.astype(f32), mulv3_b=b_mulv3.astype(f32),
        d1_w=w_d1.astype(f32), d1_b=b_d1.astype(f32),
        d2_t=toeplitz(p["d2_w"], 20),
        d2_b=jnp.tile(p["d2_b"], 24).reshape(1, 120).astype(f32),
        d3_t=toeplitz(p["d3_w"], 24),
        d3_b=jnp.tile(p["d3_b"], 28).reshape(1, 28).astype(f32),
    )


# ----------------------------------------------------------------------------
# Pure-JAX f32 reference (PyTorch semantics) for the correctness check.
# ----------------------------------------------------------------------------
def _ref_conv(x, w, b, stride):
    y = jax.lax.conv_general_dilated(
        x, w, (stride, stride), "VALID",
        dimension_numbers=("NCHW", "OIHW", "NCHW"))
    return y + b[None, :, None, None]


def ref_forward(params, x, eps):
    mu = jax.nn.relu(_ref_conv(x, params["mu1_w"], params["mu1_b"], 2))
    mu = jax.nn.relu(_ref_conv(mu, params["mu2_w"], params["mu2_b"], 2))
    mu = mu.reshape(mu.shape[0], -1) @ params["mu3_w"] + params["mu3_b"]
    lv = jax.nn.relu(_ref_conv(x, params["lv1_w"], params["lv1_b"], 2))
    lv = jax.nn.relu(_ref_conv(lv, params["lv2_w"], params["lv2_b"], 2))
    lv = lv.reshape(lv.shape[0], -1) @ params["lv3_w"] + params["lv3_b"]
    z = mu + eps * jnp.exp(0.5 * lv)
    h = jax.nn.relu(z @ params["d1_w"] + params["d1_b"]).reshape(-1, 10, 20, 20)

    def convT(t, w, b):
        ic, oc, k, _ = w.shape
        tp = jnp.pad(t, ((0, 0), (0, 0), (k - 1, k - 1), (k - 1, k - 1)))
        wc = jnp.flip(w, (2, 3)).transpose(1, 0, 2, 3)      # (OC, IC, k, k)
        return _ref_conv(tp, wc, b, 1)

    h = jax.nn.relu(convT(h, params["d2_w"], params["d2_b"]))
    x_pred = jax.nn.sigmoid(convT(h, params["d3_w"], params["d3_b"]))
    return x_pred, z, mu, lv


# ----------------------------------------------------------------------------
if __name__ == "__main__":
    key = jax.random.PRNGKey(0)
    kx, keps, kp = jax.random.split(key, 3)

    B = 2
    # Input spatial size 89 is forced by Linear(4000, 2): (89-5)//2+1 = 43,
    # (43-5)//2+1 = 20, 10*20*20 = 4000.
    x = jax.random.uniform(kx, (B, 1, 89, 89), dtype=jnp.float32)
    eps = jax.random.normal(keps, (B, LATENT_DIM), dtype=jnp.float32)

    params = init_params(kp)
    q = prepare_params(params)           # kernel-ready weights, once, un-jitted

    fwd = jax.jit(vae_forward)
    x_pred, z, mu, logvar = fwd(q, x, eps)
    jax.block_until_ready((x_pred, z, mu, logvar))

    assert x_pred.shape == (B, 1, 28, 28), x_pred.shape
    assert z.shape == (B, LATENT_DIM) and mu.shape == (B, LATENT_DIM)
    assert logvar.shape == (B, LATENT_DIM)

    # Correctness vs pure-f32 XLA reference.  Only the two encoder convs use
    # bf16 operands (f32 accumulation); observed max error is ~1e-3, tolerance
    # kept at 2e-2 for headroom.
    r_x, r_z, r_mu, r_lv = jax.jit(ref_forward)(params, x, eps)
    for name, a, r in (("x_pred", x_pred, r_x), ("z", z, r_z),
                       ("mu", mu, r_mu), ("logvar", logvar, r_lv)):
        err = float(jnp.max(jnp.abs(a - r)))
        assert jnp.allclose(a, r, rtol=2e-2, atol=2e-2), (name, err)

    print("KERNEL_OK")
</pallas_src>

<mosaic_0001>
module attributes {stable_mosaic.version = 11 : i64} {
  func.func @_enc1_kernel(%arg0: i32, %arg1: memref<1x25x1849xbf16, #tpu.memory_space<vmem>>, %arg2: memref<10x25xbf16, #tpu.memory_space<vmem>>, %arg3: memref<10x1xf32, #tpu.memory_space<vmem>>, %arg4: memref<1x10x1849xbf16, #tpu.memory_space<vmem>>) attributes {dimension_semantics = [#tpu.dimension_semantics<parallel>], iteration_bounds = array<i64: 2>, scalar_prefetch = 0 : i64, scratch_operands = 0 : i64, tpu.core_type = #tpu.core_type<tc>, window_params = [{transform_indices = @transform_0, window_bounds = array<i64: 1, 25, 1849>}, {pipeline_mode = #tpu.pipeline_mode<synchronous>, transform_indices = @transform_1, window_bounds = array<i64: 10, 25>}, {pipeline_mode = #tpu.pipeline_mode<synchronous>, transform_indices = @transform_2, window_bounds = array<i64: 10, 1>}, {transform_indices = @transform_3, window_bounds = array<i64: 1, 10, 1849>}]} {
    %c0 = arith.constant 0 : index
    %c0_0 = arith.constant 0 : index
    %0 = vector.load %arg2[%c0, %c0_0] : memref<10x25xbf16, #tpu.memory_space<vmem>>, vector<10x25xbf16>
    %c0_1 = arith.constant 0 : index
    %c0_2 = arith.constant 0 : index
    %c0_3 = arith.constant 0 : index
    %1 = vector.load %arg1[%c0_1, %c0_2, %c0_3] : memref<1x25x1849xbf16, #tpu.memory_space<vmem>>, vector<1x25x1849xbf16>
    %2 = vector.shape_cast %1 : vector<1x25x1849xbf16> to vector<25x1849xbf16>
    %cst = arith.constant dense<0.000000e+00> : vector<10x1849xf32>
    %3 = tpu.matmul %0, %2, %cst {dimension_numbers = #tpu.dot_dimension_numbers<[1], [0], [0], [1], [0, 0, 1, 1], [], []>} : vector<10x25xbf16>, vector<25x1849xbf16>, vector<10x1849xf32> -> vector<10x1849xf32>
    %c0_4 = arith.constant 0 : index
    %c0_5 = arith.constant 0 : index
    %4 = vector.load %arg3[%c0_4, %c0_5] : memref<10x1xf32, #tpu.memory_space<vmem>>, vector<10x1xf32>
    %5 = vector.broadcast %4 : vector<10x1xf32> to vector<10x1849xf32>
    %6 = arith.addf %3, %5 : vector<10x1849xf32>
    %cst_6 = arith.constant 0.000000e+00 : f32
    %7 = vector.broadcast %cst_6 : f32 to vector<10x1849xf32>
    %8 = arith.maximumf %6, %7 : vector<10x1849xf32>
    %9 = arith.truncf %8 : vector<10x1849xf32> to vector<10x1849xbf16>
    %c0_7 = arith.constant 0 : index
    %c0_8 = arith.constant 0 : index
    %c0_9 = arith.constant 0 : index
    %10 = vector.load %arg4[%c0_7, %c0_8, %c0_9] : memref<1x10x1849xbf16, #tpu.memory_space<vmem>>, vector<1x10x1849xbf16>
    %11 = vector.shape_cast %10 : vector<1x10x1849xbf16> to vector<10x1849xbf16>
    %12 = vector.shape_cast %9 : vector<10x1849xbf16> to vector<1x10x1849xbf16>
    tpu.vector_store %arg4[%c0_7, %c0_8, %c0_9], %12 {strides = array<i32>} : memref<1x10x1849xbf16, #tpu.memory_space<vmem>>, vector<1x10x1849xbf16>,
    return
  }
  func.func @transform_0(%arg0: i32) -> (i32, i32, i32) {
    %c0_i32 = arith.constant 0 : i32
    %c0_i32_0 = arith.constant 0 : i32
    %c0_i32_1 = arith.constant 0 : i32
    return %arg0, %c0_i32, %c0_i32_0 : i32, i32, i32
  }
  func.func @transform_1(%arg0: i32) -> (i32, i32) {
    %c0_i32 = arith.constant 0 : i32
    %c0_i32_0 = arith.constant 0 : i32
    %c0_i32_1 = arith.constant 0 : i32
    return %c0_i32, %c0_i32_0 : i32, i32
  }
  func.func @transform_2(%arg0: i32) -> (i32, i32) {
    %c0_i32 = arith.constant 0 : i32
    %c0_i32_0 = arith.constant 0 : i32
    %c0_i32_1 = arith.constant 0 : i32
    return %c0_i32, %c0_i32_0 : i32, i32
  }
  func.func @transform_3(%arg0: i32) -> (i32, i32, i32) {
    %c0_i32 = arith.constant 0 : i32
    %c0_i32_0 = arith.constant 0 : i32
    %c0_i32_1 = arith.constant 0 : i32
    return %arg0, %c0_i32, %c0_i32_0 : i32, i32, i32
  }
}

module attributes {stable_mosaic.version = 11 : i64} {
  func.func @_fused_tail_decoder_kernel(%arg0: i32, %arg1: memref<1x250x400xbf16, #tpu.memory_space<vmem>>, %arg2: memref<1x1x2xf32, #tpu.memory_space<vmem>>, %arg3: memref<20x250xbf16, #tpu.memory_space<vmem>>, %arg4: memref<20x1xf32, #tpu.memory_space<vmem>>, %arg5: memref<4x20x400xf32, #tpu.memory_space<vmem>>, %arg6: memref<4x1x1xf32, #tpu.memory_space<vmem>>, %arg7: memref<2x20x200xf32, #tpu.memory_space<vmem>>, %arg8: memref<20x200xf32, #tpu.memory_space<vmem>>, %arg9: memref<5x200x120xf32, #tpu.memory_space<vmem>>, %arg10: memref<1x120xf32, #tpu.memory_space<vmem>>, %arg11: memref<5x120x28xf32, #tpu.memory_space<vmem>>, %arg12: memref<1x28xf32, #tpu.memory_space<vmem>>, %arg13: memref<1x28x28xf32, #tpu.memory_space<vmem>>, %arg14: memref<1x1x2xf32, #tpu.memory_space<vmem>>, %arg15: memref<1x1x2xf32, #tpu.memory_space<vmem>>, %arg16: memref<1x1x2xf32, #tpu.memory_space<vmem>>, %arg17: memref<28x200xf32, #tpu.memory_space<vmem>>, %arg18: memref<32x120xf32, #tpu.memory_space<vmem>>) attributes {dimension_semantics = [#tpu.dimension_semantics<parallel>], iteration_bounds = array<i64: 2>, scalar_prefetch = 0 : i64, scratch_operands = 2 : i64, tpu.core_type = #tpu.core_type<tc>, window_params = [{transform_indices = @transform_0, window_bounds = array<i64: 1, 250, 400>}, {transform_indices = @transform_1, window_bounds = array<i64: 1, 1, 2>}, {pipeline_mode = #tpu.pipeline_mode<synchronous>, transform_indices = @transform_2, window_bounds = array<i64: 20, 250>}, {pipeline_mode = #tpu.pipeline_mode<synchronous>, transform_indices = @transform_3, window_bounds = array<i64: 20, 1>}, {pipeline_mode = #tpu.pipeline_mode<synchronous>, transform_indices = @transform_4, window_bounds = array<i64: 4, 20, 400>}, {pipeline_mode = #tpu.pipeline_mode<synchronous>, transform_indices = @transform_5, window_bounds = array<i64: 4, 1, 1>}, {pipeline_mode = #tpu.pipeline_mode<synchronous>, transform_indices = @transform_6, window_bounds = array<i64: 2, 20, 200>}, {pipeline_mode = #tpu.pipeline_mode<synchronous>, transform_indices = @transform_7, window_bounds = array<i64: 20, 200>}, {pipeline_mode = #tpu.pipeline_mode<synchronous>, transform_indices = @transform_8, window_bounds = array<i64: 5, 200, 120>}, {pipeline_mode = #tpu.pipeline_mode<synchronous>, transform_indices = @transform_9, window_bounds = array<i64: 1, 120>}, {pipeline_mode = #tpu.pipeline_mode<synchronous>, transform_indices = @transform_10, window_bounds = array<i64: 5, 120, 28>}, {pipeline_mode = #tpu.pipeline_mode<synchronous>, transform_indices = @transform_11, window_bounds = array<i64: 1, 28>}, {transform_indices = @transform_12, window_bounds = array<i64: 1, 28, 28>}, {transform_indices = @transform_13, window_bounds = array<i64: 1, 1, 2>}, {transform_indices = @transform_14, window_bounds = array<i64: 1, 1, 2>}, {transform_indices = @transform_15, window_bounds = array<i64: 1, 1, 2>}]} {
    %c0 = arith.constant 0 : index
    %c0_0 = arith.constant 0 : index
    %0 = vector.load %arg3[%c0, %c0_0] : memref<20x250xbf16, #tpu.memory_space<vmem>>, vector<20x250xbf16>
    %c0_1 = arith.constant 0 : index
    %c0_2 = arith.constant 0 : index
    %c0_3 = arith.constant 0 : index
    %1 = vector.load %arg1[%c0_1, %c0_2, %c0_3] : memref<1x250x400xbf16, #tpu.memory_space<vmem>>, vector<1x250x400xbf16>
    %2 = vector.shape_cast %1 : vector<1x250x400xbf16> to vector<250x400xbf16>
    %cst = arith.constant dense<0.000000e+00> : vector<20x400xf32>
    %3 = tpu.matmul %0, %2, %cst {dimension_numbers = #tpu.dot_dimension_numbers<[1], [0], [0], [1], [0, 0, 1, 1], [], []>} : vector<20x250xbf16>, vector<250x400xbf16>, vector<20x400xf32> -> vector<20x400xf32>
    %c0_4 = arith.constant 0 : index
    %c0_5 = arith.constant 0 : index
    %4 = vector.load %arg4[%c0_4, %c0_5] : memref<20x1xf32, #tpu.memory_space<vmem>>, vector<20x1xf32>
    %5 = vector.broadcast %4 : vector<20x1xf32> to vector<20x400xf32>
    %6 = arith.addf %3, %5 : vector<20x400xf32>
    %cst_6 = arith.constant 0.000000e+00 : f32
    %7 = vector.broadcast %cst_6 : f32 to vector<20x400xf32>
    %8 = arith.maximumf %6, %7 : vector<20x400xf32>
    %c0_7 = arith.constant 0 : index
    %c0_8 = arith.constant 0 : index
    %c0_9 = arith.constant 0 : index
    %9 = vector.load %arg5[%c0_7, %c0_8, %c0_9] : memref<4x20x400xf32, #tpu.memory_space<vmem>>, vector<1x20x400xf32>
    %10 = vector.shape_cast %9 : vector<1x20x400xf32> to vector<20x400xf32>
    %11 = arith.mulf %8, %10 : vector<20x400xf32>
    %cst_10 = arith.constant dense<0.000000e+00> : vector<20xf32>
    %12 = vector.multi_reduction <add>, %11, %cst_10 [1] : vector<20x400xf32> to vector<20xf32>
    %13 = vector.shape_cast %12 : vector<20xf32> to vector<20x1xf32>
    %cst_11 = arith.constant dense<0.000000e+00> : vector<1xf32>
    %14 = vector.multi_reduction <add>, %13, %cst_11 [0] : vector<20x1xf32> to vector<1xf32>
    %15 = vector.shape_cast %14 : vector<1xf32> to vector<1x1xf32>
    %c0_12 = arith.constant 0 : index
    %c0_13 = arith.constant 0 : index
    %c0_14 = arith.constant 0 : index
    %16 = vector.load %arg6[%c0_12, %c0_13, %c0_14] : memref<4x1x1xf32, #tpu.memory_space<vmem>>, vector<1x1x1xf32>
    %17 = vector.shape_cast %16 : vector<1x1x1xf32> to vector<1x1xf32>
    %18 = arith.addf %15, %17 : vector<1x1xf32>
    %c1 = arith.constant 1 : index
    %c0_15 = arith.constant 0 : index
    %c0_16 = arith.constant 0 : index
    %19 = vector.load %arg5[%c1, %c0_15, %c0_16] : memref<4x20x400xf32, #tpu.memory_space<vmem>>, vector<1x20x400xf32>
    %20 = vector.shape_cast %19 : vector<1x20x400xf32> to vector<20x400xf32>
    %21 = arith.mulf %8, %20 : vector<20x400xf32>
    %cst_17 = arith.constant dense<0.000000e+00> : vector<20xf32>
    %22 = vector.multi_reduction <add>, %21, %cst_17 [1] : vector<20x400xf32> to vector<20xf32>
    %23 = vector.shape_cast %22 : vector<20xf32> to vector<20x1xf32>
    %cst_18 = arith.constant dense<0.000000e+00> : vector<1xf32>
    %24 = vector.multi_reduction <add>, %23, %cst_18 [0] : vector<20x1xf32> to vector<1xf32>
    %25 = vector.shape_cast %24 : vector<1xf32> to vector<1x1xf32>
    %c1_19 = arith.constant 1 : index
    %c0_20 = arith.constant 0 : index
    %c0_21 = arith.constant 0 : index
    %26 = vector.load %arg6[%c1_19, %c0_20, %c0_21] : memref<4x1x1xf32, #tpu.memory_space<vmem>>, vector<1x1x1xf32>
    %27 = vector.shape_cast %26 : vector<1x1x1xf32> to vector<1x1xf32>
    %28 = arith.addf %25, %27 : vector<1x1xf32>
    %c2 = arith.constant 2 : index
    %c0_22 = arith.constant 0 : index
    %c0_23 = arith.constant 0 : index
    %29 = vector.load %arg5[%c2, %c0_22, %c0_23] : memref<4x20x400xf32, #tpu.memory_space<vmem>>, vector<1x20x400xf32>
    %30 = vector.shape_cast %29 : vector<1x20x400xf32> to vector<20x400xf32>
    %31 = arith.mulf %8, %30 : vector<20x400xf32>
    %cst_24 = arith.constant dense<0.000000e+00> : vector<20xf32>
    %32 = vector.multi_reduction <add>, %31, %cst_24 [1] : vector<20x400xf32> to vector<20xf32>
    %33 = vector.shape_cast %32 : vector<20xf32> to vector<20x1xf32>
    %cst_25 = arith.constant dense<0.000000e+00> : vector<1xf32>
    %34 = vector.multi_reduction <add>, %33, %cst_25 [0] : vector<20x1xf32> to vector<1xf32>
    %35 = vector.shape_cast %34 : vector<1xf32> to vector<1x1xf32>
    %c2_26 = arith.constant 2 : index
    %c0_27 = arith.constant 0 : index
    %c0_28 = arith.constant 0 : index
    %36 = vector.load %arg6[%c2_26, %c0_27, %c0_28] : memref<4x1x1xf32, #tpu.memory_space<vmem>>, vector<1x1x1xf32>
    %37 = vector.shape_cast %36 : vector<1x1x1xf32> to vector<1x1xf32>
    %38 = arith.addf %35, %37 : vector<1x1xf32>
    %c3 = arith.constant 3 : index
    %c0_29 = arith.constant 0 : index
    %c0_30 = arith.constant 0 : index
    %39 = vector.load %arg5[%c3, %c0_29, %c0_30] : memref<4x20x400xf32, #tpu.memory_space<vmem>>, vector<1x20x400xf32>
    %40 = vector.shape_cast %39 : vector<1x20x400xf32> to vector<20x400xf32>
    %41 = arith.mulf %8, %40 : vector<20x400xf32>
    %cst_31 = arith.constant dense<0.000000e+00> : vector<20xf32>
    %42 = vector.multi_reduction <add>, %41, %cst_31 [1] : vector<20x400xf32> to vector<20xf32>
    %43 = vector.shape_cast %42 : vector<20xf32> to vector<20x1xf32>
    %cst_32 = arith.constant dense<0.000000e+00> : vector<1xf32>
    %44 = vector.multi_reduction <add>, %43, %cst_32 [0] : vector<20x1xf32> to vector<1xf32>
    %45 = vector.shape_cast %44 : vector<1xf32> to vector<1x1xf32>
    %c3_33 = arith.constant 3 : index
    %c0_34 = arith.constant 0 : index
    %c0_35 = arith.constant 0 : index
    %46 = vector.load %arg6[%c3_33, %c0_34, %c0_35] : memref<4x1x1xf32, #tpu.memory_space<vmem>>, vector<1x1x1xf32>
    %47 = vector.shape_cast %46 : vector<1x1x1xf32> to vector<1x1xf32>
    %48 = arith.addf %45, %47 : vector<1x1xf32>
    %c0_36 = arith.constant 0 : index
    %c0_37 = arith.constant 0 : index
    %c0_38 = arith.constant 0 : index
    %49 = vector.load %arg2[%c0_36, %c0_37, %c0_38] : memref<1x1x2xf32, #tpu.memory_space<vmem>>, vector<1x1x2xf32>
    %50 = vector.shape_cast %49 : vector<1x1x2xf32> to vector<1x2xf32>
    %51 = vector.extract_strided_slice %50 {offsets = [0, 0], sizes = [1, 1], strides = [1, 1]} : vector<1x2xf32> to vector<1x1xf32>
    %cst_39 = arith.constant 5.000000e-01 : f32
    %52 = vector.broadcast %cst_39 : f32 to vector<1x1xf32>
    %53 = arith.mulf %52, %38 : vector<1x1xf32>
    %54 = math.exp %53 : vector<1x1xf32>
    %55 = arith.mulf %51, %54 : vector<1x1xf32>
    %56 = arith.addf %18, %55 : vector<1x1xf32>
    %57 = vector.extract_strided_slice %50 {offsets = [0, 1], sizes = [1, 1], strides = [1, 1]} : vector<1x2xf32> to vector<1x1xf32>
    %cst_40 = arith.constant 5.000000e-01 : f32
    %58 = vector.broadcast %cst_40 : f32 to vector<1x1xf32>
    %59 = arith.mulf %58, %48 : vector<1x1xf32>
    %60 = math.exp %59 : vector<1x1xf32>
    %61 = arith.mulf %57, %60 : vector<1x1xf32>
    %62 = arith.addf %28, %61 : vector<1x1xf32>
    %63 = tpu.concatenate %18, %28 in 1 : vector<1x1xf32>, vector<1x1xf32> -> vector<1x2xf32>
    %c0_41 = arith.constant 0 : index
    %c0_42 = arith.constant 0 : index
    %c0_43 = arith.constant 0 : index
    %64 = vector.load %arg14[%c0_41, %c0_42, %c0_43] : memref<1x1x2xf32, #tpu.memory_space<vmem>>, vector<1x1x2xf32>
    %65 = vector.shape_cast %64 : vector<1x1x2xf32> to vector<1x2xf32>
    %66 = vector.shape_cast %63 : vector<1x2xf32> to vector<1x1x2xf32>
    tpu.vector_store %arg14[%c0_41, %c0_42, %c0_43], %66 {strides = array<i32>} : memref<1x1x2xf32, #tpu.memory_space<vmem>>, vector<1x1x2xf32>,
    %67 = tpu.concatenate %38, %48 in 1 : vector<1x1xf32>, vector<1x1xf32> -> vector<1x2xf32>
    %c0_44 = arith.constant 0 : index
    %c0_45 = arith.constant 0 : index
    %c0_46 = arith.constant 0 : index
    %68 = vector.load %arg15[%c0_44, %c0_45, %c0_46] : memref<1x1x2xf32, #tpu.memory_space<vmem>>, vector<1x1x2xf32>
    %69 = vector.shape_cast %68 : vector<1x1x2xf32> to vector<1x2xf32>
    %70 = vector.shape_cast %67 : vector<1x2xf32> to vector<1x1x2xf32>
    tpu.vector_store %arg15[%c0_44, %c0_45, %c0_46], %70 {strides = array<i32>} : memref<1x1x2xf32, #tpu.memory_space<vmem>>, vector<1x1x2xf32>,
    %71 = tpu.concatenate %56, %62 in 1 : vector<1x1xf32>, vector<1x1xf32> -> vector<1x2xf32>
    %c0_47 = arith.constant 0 : index
    %c0_48 = arith.constant 0 : index
    %c0_49 = arith.constant 0 : index
    %72 = vector.load %arg16[%c0_47, %c0_48, %c0_49] : memref<1x1x2xf32, #tpu.memory_space<vmem>>, vector<1x1x2xf32>
    %73 = vector.shape_cast %72 : vector<1x1x2xf32> to vector<1x2xf32>
    %74 = vector.shape_cast %71 : vector<1x2xf32> to vector<1x1x2xf32>
    tpu.vector_store %arg16[%c0_47, %c0_48, %c0_49], %74 {strides = array<i32>} : memref<1x1x2xf32, #tpu.memory_space<vmem>>, vector<1x1x2xf32>,
    %c0_50 = arith.constant 0 : index
    %c0_51 = arith.constant 0 : index
    %c0_52 = arith.constant 0 : index
    %75 = vector.load %arg7[%c0_50, %c0_51, %c0_52] : memref<2x20x200xf32, #tpu.memory_space<vmem>>, vector<1x20x200xf32>
    %76 = vector.shape_cast %75 : vector<1x20x200xf32> to vector<20x200xf32>
    %77 = vector.broadcast %56 : vector<1x1xf32> to vector<20x200xf32>
    %78 = arith.mulf %77, %76 : vector<20x200xf32>
    %c1_53 = arith.constant 1 : index
    %c0_54 = arith.constant 0 : index
    %c0_55 = arith.constant 0 : index
    %79 = vector.load %arg7[%c1_53, %c0_54, %c0_55] : memref<2x20x200xf32, #tpu.memory_space<vmem>>, vector<1x20x200xf32>
    %80 = vector.shape_cast %79 : vector<1x20x200xf32> to vector<20x200xf32>
    %81 = vector.broadcast %62 : vector<1x1xf32> to vector<20x200xf32>
    %82 = arith.mulf %81, %80 : vector<20x200xf32>
    %83 = arith.addf %78, %82 : vector<20x200xf32>
    %c0_56 = arith.constant 0 : index
    %c0_57 = arith.constant 0 : index
    %84 = vector.load %arg8[%c0_56, %c0_57] : memref<20x200xf32, #tpu.memory_space<vmem>>, vector<20x200xf32>
    %85 = arith.addf %83, %84 : vector<20x200xf32>
    %cst_58 = arith.constant 0.000000e+00 : f32
    %86 = vector.broadcast %cst_58 : f32 to vector<20x200xf32>
    %87 = arith.maximumf %85, %86 : vector<20x200xf32>
    %cst_59 = arith.constant 0.000000e+00 : f32
    %88 = vector.broadcast %cst_59 : f32 to vector<28x200xf32>
    %c0_60 = arith.constant 0 : index
    %c0_61 = arith.constant 0 : index
    %89 = vector.load %arg17[%c0_60, %c0_61] : memref<28x200xf32, #tpu.memory_space<vmem>>, vector<28x200xf32>
    tpu.vector_store %arg17[%c0_60, %c0_61], %88 {strides = array<i32>} : memref<28x200xf32, #tpu.memory_space<vmem>>, vector<28x200xf32>,
    %c4 = arith.constant 4 : index
    %c0_62 = arith.constant 0 : index
    %90 = vector.load %arg17[%c4, %c0_62] : memref<28x200xf32, #tpu.memory_space<vmem>>, vector<20x200xf32>
    tpu.vector_store %arg17[%c4, %c0_62], %87 {strides = array<i32>} : memref<28x200xf32, #tpu.memory_space<vmem>>, vector<20x200xf32>,
    %cst_63 = arith.constant 0.000000e+00 : f32
    %91 = vector.broadcast %cst_63 : f32 to vector<24x120xf32>
    %c0_64 = arith.constant 0 : index
    %c0_65 = arith.constant 0 : index
    %92 = vector.load %arg17[%c0_64, %c0_65] : memref<28x200xf32, #tpu.memory_space<vmem>>, vector<24x200xf32>
    %c0_66 = arith.constant 0 : index
    %c0_67 = arith.constant 0 : index
    %c0_68 = arith.constant 0 : index
    %93 = vector.load %arg9[%c0_66, %c0_67, %c0_68] : memref<5x200x120xf32, #tpu.memory_space<vmem>>, vector<1x200x120xf32>
    %94 = vector.shape_cast %93 : vector<1x200x120xf32> to vector<200x120xf32>
    %cst_69 = arith.constant dense<0.000000e+00> : vector<24x120xf32>
    %95 = tpu.matmul %92, %94, %cst_69 {dimension_numbers = #tpu.dot_dimension_numbers<[1], [0], [0], [1], [0, 0, 1, 1], [], []>} : vector<24x200xf32>, vector<200x120xf32>, vector<24x120xf32> -> vector<24x120xf32>
    %96 = arith.addf %91, %95 : vector<24x120xf32>
    %c1_70 = arith.constant 1 : index
    %c0_71 = arith.constant 0 : index
    %97 = vector.load %arg17[%c1_70, %c0_71] : memref<28x200xf32, #tpu.memory_space<vmem>>, vector<24x200xf32>
    %c1_72 = arith.constant 1 : index
    %c0_73 = arith.constant 0 : index
    %c0_74 = arith.constant 0 : index
    %98 = vector.load %arg9[%c1_72, %c0_73, %c0_74] : memref<5x200x120xf32, #tpu.memory_space<vmem>>, vector<1x200x120xf32>
    %99 = vector.shape_cast %98 : vector<1x200x120xf32> to vector<200x120xf32>
    %cst_75 = arith.constant dense<0.000000e+00> : vector<24x120xf32>
    %100 = tpu.matmul %97, %99, %cst_75 {dimension_numbers = #tpu.dot_dimension_numbers<[1], [0], [0], [1], [0, 0, 1, 1], [], []>} : vector<24x200xf32>, vector<200x120xf32>, vector<24x120xf32> -> vector<24x120xf32>
    %101 = arith.addf %96, %100 : vector<24x120xf32>
    %c2_76 = arith.constant 2 : index
    %c0_77 = arith.constant 0 : index
    %102 = vector.load %arg17[%c2_76, %c0_77] : memref<28x200xf32, #tpu.memory_space<vmem>>, vector<24x200xf32>
    %c2_78 = arith.constant 2 : index
    %c0_79 = arith.constant 0 : index
    %c0_80 = arith.constant 0 : index
    %103 = vector.load %arg9[%c2_78, %c0_79, %c0_80] : memref<5x200x120xf32, #tpu.memory_space<vmem>>, vector<1x200x120xf32>
    %104 = vector.shape_cast %103 : vector<1x200x120xf32> to vector<200x120xf32>
    %cst_81 = arith.constant dense<0.000000e+00> : vector<24x120xf32>
    %105 = tpu.matmul %102, %104, %cst_81 {dimension_numbers = #tpu.dot_dimension_numbers<[1], [0], [0], [1], [0, 0, 1, 1], [], []>} : vector<24x200xf32>, vector<200x120xf32>, vector<24x120xf32> -> vector<24x120xf32>
    %106 = arith.addf %101, %105 : vector<24x120xf32>
    %c3_82 = arith.constant 3 : index
    %c0_83 = arith.constant 0 : index
    %107 = vector.load %arg17[%c3_82, %c0_83] : memref<28x200xf32, #tpu.memory_space<vmem>>, vector<24x200xf32>
    %c3_84 = arith.constant 3 : index
    %c0_85 = arith.constant 0 : index
    %c0_86 = arith.constant 0 : index
    %108 = vector.load %arg9[%c3_84, %c0_85, %c0_86] : memref<5x200x120xf32, #tpu.memory_space<vmem>>, vector<1x200x120xf32>
    %109 = vector.shape_cast %108 : vector<1x200x120xf32> to vector<200x120xf32>
    %cst_87 = arith.constant dense<0.000000e+00> : vector<24x120xf32>
    %110 = tpu.matmul %107, %109, %cst_87 {dimension_numbers = #tpu.dot_dimension_numbers<[1], [0], [0], [1], [0, 0, 1, 1], [], []>} : vector<24x200xf32>, vector<200x120xf32>, vector<24x120xf32> -> vector<24x120xf32>
    %111 = arith.addf %106, %110 : vector<24x120xf32>
    %c4_88 = arith.constant 4 : index
    %c0_89 = arith.constant 0 : index
    %112 = vector.load %arg17[%c4_88, %c0_89] : memref<28x200xf32, #tpu.memory_space<vmem>>, vector<24x200xf32>
    %c4_90 = arith.constant 4 : index
    %c0_91 = arith.constant 0 : index
    %c0_92 = arith.constant 0 : index
    %113 = vector.load %arg9[%c4_90, %c0_91, %c0_92] : memref<5x200x120xf32, #tpu.memory_space<vmem>>, vector<1x200x120xf32>
    %114 = vector.shape_cast %113 : vector<1x200x120xf32> to vector<200x120xf32>
    %cst_93 = arith.constant dense<0.000000e+00> : vector<24x120xf32>
    %115 = tpu.matmul %112, %114, %cst_93 {dimension_numbers = #tpu.dot_dimension_numbers<[1], [0], [0], [1], [0, 0, 1, 1], [], []>} : vector<24x200xf32>, vector<200x120xf32>, vector<24x120xf32> -> vector<24x120xf32>
    %116 = arith.addf %111, %115 : vector<24x120xf32>
    %c0_94 = arith.constant 0 : index
    %c0_95 = arith.constant 0 : index
    %117 = vector.load %arg10[%c0_94, %c0_95] : memref<1x120xf32, #tpu.memory_space<vmem>>, vector<1x120xf32>
    %118 = vector.broadcast %117 : vector<1x120xf32> to vector<24x120xf32>
    %119 = arith.addf %116, %118 : vector<24x120xf32>
    %cst_96 = arith.constant 0.000000e+00 : f32
    %120 = vector.broadcast %cst_96 : f32 to vector<24x120xf32>
    %121 = arith.maximumf %119, %120 : vector<24x120xf32>
    %cst_97 = arith.constant 0.000000e+00 : f32
    %122 = vector.broadcast %cst_97 : f32 to vector<32x120xf32>
    %c0_98 = arith.constant 0 : index
    %c0_99 = arith.constant 0 : index
    %123 = vector.load %arg18[%c0_98, %c0_99] : memref<32x120xf32, #tpu.memory_space<vmem>>, vector<32x120xf32>
    tpu.vector_store %arg18[%c0_98, %c0_99], %122 {strides = array<i32>} : memref<32x120xf32, #tpu.memory_space<vmem>>, vector<32x120xf32>,
    %c4_100 = arith.constant 4 : index
    %c0_101 = arith.constant 0 : index
    %124 = vector.load %arg18[%c4_100, %c0_101] : memref<32x120xf32, #tpu.memory_space<vmem>>, vector<24x120xf32>
    tpu.vector_store %arg18[%c4_100, %c0_101], %121 {strides = array<i32>} : memref<32x120xf32, #tpu.memory_space<vmem>>, vector<24x120xf32>,
    %cst_102 = arith.constant 0.000000e+00 : f32
    %125 = vector.broadcast %cst_102 : f32 to vector<28x28xf32>
    %c0_103 = arith.constant 0 : index
    %c0_104 = arith.constant 0 : index
    %126 = vector.load %arg18[%c0_103, %c0_104] : memref<32x120xf32, #tpu.memory_space<vmem>>, vector<28x120xf32>
    %c0_105 = arith.constant 0 : index
    %c0_106 = arith.constant 0 : index
    %c0_107 = arith.constant 0 : index
    %127 = vector.load %arg11[%c0_105, %c0_106, %c0_107] : memref<5x120x28xf32, #tpu.memory_space<vmem>>, vector<1x120x28xf32>
    %128 = vector.shape_cast %127 : vector<1x120x28xf32> to vector<120x28xf32>
    %cst_108 = arith.constant dense<0.000000e+00> : vector<28x28xf32>
    %129 = tpu.matmul %126, %128, %cst_108 {dimension_numbers = #tpu.dot_dimension_numbers<[1], [0], [0], [1], [0, 0, 1, 1], [], []>} : vector<28x120xf32>, vector<120x28xf32>, vector<28x28xf32> -> vector<28x28xf32>
    %130 = arith.addf %125, %129 : vector<28x28xf32>
    %c1_109 = arith.constant 1 : index
    %c0_110 = arith.constant 0 : index
    %131 = vector.load %arg18[%c1_109, %c0_110] : memref<32x120xf32, #tpu.memory_space<vmem>>, vector<28x120xf32>
    %c1_111 = arith.constant 1 : index
    %c0_112 = arith.constant 0 : index
    %c0_113 = arith.constant 0 : index
    %132 = vector.load %arg11[%c1_111, %c0_112, %c0_113] : memref<5x120x28xf32, #tpu.memory_space<vmem>>, vector<1x120x28xf32>
    %133 = vector.shape_cast %132 : vector<1x120x28xf32> to vector<120x28xf32>
    %cst_114 = arith.constant dense<0.000000e+00> : vector<28x28xf32>
    %134 = tpu.matmul %131, %133, %cst_114 {dimension_numbers = #tpu.dot_dimension_numbers<[1], [0], [0], [1], [0, 0, 1, 1], [], []>} : vector<28x120xf32>, vector<120x28xf32>, vector<28x28xf32> -> vector<28x28xf32>
    %135 = arith.addf %130, %134 : vector<28x28xf32>
    %c2_115 = arith.constant 2 : index
    %c0_116 = arith.constant 0 : index
    %136 = vector.load %arg18[%c2_115, %c0_116] : memref<32x120xf32, #tpu.memory_space<vmem>>, vector<28x120xf32>
    %c2_117 = arith.constant 2 : index
    %c0_118 = arith.constant 0 : index
    %c0_119 = arith.constant 0 : index
    %137 = vector.load %arg11[%c2_117, %c0_118, %c0_119] : memref<5x120x28xf32, #tpu.memory_space<vmem>>, vector<1x120x28xf32>
    %138 = vector.shape_cast %137 : vector<1x120x28xf32> to vector<120x28xf32>
    %cst_120 = arith.constant dense<0.000000e+00> : vector<28x28xf32>
    %139 = tpu.matmul %136, %138, %cst_120 {dimension_numbers = #tpu.dot_dimension_numbers<[1], [0], [0], [1], [0, 0, 1, 1], [], []>} : vector<28x120xf32>, vector<120x28xf32>, vector<28x28xf32> -> vector<28x28xf32>
    %140 = arith.addf %135, %139 : vector<28x28xf32>
    %c3_121 = arith.constant 3 : index
    %c0_122 = arith.constant 0 : index
    %141 = vector.load %arg18[%c3_121, %c0_122] : memref<32x120xf32, #tpu.memory_space<vmem>>, vector<28x120xf32>
    %c3_123 = arith.constant 3 : index
    %c0_124 = arith.constant 0 : index
    %c0_125 = arith.constant 0 : index
    %142 = vector.load %arg11[%c3_123, %c0_124, %c0_125] : memref<5x120x28xf32, #tpu.memory_space<vmem>>, vector<1x120x28xf32>
    %143 = vector.shape_cast %142 : vector<1x120x28xf32> to vector<120x28xf32>
    %cst_126 = arith.constant dense<0.000000e+00> : vector<28x28xf32>
    %144 = tpu.matmul %141, %143, %cst_126 {dimension_numbers = #tpu.dot_dimension_numbers<[1], [0], [0], [1], [0, 0, 1, 1], [], []>} : vector<28x120xf32>, vector<120x28xf32>, vector<28x28xf32> -> vector<28x28xf32>
    %145 = arith.addf %140, %144 : vector<28x28xf32>
    %c4_127 = arith.constant 4 : index
    %c0_128 = arith.constant 0 : index
    %146 = vector.load %arg18[%c4_127, %c0_128] : memref<32x120xf32, #tpu.memory_space<vmem>>, vector<28x120xf32>
    %c4_129 = arith.constant 4 : index
    %c0_130 = arith.constant 0 : index
    %c0_131 = arith.constant 0 : index
    %147 = vector.load %arg11[%c4_129, %c0_130, %c0_131] : memref<5x120x28xf32, #tpu.memory_space<vmem>>, vector<1x120x28xf32>
    %148 = vector.shape_cast %147 : vector<1x120x28xf32> to vector<120x28xf32>
    %cst_132 = arith.constant dense<0.000000e+00> : vector<28x28xf32>
    %149 = tpu.matmul %146, %148, %cst_132 {dimension_numbers = #tpu.dot_dimension_numbers<[1], [0], [0], [1], [0, 0, 1, 1], [], []>} : vector<28x120xf32>, vector<120x28xf32>, vector<28x28xf32> -> vector<28x28xf32>
    %150 = arith.addf %145, %149 : vector<28x28xf32>
    %c0_133 = arith.constant 0 : index
    %c0_134 = arith.constant 0 : index
    %151 = vector.load %arg12[%c0_133, %c0_134] : memref<1x28xf32, #tpu.memory_space<vmem>>, vector<1x28xf32>
    %152 = vector.broadcast %151 : vector<1x28xf32> to vector<28x28xf32>
    %153 = arith.addf %150, %152 : vector<28x28xf32>
    %cst_135 = arith.constant 0.000000e+00 : f32
    %154 = vector.broadcast %cst_135 : f32 to vector<28x28xf32>
    %155 = arith.subf %154, %153 : vector<28x28xf32>
    %156 = math.exp %155 : vector<28x28xf32>
    %cst_136 = arith.constant 1.000000e+00 : f32
    %157 = vector.broadcast %cst_136 : f32 to vector<28x28xf32>
    %158 = arith.addf %157, %156 : vector<28x28xf32>
    %cst_137 = arith.constant 1.000000e+00 : f32
    %159 = vector.broadcast %cst_137 : f32 to vector<28x28xf32>
    %160 = arith.divf %159, %158 : vector<28x28xf32>
    %c0_138 = arith.constant 0 : index
    %c0_139 = arith.constant 0 : index
    %c0_140 = arith.constant 0 : index
    %161 = vector.load %arg13[%c0_138, %c0_139, %c0_140] : memref<1x28x28xf32, #tpu.memory_space<vmem>>, vector<1x28x28xf32>
    %162 = vector.shape_cast %161 : vector<1x28x28xf32> to vector<28x28xf32>
    %163 = vector.shape_cast %160 : vector<28x28xf32> to vector<1x28x28xf32>
    tpu.vector_store %arg13[%c0_138, %c0_139, %c0_140], %163 {strides = array<i32>} : memref<1x28x28xf32, #tpu.memory_space<vmem>>, vector<1x28x28xf32>,
    return
  }
  func.func @transform_0(%arg0: i32) -> (i32, i32, i32) {
    %c0_i32 = arith.constant 0 : i32
    %c0_i32_0 = arith.constant 0 : i32
    %c0_i32_1 = arith.constant 0 : i32
    return %arg0, %c0_i32, %c0_i32_0 : i32, i32, i32
  }
  func.func @transform_1(%arg0: i32) -> (i32, i32, i32) {
    %c0_i32 = arith.constant 0 : i32
    %c0_i32_0 = arith.constant 0 : i32
    %c0_i32_1 = arith.constant 0 : i32
    return %arg0, %c0_i32, %c0_i32_0 : i32, i32, i32
  }
  func.func @transform_2(%arg0: i32) -> (i32, i32) {
    %c0_i32 = arith.constant 0 : i32
    %c0_i32_0 = arith.constant 0 : i32
    %c0_i32_1 = arith.constant 0 : i32
    return %c0_i32, %c0_i32_0 : i32, i32
  }
  func.func @transform_3(%arg0: i32) -> (i32, i32) {
    %c0_i32 = arith.constant 0 : i32
    %c0_i32_0 = arith.constant 0 : i32
    %c0_i32_1 = arith.constant 0 : i32
    return %c0_i32, %c0_i32_0 : i32, i32
  }
  func.func @transform_4(%arg0: i32) -> (i32, i32, i32) {
    %c0_i32 = arith.constant 0 : i32
    %c0_i32_0 = arith.constant 0 : i32
    %c0_i32_1 = arith.constant 0 : i32
    %c0_i32_2 = arith.constant 0 : i32
    return %c0_i32, %c0_i32_0, %c0_i32_1 : i32, i32, i32
  }
  func.func @transform_5(%arg0: i32) -> (i32, i32, i32) {
    %c0_i32 = arith.constant 0 : i32
    %c0_i32_0 = arith.constant 0 : i32
    %c0_i32_1 = arith.constant 0 : i32
    %c0_i32_2 = arith.constant 0 : i32
    return %c0_i32, %c0_i32_0, %c0_i32_1 : i32, i32, i32
  }
  func.func @transform_6(%arg0: i32) -> (i32, i32, i32) {
    %c0_i32 = arith.constant 0 : i32
    %c0_i32_0 = arith.constant 0 : i32
    %c0_i32_1 = arith.constant 0 : i32
    %c0_i32_2 = arith.constant 0 : i32
    return %c0_i32, %c0_i32_0, %c0_i32_1 : i32, i32, i32
  }
  func.func @transform_7(%arg0: i32) -> (i32, i32) {
    %c0_i32 = arith.constant 0 : i32
    %c0_i32_0 = arith.constant 0 : i32
    %c0_i32_1 = arith.constant 0 : i32
    return %c0_i32, %c0_i32_0 : i32, i32
  }
  func.func @transform_8(%arg0: i32) -> (i32, i32, i32) {
    %c0_i32 = arith.constant 0 : i32
    %c0_i32_0 = arith.constant 0 : i32
    %c0_i32_1 = arith.constant 0 : i32
    %c0_i32_2 = arith.constant 0 : i32
    return %c0_i32, %c0_i32_0, %c0_i32_1 : i32, i32, i32
  }
  func.func @transform_9(%arg0: i32) -> (i32, i32) {
    %c0_i32 = arith.constant 0 : i32
    %c0_i32_0 = arith.constant 0 : i32
    %c0_i32_1 = arith.constant 0 : i32
    return %c0_i32, %c0_i32_0 : i32, i32
  }
  func.func @transform_10(%arg0: i32) -> (i32, i32, i32) {
    %c0_i32 = arith.constant 0 : i32
    %c0_i32_0 = arith.constant 0 : i32
    %c0_i32_1 = arith.constant 0 : i32
    %c0_i32_2 = arith.constant 0 : i32
    return %c0_i32, %c0_i32_0, %c0_i32_1 : i32, i32, i32
  }
  func.func @transform_11(%arg0: i32) -> (i32, i32) {
    %c0_i32 = arith.constant 0 : i32
    %c0_i32_0 = arith.constant 0 : i32
    %c0_i32_1 = arith.constant 0 : i32
    return %c0_i32, %c0_i32_0 : i32, i32
  }
  func.func @transform_12(%arg0: i32) -> (i32, i32, i32) {
    %c0_i32 = arith.constant 0 : i32
    %c0_i32_0 = arith.constant 0 : i32
    %c0_i32_1 = arith.constant 0 : i32
    return %arg0, %c0_i32, %c0_i32_0 : i32, i32, i32
  }
  func.func @transform_13(%arg0: i32) -> (i32, i32, i32) {
    %c0_i32 = arith.constant 0 : i32
    %c0_i32_0 = arith.constant 0 : i32
    %c0_i32_1 = arith.constant 0 : i32
    return %arg0, %c0_i32, %c0_i32_0 : i32, i32, i32
  }
  func.func @transform_14(%arg0: i32) -> (i32, i32, i32) {
    %c0_i32 = arith.constant 0 : i32
    %c0_i32_0 = arith.constant 0 : i32
    %c0_i32_1 = arith.constant 0 : i32
    return %arg0, %c0_i32, %c0_i32_0 : i32, i32, i32
  }
  func.func @transform_15(%arg0: i32) -> (i32, i32, i32) {
    %c0_i32 = arith.constant 0 : i32
    %c0_i32_0 = arith.constant 0 : i32
    %c0_i32_1 = arith.constant 0 : i32
    return %arg0, %c0_i32, %c0_i32_0 : i32, i32, i32
  }
}

</mosaic_0001>

<llo_original>
// kernel: vae_forward.2
$region0: #{vae_forward.2}
  #allocation0 [shape = 'u32[]', space=smem, size = 0x4, offset = 0x4, fixed_abs, tag = 'smem constant byte address 0x4 - core index']
  #allocation1 [shape = 'u32[144,128]{1,0:T(1,128)}', space=vmem, size = 0x12000, scoped, tag = 'internal scratch']
  %s0 = inlined_call_operand.vmem [shape: bf16[2,25,1849], index: 0, kind: input, shape index: {}]
  %s1 = inlined_call_operand.vmem [shape: bf16[10,25], index: 1, kind: input, shape index: {}]
  %s2 = inlined_call_operand.vmem [shape: f32[10,1], index: 2, kind: input, shape index: {}]
  %s3 = inlined_call_operand.vmem [shape: bf16[2,10,1849], index: 3, kind: output, shape index: {}]
  %s4 = sld [smem:[#allocation0]]
  $region45: #{vae_forward.2} parent=0
    _
  %s6 = ssub.s32 1, %s4
  %s7 = scalar_select 0, %s6, %s4
  loop: start=0, step=1, limit=4
  $region2: #{vae_forward.2} parent=0 // loop_pre_header
    _
  $region3: #{vae_forward.2} parent=0 // loop_header
    %s9 = sphi 0, %s13
    %p10 = scmp.ge.s32.totalorder %s9, 4
    %s19 = sphi 0, %s21
    %s22 = sphi 0, %s19
    %s23 = sphi 0, %s22
    %s39 = sphi 0, %s23
    %s43 = sphi 0, %s43
    %s45 = sphi 0, %s43
    %s46 = sphi 0, %s45
    %s60 = sphi 0, %s46
    %s64 = sphi 0, %s64
    %s66 = sphi 0, %s64
    %s67 = sphi 0, %s66
    %s81 = sphi 0, %s67
    %s87 = sphi 0, %s89
    %s90 = sphi 0, %s87
    %s91 = sphi 0, %s90
    %s107 = sphi 0, %s91
  $region4: #{vae_forward.2} parent=0 // loop_header_branch
    %12 = sbr.rel (%p10) target = $region8
  $region5: #{vae_forward.2} parent=0 // loop_body
    %s14 = ssub.s32 %s9, 1
    %s15 = ssub.s32 %s9, 2
    %s16 = sadd.s32 %s9, 1
    %s17 = ssub.s32 %s9, %s16
    %p18 = scmp.eq.s32.totalorder %s17, 0
    %s20 = sadd.s32 %s19, 1
    %s21 = scalar_select %p18, %s19, %s20
    %p24 = pneg %p18
    %p25 = scmp.eq.s32.totalorder %s9, 1
    %p26 = por %p24, %p25
    %p27 = scmp.ne.s32.totalorder %s19, %s22
    %p28 = scmp.eq.s32.totalorder %s9, 0
    %p29 = por %p27, %p28
    %p30 = scmp.ne.s32.totalorder %s19, %s22
    %p31 = scmp.eq.s32.totalorder %s14, 1
    %p32 = por %p30, %p31
    %p33 = scmp.ne.s32.totalorder %s22, %s23
    %p34 = scmp.eq.s32.totalorder %s14, 0
    %p35 = por %p33, %p34
    %p36 = scmp.ne.s32.totalorder %s22, %s23
    %p37 = scmp.eq.s32.totalorder %s15, 1
    %p38 = por %p36, %p37
    %p40 = scmp.ne.s32.totalorder %s23, %s39
    %p41 = scmp.eq.s32.totalorder %s15, 0
    %p42 = por %p40, %p41
    %s44 = sadd.s32 %s43, 1
    %p47 = scmp.eq.s32.totalorder %s9, 1
    %p48 = scmp.ne.s32.totalorder %s43, %s45
    %p49 = scmp.eq.s32.totalorder %s9, 0
    %p50 = por %p48, %p49
    %p51 = scmp.ne.s32.totalorder %s43, %s45
    %p52 = scmp.eq.s32.totalorder %s14, 1
    %p53 = por %p51, %p52
    %p54 = scmp.ne.s32.totalorder %s45, %s46
    %p55 = scmp.eq.s32.totalorder %s14, 0
    %p56 = por %p54, %p55
    %p57 = scmp.ne.s32.totalorder %s45, %s46
    %p58 = scmp.eq.s32.totalorder %s15, 1
    %p59 = por %p57, %p58
    %p61 = scmp.ne.s32.totalorder %s46, %s60
    %p62 = scmp.eq.s32.totalorder %s15, 0
    %p63 = por %p61, %p62
    %s65 = sadd.s32 %s64, 1
    %p68 = scmp.eq.s32.totalorder %s9, 1
    %p69 = scmp.ne.s32.totalorder %s64, %s66
    %p70 = scmp.eq.s32.totalorder %s9, 0
    %p71 = por %p69, %p70
    %p72 = scmp.ne.s32.totalorder %s64, %s66
    %p73 = scmp.eq.s32.totalorder %s14, 1
    %p74 = por %p72, %p73
    %p75 = scmp.ne.s32.totalorder %s66, %s67
    %p76 = scmp.eq.s32.totalorder %s14, 0
    %p77 = por %p75, %p76
    %p78 = scmp.ne.s32.totalorder %s66, %s67
    %p79 = scmp.eq.s32.totalorder %s15, 1
    %p80 = por %p78, %p79
    %p82 = scmp.ne.s32.totalorder %s67, %s81
    %p83 = scmp.eq.s32.totalorder %s15, 0
    %p84 = por %p82, %p83
    %s85 = ssub.s32 %s9, %s16
    %p86 = scmp.eq.s32.totalorder %s85, 0
    %s88 = sadd.s32 %s87, 1
    %s89 = scalar_select %p86, %s87, %s88
    %p92 = pneg %p86
    %p93 = scmp.eq.s32.totalorder %s9, 1
    %p94 = por %p92, %p93
    %p95 = scmp.ne.s32.totalorder %s87, %s90
    %p96 = scmp.eq.s32.totalorder %s9, 0
    %p97 = por %p95, %p96
    %p98 = scmp.ne.s32.totalorder %s87, %s90
    %p99 = scmp.eq.s32.totalorder %s14, 1
    %p100 = por %p98, %p99
    %p101 = scmp.ne.s32.totalorder %s90, %s91
    %p102 = scmp.eq.s32.totalorder %s14, 0
    %p103 = por %p101, %p102
    %p104 = scmp.ne.s32.totalorder %s90, %s91
    %p105 = scmp.eq.s32.totalorder %s15, 1
    %p106 = por %p104, %p105
    %p108 = scmp.ne.s32.totalorder %s91, %s107
    %p109 = scmp.eq.s32.totalorder %s15, 0
    %p110 = por %p108, %p109
    %p111 = scmp.le.s32.totalorder 1, %s9
    %p112 = scmp.lt.s32.totalorder %s9, 3
    %p113 = pnand %p111, %p112
    %p114 = pneg %p113
    // Predicated region
    $region9: #{vae_forward.2} parent=5 // pred_check
      _
    $region10: #{vae_forward.2} parent=5 // pred_check_branch
      %116 = sbr.rel (%p113) target = $region12
    $region11: #{vae_forward.2} parent=5 // pred_region
      %s117 = ssub.s32 %s9, 1
      // Predicated region
      $region13: #{vae_forward.2} parent=11 // pred_check
        %p118 = pneg %p56
      $region14: #{vae_forward.2} parent=11 // pred_check_branch
        %120 = sbr.rel (%p118) target = $region16
      $region15: #{vae_forward.2} parent=11 // pred_region
        _
      $region16: #{vae_forward.2} parent=11 // pred_fallthru
        _
      // Predicated region
      $region17: #{vae_forward.2} parent=11 // pred_check
        %p121 = pneg %p77
      $region18: #{vae_forward.2} parent=11 // pred_check_branch
        %123 = sbr.rel (%p121) target = $region20
      $region19: #{vae_forward.2} parent=11 // pred_region
        _
      $region20: #{vae_forward.2} parent=11 // pred_fallthru
        _
    $region12: #{vae_forward.2} parent=5 // pred_fallthru
      _
    %p124 = scmp.lt.s32.totalorder %s9, 2
    // Predicated region
    $region21: #{vae_forward.2} parent=5 // pred_check
      %p125 = pneg %p124
    $region22: #{vae_forward.2} parent=5 // pred_check_branch
      %127 = sbr.rel (%p125) target = $region24
    $region23: #{vae_forward.2} parent=5 // pred_region
      // Predicated region
      $region25: #{vae_forward.2} parent=23 // pred_check
        %p128 = pneg %p29
      $region26: #{vae_forward.2} parent=23 // pred_check_branch
        %130 = sbr.rel (%p128) target = $region28
      $region27: #{vae_forward.2} parent=23 // pred_region
        %p131 = scmp.lt.s32.totalorder %s9, 1
        %s132 = scalar_select %p131, %s9, 1
        %s133 = smul.addr %s132, 60
        %s134 = smul.addr %s133, 4
        %s135 = scalar_lea.vmem %s0, %s134
      $region28: #{vae_forward.2} parent=23 // pred_fallthru
        _
    $region24: #{vae_forward.2} parent=5 // pred_fallthru
      _
    %p136 = scmp.le.s32.totalorder 1, %s9
    %p137 = scmp.lt.s32.totalorder %s9, 3
    %p138 = pnand %p136, %p137
    %p139 = pneg %p138
    // Predicated region
    $region29: #{vae_forward.2} parent=5 // pred_check
      _
    $region30: #{vae_forward.2} parent=5 // pred_check_branch
      %141 = sbr.rel (%p138) target = $region32
    $region31: #{vae_forward.2} parent=5 // pred_region
      %s142 = ssub.s32 %s9, 1
      %p143 = scmp.lt.s32.totalorder %s14, 1
      %s144 = scalar_select %p143, %s14, 1
      %s145 = smul.addr %s144, 60
      %s146 = smul.addr %s145, 4
      %s147 = scalar_lea.vmem %s0, %s146
      %p148 = pneg %p35
      %p149 = pneg %p32
      %p150 = pneg %p56
      %p151 = pneg %p53
      %p152 = pneg %p77
      %p153 = pneg %p74
      %p154 = pneg %p103
      %p155 = pneg %p100
      %p156 = scmp.lt.s32.totalorder %s14, 1
      %s157 = scalar_select %p156, %s14, 1
      %s158 = smul.addr %s157, 30
      %s159 = smul.addr %s158, 4
      %s160 = scalar_lea.vmem %s3, %s159
      %p161 = scmp.lt.s32.totalorder %s14, 1
      %s162 = scalar_select %p161, %s14, 1
      %s163 = smul.addr %s162, 60
      %s164 = smul.addr %s163, 4
      %s165 = scalar_lea.vmem %s0, %s164
      %p166 = scmp.lt.s32.totalorder %s14, 1
      %s167 = scalar_select %p166, %s14, 1
      %s168 = smul.addr %s167, 30
      %s169 = smul.addr %s168, 4
      %s170 = scalar_lea.vmem %s3, %s169
      %v172 = vld [vmem:[%s1] sm:$0xf]
      %v173 = vld [vmem:[%s1 + $0x4] sm:$0x1]
      %v174 = vld [vmem:[%s165] sm:$0xff]
      %v175 = vld [vmem:[%s165 + $0x8] sm:$0xff]
      %v176 = vld [vmem:[%s165 + $0x10] sm:$0xff]
      %v177 = vld [vmem:[%s165 + $0x18] sm:$0xff]
      %v178 = vld [vmem:[%s165 + $0x20] sm:$0xff]
      %v179 = vld [vmem:[%s165 + $0x28] sm:$0xff]
      %v180 = vld [vmem:[%s165 + $0x30] sm:$0xff]
      %v181 = vld [vmem:[%s165 + $0x38] sm:$0xf]
      %v182 = vld [vmem:[%s165 + $0x3c] sm:$0xff]
      %v183 = vld [vmem:[%s165 + $0x44] sm:$0xff]
      %v184 = vld [vmem:[%s165 + $0x4c] sm:$0xff]
      %v185 = vld [vmem:[%s165 + $0x54] sm:$0xff]
      %v186 = vld [vmem:[%s165 + $0x5c] sm:$0xff]
      %v187 = vld [vmem:[%s165 + $0x64] sm:$0xff]
      %v188 = vld [vmem:[%s165 + $0x6c] sm:$0xff]
      %v189 = vld [vmem:[%s165 + $0x74] sm:$0xf]
      %v190 = vld [vmem:[%s165 + $0x78] sm:$0xff]
      %v191 = vld [vmem:[%s165 + $0x80] sm:$0xff]
      %v192 = vld [vmem:[%s165 + $0x88] sm:$0xff]
      %v193 = vld [vmem:[%s165 + $0x90] sm:$0xff]
      %v194 = vld [vmem:[%s165 + $0x98] sm:$0xff]
      %v195 = vld [vmem:[%s165 + $0xa0] sm:$0xff]
      %v196 = vld [vmem:[%s165 + $0xa8] sm:$0xff]
      %v197 = vld [vmem:[%s165 + $0xb0] sm:$0xf]
      %v198 = vld [vmem:[%s165 + $0xb4] sm:$0x11]
      %v199 = vld [vmem:[%s165 + $0xbc] sm:$0x11]
      %v200 = vld [vmem:[%s165 + $0xc4] sm:$0x11]
      %v201 = vld [vmem:[%s165 + $0xcc] sm:$0x11]
      %v202 = vld [vmem:[%s165 + $0xd4] sm:$0x11]
      %v203 = vld [vmem:[%s165 + $0xdc] sm:$0x11]
      %v204 = vld [vmem:[%s165 + $0xe4] sm:$0x11]
      %v205 = vld [vmem:[%s165 + $0xec] sm:$0x1]
      %v206 = vld [vmem:[%s2] sm:$0xff]
      %v207 = vld [vmem:[%s2 + $0x8] sm:$0x3]
      %209 = vset.pattern.permute.xlu0 0
      %210 = vperm.xlu0 %209, %v206
      %v211 = vpop.permute.xlu0 %210
      %214 = vset.pattern.permute.xlu0 0
      %215 = vperm.xlu0 %214, %v207
      %v216 = vpop.permute.xlu0 %215
      %v220 = vunpack.c.l.b16 %v172
      %v221 = vunpack.c.l.b16 %v173
      %v222 = vpack.c.b16 %v221, %v220
      %v255 = vunpack.c.l.b16 %v174
      %v256 = vunpack.c.h.b16 %v174
      %v257 = vunpack.c.l.b16 %v175
      %v258 = vunpack.c.h.b16 %v175
      %v259 = vunpack.c.l.b16 %v176
      %v260 = vunpack.c.h.b16 %v176
      %v261 = vunpack.c.l.b16 %v177
      %v262 = vunpack.c.h.b16 %v177
      %v263 = vunpack.c.l.b16 %v178
      %v264 = vunpack.c.h.b16 %v178
      %v265 = vunpack.c.l.b16 %v179
      %v266 = vunpack.c.h.b16 %v179
      %v267 = vunpack.c.l.b16 %v180
      %v268 = vunpack.c.h.b16 %v180
      %v269 = vunpack.c.l.b16 %v181
      %v270 = vunpack.c.l.b16 %v182
      %v271 = vunpack.c.h.b16 %v182
      %v272 = vunpack.c.l.b16 %v183
      %v273 = vunpack.c.h.b16 %v183
      %v274 = vunpack.c.l.b16 %v184
      %v275 = vunpack.c.h.b16 %v184
      %v276 = vunpack.c.l.b16 %v185
      %v277 = vunpack.c.h.b16 %v185
      %v278 = vunpack.c.l.b16 %v186
      %v279 = vunpack.c.h.b16 %v186
      %v280 = vunpack.c.l.b16 %v187
      %v281 = vunpack.c.h.b16 %v187
      %v282 = vunpack.c.l.b16 %v188
      %v283 = vunpack.c.h.b16 %v188
      %v284 = vunpack.c.l.b16 %v189
      %v285 = vunpack.c.l.b16 %v190
      %v286 = vunpack.c.h.b16 %v190
      %v287 = vunpack.c.l.b16 %v191
      %v288 = vunpack.c.h.b16 %v191
      %v289 = vunpack.c.l.b16 %v192
      %v290 = vunpack.c.h.b16 %v192
      %v291 = vunpack.c.l.b16 %v193
      %v292 = vunpack.c.h.b16 %v193
      %v293 = vunpack.c.l.b16 %v194
      %v294 = vunpack.c.h.b16 %v194
      %v295 = vunpack.c.l.b16 %v195
      %v296 = vunpack.c.h.b16 %v195
      %v297 = vunpack.c.l.b16 %v196
      %v298 = vunpack.c.h.b16 %v196
      %v299 = vunpack.c.l.b16 %v197
      %v300 = vunpack.c.l.b16 %v198
      %v301 = vunpack.c.h.b16 %v198
      %v302 = vunpack.c.l.b16 %v199
      %v303 = vunpack.c.h.b16 %v199
      %v304 = vunpack.c.l.b16 %v200
      %v305 = vunpack.c.h.b16 %v200
      %v306 = vunpack.c.l.b16 %v201
      %v307 = vunpack.c.h.b16 %v201
      %v308 = vunpack.c.l.b16 %v202
      %v309 = vunpack.c.h.b16 %v202
      %v310 = vunpack.c.l.b16 %v203
      %v311 = vunpack.c.h.b16 %v203
      %v312 = vunpack.c.l.b16 %v204
      %v313 = vunpack.c.h.b16 %v204
      %v314 = vunpack.c.l.b16 %v205
      %v315 = vpack.c.b16 %v270, %v255
      %v316 = vpack.c.b16 %v271, %v256
      %v317 = vpack.c.b16 %v272, %v257
      %v318 = vpack.c.b16 %v273, %v258
      %v319 = vpack.c.b16 %v274, %v259
      %v320 = vpack.c.b16 %v275, %v260
      %v321 = vpack.c.b16 %v276, %v261
      %v322 = vpack.c.b16 %v277, %v262
      %v323 = vpack.c.b16 %v278, %v263
      %v324 = vpack.c.b16 %v279, %v264
      %v325 = vpack.c.b16 %v280, %v265
      %v326 = vpack.c.b16 %v281, %v266
      %v327 = vpack.c.b16 %v282, %v267
      %v328 = vpack.c.b16 %v283, %v268
      %v329 = vpack.c.b16 %v284, %v269
      %v330 = vpack.c.b16 %v300, %v285
      %v331 = vpack.c.b16 %v301, %v286
      %v332 = vpack.c.b16 %v302, %v287
      %v333 = vpack.c.b16 %v303, %v288
      %v334 = vpack.c.b16 %v304, %v289
      %v335 = vpack.c.b16 %v305, %v290
      %v336 = vpack.c.b16 %v306, %v291
      %v337 = vpack.c.b16 %v307, %v292
      %v338 = vpack.c.b16 %v308, %v293
      %v339 = vpack.c.b16 %v309, %v294
      %v340 = vpack.c.b16 %v310, %v295
      %v341 = vpack.c.b16 %v311, %v296
      %v342 = vpack.c.b16 %v312, %v297
      %v343 = vpack.c.b16 %v313, %v298
      %v344 = vpack.c.b16 %v314, %v299
      %vm360 = vcmask 203776
      %v362 = vsel %vm360, %v222, 0
      %vm364 = vcmask 1043456
      %vm365 = vcmask 1044480
      %v366 = vsel %vm364, 4294967295, 65535
      %v367 = vsel %vm365, %v366, 0
      %v369 = vand.u32 %v330, %v367
      %v372 = vand.u32 %v331, %v367
      %v375 = vand.u32 %v332, %v367
      %v378 = vand.u32 %v333, %v367
      %v381 = vand.u32 %v334, %v367
      %v384 = vand.u32 %v335, %v367
      %v387 = vand.u32 %v336, %v367
      %v390 = vand.u32 %v337, %v367
      %v393 = vand.u32 %v338, %v367
      %v396 = vand.u32 %v339, %v367
      %v399 = vand.u32 %v340, %v367
      %v402 = vand.u32 %v341, %v367
      %v405 = vand.u32 %v342, %v367
      %v408 = vand.u32 %v343, %v367
      %v411 = vand.u32 %v344, %v367
      %413 = vmatprep.subr.bf16.mxu0 %v316
      %414 = vmatpush1.bf16.msra.mxu0 %v315
      %415 = vmatprep.subr.bf16.mxu0 %v372
      %416 = vmatpush1.bf16.msra.mxu0 %v369
      %417 = vmatprep.subr.bf16.mxu0 0
      %418 = vmatpush1.bf16.msra.mxu0 0
      %419 = vmatprep.subr.bf16.mxu0 0
      %420 = vmatpush1.bf16.msra.mxu0 0
      %421 = vmatprep.subr.bf16.mxu0 0
      %422 = vmatpush1.bf16.msra.mxu0 0
      %423 = vmatprep.subr.bf16.mxu0 0
      %424 = vmatpush1.bf16.msra.mxu0 0
      %425 = vmatprep.subr.bf16.mxu0 0
      %426 = vmatpush1.bf16.msra.mxu0 0
      %427 = vmatprep.subr.bf16.mxu0 0
      %428 = vmatpush1.bf16.msra.mxu0 0
      %429 = vmatprep.subr.bf16.mxu0 0
      %430 = vmatpush1.bf16.msra.mxu0 0
      %431 = vmatprep.subr.bf16.mxu0 0
      %432 = vmatpush1.bf16.msra.mxu0 0
      %433 = vmatprep.subr.bf16.mxu0 0
      %434 = vmatpush1.bf16.msra.mxu0 0
      %435 = vmatprep.subr.bf16.mxu0 0
      %436 = vmatpush1.bf16.msra.mxu0 0
      %437 = vmatprep.subr.bf16.mxu0 0
      %438 = vmatpush1.bf16.msra.mxu0 0
      %439 = vmatprep.subr.bf16.mxu0 0
      %440 = vmatpush1.bf16.msra.mxu0 0
      %441 = vmatprep.subr.bf16.mxu0 0
      %442 = vmatpush1.bf16.msra.mxu0 0
      %443 = vmatprep.subr.bf16.mxu0 0
      %444 = vmatpush1.bf16.msra.mxu0 0
      %445 = vmatprep.mubr.bf16.mxu0 0
      %446 = vmatmul.mubr.bf16.gmra.mrb[0].mxu0 %v362
      %v447 = vpop.f32.mrb[0].mxu0
      %v448 = vadd.f32 %v211, %v447
      %v449 = vpop.f32.mrb[0].mxu0
      %v450 = vadd.f32 %v211, %v449
      %v451 = vpop.f32.mrb[0].mxu0
      %v452 = vadd.f32 %v216, %v451
      %v453 = vpop.f32.mrb[0].mxu0
      %v454 = vadd.f32 %v216, %v453
      %455 = vdwg.mxu0
      %456 = vmatprep.subr.bf16.mxu0 %v318
      %457 = vmatpush1.bf16.msra.mxu0 %v317
      %458 = vmatprep.subr.bf16.mxu0 %v378
      %459 = vmatpush1.bf16.msra.mxu0 %v375
      %460 = vmatprep.subr.bf16.mxu0 0
      %461 = vmatpush1.bf16.msra.mxu0 0
      %462 = vmatprep.subr.bf16.mxu0 0
      %463 = vmatpush1.bf16.msra.mxu0 0
      %464 = vmatprep.subr.bf16.mxu0 0
      %465 = vmatpush1.bf16.msra.mxu0 0
      %466 = vmatprep.subr.bf16.mxu0 0
      %467 = vmatpush1.bf16.msra.mxu0 0
      %468 = vmatprep.subr.bf16.mxu0 0
      %469 = vmatpush1.bf16.msra.mxu0 0
      %470 = vmatprep.subr.bf16.mxu0 0
      %471 = vmatpush1.bf16.msra.mxu0 0
      %472 = vmatprep.subr.bf16.mxu0 0
      %473 = vmatpush1.bf16.msra.mxu0 0
      %474 = vmatprep.subr.bf16.mxu0 0
      %475 = vmatpush1.bf16.msra.mxu0 0
      %476 = vmatprep.subr.bf16.mxu0 0
      %477 = vmatpush1.bf16.msra.mxu0 0
      %478 = vmatprep.subr.bf16.mxu0 0
      %479 = vmatpush1.bf16.msra.mxu0 0
      %480 = vmatprep.subr.bf16.mxu0 0
      %481 = vmatpush1.bf16.msra.mxu0 0
      %482 = vmatprep.subr.bf16.mxu0 0
      %483 = vmatpush1.bf16.msra.mxu0 0
      %484 = vmatprep.subr.bf16.mxu0 0
      %485 = vmatpush1.bf16.msra.mxu0 0
      %486 = vmatprep.subr.bf16.mxu0 0
      %487 = vmatpush1.bf16.msra.mxu0 0
      %488 = vmatprep.mubr.bf16.mxu0 0
      %489 = vmatmul.mubr.bf16.gmra.mrb[0].mxu0 %v362
      %v490 = vpop.f32.mrb[0].mxu0
      %v491 = vadd.f32 %v211, %v490
      %v492 = vpop.f32.mrb[0].mxu0
      %v493 = vadd.f32 %v211, %v492
      %v494 = vpop.f32.mrb[0].mxu0
      %v495 = vadd.f32 %v216, %v494
      %v496 = vpop.f32.mrb[0].mxu0
      %v497 = vadd.f32 %v216, %v496
      %498 = vdwg.mxu0
      %499 = vmatprep.subr.bf16.mxu0 %v320
      %500 = vmatpush1.bf16.msra.mxu0 %v319
      %501 = vmatprep.subr.bf16.mxu0 %v384
      %502 = vmatpush1.bf16.msra.mxu0 %v381
      %503 = vmatprep.subr.bf16.mxu0 0
      %504 = vmatpush1.bf16.msra.mxu0 0
      %505 = vmatprep.subr.bf16.mxu0 0
      %506 = vmatpush1.bf16.msra.mxu0 0
      %507 = vmatprep.subr.bf16.mxu0 0
      %508 = vmatpush1.bf16.msra.mxu0 0
      %509 = vmatprep.subr.bf16.mxu0 0
      %510 = vmatpush1.bf16.msra.mxu0 0
      %511 = vmatprep.subr.bf16.mxu0 0
      %512 = vmatpush1.bf16.msra.mxu0 0
      %513 = vmatprep.subr.bf16.mxu0 0
      %514 = vmatpush1.bf16.msra.mxu0 0
      %515 = vmatprep.subr.bf16.mxu0 0
      %516 = vmatpush1.bf16.msra.mxu0 0
      %517 = vmatprep.subr.bf16.mxu0 0
      %518 = vmatpush1.bf16.msra.mxu0 0
      %519 = vmatprep.subr.bf16.mxu0 0
      %520 = vmatpush1.bf16.msra.mxu0 0
      %521 = vmatprep.subr.bf16.mxu0 0
      %522 = vmatpush1.bf16.msra.mxu0 0
      %523 = vmatprep.subr.bf16.mxu0 0
      %524 = vmatpush1.bf16.msra.mxu0 0
      %525 = vmatprep.subr.bf16.mxu0 0
      %526 = vmatpush1.bf16.msra.mxu0 0
      %527 = vmatprep.subr.bf16.mxu0 0
      %528 = vmatpush1.bf16.msra.mxu0 0
      %529 = vmatprep.subr.bf16.mxu0 0
      %530 = vmatpush1.bf16.msra.mxu0 0
      %531 = vmatprep.mubr.bf16.mxu0 0
      %532 = vmatmul.mubr.bf16.gmra.mrb[0].mxu0 %v362
      %v533 = vpop.f32.mrb[0].mxu0
      %v534 = vadd.f32 %v211, %v533
      %v535 = vpop.f32.mrb[0].mxu0
      %v536 = vadd.f32 %v211, %v535
      %v537 = vpop.f32.mrb[0].mxu0
      %v538 = vadd.f32 %v216, %v537
      %v539 = vpop.f32.mrb[0].mxu0
      %v540 = vadd.f32 %v216, %v539
      %541 = vdwg.mxu0
      %542 = vmatprep.subr.bf16.mxu0 %v322
      %543 = vmatpush1.bf16.msra.mxu0 %v321
      %544 = vmatprep.subr.bf16.mxu0 %v390
      %545 = vmatpush1.bf16.msra.mxu0 %v387
      %546 = vmatprep.subr.bf16.mxu0 0
      %547 = vmatpush1.bf16.msra.mxu0 0
      %548 = vmatprep.subr.bf16.mxu0 0
      %549 = vmatpush1.bf16.msra.mxu0 0
      %550 = vmatprep.subr.bf16.mxu0 0
      %551 = vmatpush1.bf16.msra.mxu0 0
      %552 = vmatprep.subr.bf16.mxu0 0
      %553 = vmatpush1.bf16.msra.mxu0 0
      %554 = vmatprep.subr.bf16.mxu0 0
      %555 = vmatpush1.bf16.msra.mxu0 0
      %556 = vmatprep.subr.bf16.mxu0 0
      %557 = vmatpush1.bf16.msra.mxu0 0
      %558 = vmatprep.subr.bf16.mxu0 0
      %559 = vmatpush1.bf16.msra.mxu0 0
      %560 = vmatprep.subr.bf16.mxu0 0
      %561 = vmatpush1.bf16.msra.mxu0 0
      %562 = vmatprep.subr.bf16.mxu0 0
      %563 = vmatpush1.bf16.msra.mxu0 0
      %564 = vmatprep.subr.bf16.mxu0 0
      %565 = vmatpush1.bf16.msra.mxu0 0
      %566 = vmatprep.subr.bf16.mxu0 0
      %567 = vmatpush1.bf16.msra.mxu0 0
      %568 = vmatprep.subr.bf16.mxu0 0
      %569 = vmatpush1.bf16.msra.mxu0 0
      %570 = vmatprep.subr.bf16.mxu0 0
      %571 = vmatpush1.bf16.msra.mxu0 0
      %572 = vmatprep.subr.bf16.mxu0 0
      %573 = vmatpush1.bf16.msra.mxu0 0
      %574 = vmatprep.mubr.bf16.mxu0 0
      %575 = vmatmul.mubr.bf16.gmra.mrb[0].mxu0 %v362
      %v576 = vpop.f32.mrb[0].mxu0
      %v577 = vadd.f32 %v211, %v576
      %v578 = vpop.f32.mrb[0].mxu0
      %v579 = vadd.f32 %v211, %v578
      %v580 = vpop.f32.mrb[0].mxu0
      %v581 = vadd.f32 %v216, %v580
      %v582 = vpop.f32.mrb[0].mxu0
      %v583 = vadd.f32 %v216, %v582
      %584 = vdwg.mxu0
      %585 = vmatprep.subr.bf16.mxu0 %v324
      %586 = vmatpush1.bf16.msra.mxu0 %v323
      %587 = vmatprep.subr.bf16.mxu0 %v396
      %588 = vmatpush1.bf16.msra.mxu0 %v393
      %589 = vmatprep.subr.bf16.mxu0 0
      %590 = vmatpush1.bf16.msra.mxu0 0
      %591 = vmatprep.subr.bf16.mxu0 0
      %592 = vmatpush1.bf16.msra.mxu0 0
      %593 = vmatprep.subr.bf16.mxu0 0
      %594 = vmatpush1.bf16.msra.mxu0 0
      %595 = vmatprep.subr.bf16.mxu0 0
      %596 = vmatpush1.bf16.msra.mxu0 0
      %597 = vmatprep.subr.bf16.mxu0 0
      %598 = vmatpush1.bf16.msra.mxu0 0
      %599 = vmatprep.subr.bf16.mxu0 0
      %600 = vmatpush1.bf16.msra.mxu0 0
      %601 = vmatprep.subr.bf16.mxu0 0
      %602 = vmatpush1.bf16.msra.mxu0 0
      %603 = vmatprep.subr.bf16.mxu0 0
      %604 = vmatpush1.bf16.msra.mxu0 0
      %605 = vmatprep.subr.bf16.mxu0 0
      %606 = vmatpush1.bf16.msra.mxu0 0
      %607 = vmatprep.subr.bf16.mxu0 0
      %608 = vmatpush1.bf16.msra.mxu0 0
      %609 = vmatprep.subr.bf16.mxu0 0
      %610 = vmatpush1.bf16.msra.mxu0 0
      %611 = vmatprep.subr.bf16.mxu0 0
      %612 = vmatpush1.bf16.msra.mxu0 0
      %613 = vmatprep.subr.bf16.mxu0 0
      %614 = vmatpush1.bf16.msra.mxu0 0
      %615 = vmatprep.subr.bf16.mxu0 0
      %616 = vmatpush1.bf16.msra.mxu0 0
      %617 = vmatprep.mubr.bf16.mxu0 0
      %618 = vmatmul.mubr.bf16.gmra.mrb[0].mxu0 %v362
      %v619 = vpop.f32.mrb[0].mxu0
      %v620 = vadd.f32 %v211, %v619
      %v621 = vpop.f32.mrb[0].mxu0
      %v622 = vadd.f32 %v211, %v621
      %v623 = vpop.f32.mrb[0].mxu0
      %v624 = vadd.f32 %v216, %v623
      %v625 = vpop.f32.mrb[0].mxu0
      %v626 = vadd.f32 %v216, %v625
      %627 = vdwg.mxu0
      %628 = vmatprep.subr.bf16.mxu0 %v326
      %629 = vmatpush1.bf16.msra.mxu0 %v325
      %630 = vmatprep.subr.bf16.mxu0 %v402
      %631 = vmatpush1.bf16.msra.mxu0 %v399
      %632 = vmatprep.subr.bf16.mxu0 0
      %633 = vmatpush1.bf16.msra.mxu0 0
      %634 = vmatprep.subr.bf16.mxu0 0
      %635 = vmatpush1.bf16.msra.mxu0 0
      %636 = vmatprep.subr.bf16.mxu0 0
      %637 = vmatpush1.bf16.msra.mxu0 0
      %638 = vmatprep.subr.bf16.mxu0 0
      %639 = vmatpush1.bf16.msra.mxu0 0
      %640 = vmatprep.subr.bf16.mxu0 0
      %641 = vmatpush1.bf16.msra.mxu0 0
      %642 = vmatprep.subr.bf16.mxu0 0
      %643 = vmatpush1.bf16.msra.mxu0 0
      %644 = vmatprep.subr.bf16.mxu0 0
      %645 = vmatpush1.bf16.msra.mxu0 0
      %646 = vmatprep.subr.bf16.mxu0 0
      %647 = vmatpush1.bf16.msra.mxu0 0
      %648 = vmatprep.subr.bf16.mxu0 0
      %649 = vmatpush1.bf16.msra.mxu0 0
      %650 = vmatprep.subr.bf16.mxu0 0
      %651 = vmatpush1.bf16.msra.mxu0 0
      %652 = vmatprep.subr.bf16.mxu0 0
      %653 = vmatpush1.bf16.msra.mxu0 0
      %654 = vmatprep.subr.bf16.mxu0 0
      %655 = vmatpush1.bf16.msra.mxu0 0
      %656 = vmatprep.subr.bf16.mxu0 0
      %657 = vmatpush1.bf16.msra.mxu0 0
      %658 = vmatprep.subr.bf16.mxu0 0
      %659 = vmatpush1.bf16.msra.mxu0 0
      %660 = vmatprep.mubr.bf16.mxu0 0
      %661 = vmatmul.mubr.bf16.gmra.mrb[0].mxu0 %v362
      %v662 = vpop.f32.mrb[0].mxu0
      %v663 = vadd.f32 %v211, %v662
      %v664 = vpop.f32.mrb[0].mxu0
      %v665 = vadd.f32 %v211, %v664
      %v666 = vpop.f32.mrb[0].mxu0
      %v667 = vadd.f32 %v216, %v666
      %v668 = vpop.f32.mrb[0].mxu0
      %v669 = vadd.f32 %v216, %v668
      %670 = vdwg.mxu0
      %671 = vmatprep.subr.bf16.mxu0 %v328
      %672 = vmatpush1.bf16.msra.mxu0 %v327
      %673 = vmatprep.subr.bf16.mxu0 %v408
      %674 = vmatpush1.bf16.msra.mxu0 %v405
      %675 = vmatprep.subr.bf16.mxu0 0
      %676 = vmatpush1.bf16.msra.mxu0 0
      %677 = vmatprep.subr.bf16.mxu0 0
      %678 = vmatpush1.bf16.msra.mxu0 0
      %679 = vmatprep.subr.bf16.mxu0 0
      %680 = vmatpush1.bf16.msra.mxu0 0
      %681 = vmatprep.subr.bf16.mxu0 0
      %682 = vmatpush1.bf16.msra.mxu0 0
      %683 = vmatprep.subr.bf16.mxu0 0
      %684 = vmatpush1.bf16.msra.mxu0 0
      %685 = vmatprep.subr.bf16.mxu0 0
      %686 = vmatpush1.bf16.msra.mxu0 0
      %687 = vmatprep.subr.bf16.mxu0 0
      %688 = vmatpush1.bf16.msra.mxu0 0
      %689 = vmatprep.subr.bf16.mxu0 0
      %690 = vmatpush1.bf16.msra.mxu0 0
      %691 = vmatprep.subr.bf16.mxu0 0
      %692 = vmatpush1.bf16.msra.mxu0 0
      %693 = vmatprep.subr.bf16.mxu0 0
      %694 = vmatpush1.bf16.msra.mxu0 0
      %695 = vmatprep.subr.bf16.mxu0 0
      %696 = vmatpush1.bf16.msra.mxu0 0
      %697 = vmatprep.subr.bf16.mxu0 0
      %698 = vmatpush1.bf16.msra.mxu0 0
      %699 = vmatprep.subr.bf16.mxu0 0
      %700 = vmatpush1.bf16.msra.mxu0 0
      %701 = vmatprep.subr.bf16.mxu0 0
      %702 = vmatpush1.bf16.msra.mxu0 0
      %703 = vmatprep.mubr.bf16.mxu0 0
      %704 = vmatmul.mubr.bf16.gmra.mrb[0].mxu0 %v362
      %v705 = vpop.f32.mrb[0].mxu0
      %v706 = vadd.f32 %v211, %v705
      %v707 = vpop.f32.mrb[0].mxu0
      %v708 = vadd.f32 %v211, %v707
      %v709 = vpop.f32.mrb[0].mxu0
      %v710 = vadd.f32 %v216, %v709
      %v711 = vpop.f32.mrb[0].mxu0
      %v712 = vadd.f32 %v216, %v711
      %713 = vdwg.mxu0
      %714 = vmatprep.subr.bf16.mxu0 0
      %715 = vmatpush1.bf16.msra.mxu0 %v329
      %716 = vmatprep.subr.bf16.mxu0 0
      %717 = vmatpush1.bf16.msra.mxu0 %v411
      %718 = vmatprep.subr.bf16.mxu0 0
      %719 = vmatpush1.bf16.msra.mxu0 0
      %720 = vmatprep.subr.bf16.mxu0 0
      %721 = vmatpush1.bf16.msra.mxu0 0
      %722 = vmatprep.subr.bf16.mxu0 0
      %723 = vmatpush1.bf16.msra.mxu0 0
      %724 = vmatprep.subr.bf16.mxu0 0
      %725 = vmatpush1.bf16.msra.mxu0 0
      %726 = vmatprep.subr.bf16.mxu0 0
      %727 = vmatpush1.bf16.msra.mxu0 0
      %728 = vmatprep.subr.bf16.mxu0 0
      %729 = vmatpush1.bf16.msra.mxu0 0
      %730 = vmatprep.subr.bf16.mxu0 0
      %731 = vmatpush1.bf16.msra.mxu0 0
      %732 = vmatprep.subr.bf16.mxu0 0
      %733 = vmatpush1.bf16.msra.mxu0 0
      %734 = vmatprep.subr.bf16.mxu0 0
      %735 = vmatpush1.bf16.msra.mxu0 0
      %736 = vmatprep.subr.bf16.mxu0 0
      %737 = vmatpush1.bf16.msra.mxu0 0
      %738 = vmatprep.subr.bf16.mxu0 0
      %739 = vmatpush1.bf16.msra.mxu0 0
      %740 = vmatprep.subr.bf16.mxu0 0
      %741 = vmatpush1.bf16.msra.mxu0 0
      %742 = vmatprep.subr.bf16.mxu0 0
      %743 = vmatpush1.bf16.msra.mxu0 0
      %744 = vmatprep.subr.bf16.mxu0 0
      %745 = vmatpush1.bf16.msra.mxu0 0
      %746 = vmatprep.mubr.bf16.mxu0 0
      %747 = vmatmul.mubr.bf16.gmra.mrb[0].mxu0 %v362
      %v748 = vpop.f32.mrb[0].mxu0
      %v749 = vadd.f32 %v211, %v748
      %v750 = vpop.f32.mrb[0].mxu0
      %v751 = vpop.f32.mrb[0].mxu0
      %v752 = vadd.f32 %v216, %v751
      %v753 = vpop.f32.mrb[0].mxu0
      %754 = vdwg.mxu0
      %v755 = vmax.f32 %v448, 0.0
      %v756 = vmax.f32 %v450, 0.0
      %v757 = vmax.f32 %v491, 0.0
      %v758 = vmax.f32 %v493, 0.0
      %v759 = vmax.f32 %v534, 0.0
      %v760 = vmax.f32 %v536, 0.0
      %v761 = vmax.f32 %v577, 0.0
      %v762 = vmax.f32 %v579, 0.0
      %v763 = vmax.f32 %v620, 0.0
      %v764 = vmax.f32 %v622, 0.0
      %v765 = vmax.f32 %v663, 0.0
      %v766 = vmax.f32 %v665, 0.0
      %v767 = vmax.f32 %v706, 0.0
      %v768 = vmax.f32 %v708, 0.0
      %v769 = vmax.f32 %v749, 0.0
      %v770 = vmax.f32 %v452, 0.0
      %v771 = vmax.f32 %v454, 0.0
      %v772 = vmax.f32 %v495, 0.0
      %v773 = vmax.f32 %v497, 0.0
      %v774 = vmax.f32 %v538, 0.0
      %v775 = vmax.f32 %v540, 0.0
      %v776 = vmax.f32 %v581, 0.0
      %v777 = vmax.f32 %v583, 0.0
      %v778 = vmax.f32 %v624, 0.0
      %v779 = vmax.f32 %v626, 0.0
      %v780 = vmax.f32 %v667, 0.0
      %v781 = vmax.f32 %v669, 0.0
      %v782 = vmax.f32 %v710, 0.0
      %v783 = vmax.f32 %v712, 0.0
      %v784 = vmax.f32 %v752, 0.0
      %v785 = vpack.c.bf16 %v770, %v755
      %v786 = vpack.c.bf16 %v771, %v756
      %v787 = vpack.c.bf16 %v772, %v757
      %v788 = vpack.c.bf16 %v773, %v758
      %v789 = vpack.c.bf16 %v774, %v759
      %v790 = vpack.c.bf16 %v775, %v760
      %v791 = vpack.c.bf16 %v776, %v761
      %v792 = vpack.c.bf16 %v777, %v762
      %v793 = vpack.c.bf16 %v778, %v763
      %v794 = vpack.c.bf16 %v779, %v764
      %v795 = vpack.c.bf16 %v780, %v765
      %v796 = vpack.c.bf16 %v781, %v766
      %v797 = vpack.c.bf16 %v782, %v767
      %v798 = vpack.c.bf16 %v783, %v768
      %v799 = vpack.c.bf16 %v784, %v769
      %v815 = vunpack.c.l.b16 %v785
      %v816 = vunpack.c.l.b16 %v786
      %v817 = vunpack.c.l.b16 %v787
      %v818 = vunpack.c.l.b16 %v788
      %v819 = vunpack.c.l.b16 %v789
      %v820 = vunpack.c.l.b16 %v790
      %v821 = vunpack.c.l.b16 %v791
      %v822 = vunpack.c.l.b16 %v792
      %v823 = vunpack.c.l.b16 %v793
      %v824 = vunpack.c.l.b16 %v794
      %v825 = vunpack.c.l.b16 %v795
      %v826 = vunpack.c.l.b16 %v796
      %v827 = vunpack.c.l.b16 %v797
      %v828 = vunpack.c.l.b16 %v798
      %v829 = vunpack.c.l.b16 %v799
      %v830 = vunpack.c.h.b16 %v785
      %v831 = vunpack.c.h.b16 %v786
      %v832 = vunpack.c.h.b16 %v787
      %v833 = vunpack.c.h.b16 %v788
      %v834 = vunpack.c.h.b16 %v789
      %v835 = vunpack.c.h.b16 %v790
      %v836 = vunpack.c.h.b16 %v791
      %v837 = vunpack.c.h.b16 %v792
      %v838 = vunpack.c.h.b16 %v793
      %v839 = vunpack.c.h.b16 %v794
      %v840 = vunpack.c.h.b16 %v795
      %v841 = vunpack.c.h.b16 %v796
      %v842 = vunpack.c.h.b16 %v797
      %v843 = vunpack.c.h.b16 %v798
      %v844 = vunpack.c.h.b16 %v799
      %v845 = vpack.c.b16 %v816, %v815
      %v846 = vpack.c.b16 %v818, %v817
      %v847 = vpack.c.b16 %v820, %v819
      %v848 = vpack.c.b16 %v822, %v821
      %v849 = vpack.c.b16 %v824, %v823
      %v850 = vpack.c.b16 %v826, %v825
      %v851 = vpack.c.b16 %v828, %v827
      %v852 = vpack.c.b16 %v829, %v829
      %v853 = vpack.c.b16 %v831, %v830
      %v854 = vpack.c.b16 %v833, %v832
      %v855 = vpack.c.b16 %v835, %v834
      %v856 = vpack.c.b16 %v837, %v836
      %v857 = vpack.c.b16 %v839, %v838
      %v858 = vpack.c.b16 %v841, %v840
      %v859 = vpack.c.b16 %v843, %v842
      %v860 = vpack.c.b16 %v844, %v844
      %877 = vst [vmem:[%s170] sm:$0xff] %v845
      %878 = vst [vmem:[%s170 + $0x8] sm:$0xff] %v846
      %879 = vst [vmem:[%s170 + $0x10] sm:$0xff] %v847
      %880 = vst [vmem:[%s170 + $0x18] sm:$0xff] %v848
      %881 = vst [vmem:[%s170 + $0x20] sm:$0xff] %v849
      %882 = vst [vmem:[%s170 + $0x28] sm:$0xff] %v850
      %883 = vst [vmem:[%s170 + $0x30] sm:$0xff] %v851
      %vm884 = vcmask 461824
      %885 = vst.msk [vmem:[%s170 + $0x38] sm:$0xf] %vm884, %v852
      %886 = vst [vmem:[%s170 + $0x3c] sm:$0x11] %v853
      %887 = vst [vmem:[%s170 + $0x44] sm:$0x11] %v854
      %888 = vst [vmem:[%s170 + $0x4c] sm:$0x11] %v855
      %889 = vst [vmem:[%s170 + $0x54] sm:$0x11] %v856
      %890 = vst [vmem:[%s170 + $0x5c] sm:$0x11] %v857
      %891 = vst [vmem:[%s170 + $0x64] sm:$0x11] %v858
      %892 = vst [vmem:[%s170 + $0x6c] sm:$0x11] %v859
      %vm893 = vcmask 458752
      %894 = vst.msk [vmem:[%s170 + $0x74] sm:$0x1] %vm893, %v860
      %p895 = scmp.lt.s32.totalorder %s14, 1
      %s896 = scalar_select %p895, %s14, 1
      %s897 = smul.addr %s896, 30
      %s898 = smul.addr %s897, 4
      %s899 = scalar_lea.vmem %s3, %s898
      // Predicated region
      $region33: #{vae_forward.2} parent=31 // pred_check
        %p900 = pneg %p100
      $region34: #{vae_forward.2} parent=31 // pred_check_branch
        %902 = sbr.rel (%p900) target = $region36
      $region35: #{vae_forward.2} parent=31 // pred_region
        _
      $region36: #{vae_forward.2} parent=31 // pred_fallthru
        _
    $region32: #{vae_forward.2} parent=5 // pred_fallthru
      _
    %p903 = scmp.le.s32.totalorder 2, %s9
    // Predicated region
    $region37: #{vae_forward.2} parent=5 // pred_check
      %p904 = pneg %p903
    $region38: #{vae_forward.2} parent=5 // pred_check_branch
      %906 = sbr.rel (%p904) target = $region40
    $region39: #{vae_forward.2} parent=5 // pred_region
      %s907 = ssub.s32 %s9, 2
      // Predicated region
      $region41: #{vae_forward.2} parent=39 // pred_check
        %p908 = pneg %p106
      $region42: #{vae_forward.2} parent=39 // pred_check_branch
        %910 = sbr.rel (%p908) target = $region44
      $region43: #{vae_forward.2} parent=39 // pred_region
        %p911 = scmp.lt.s32.totalorder %s15, 1
        %s912 = scalar_select %p911, %s15, 1
        %s913 = smul.addr %s912, 30
        %s914 = smul.addr %s913, 4
        %s915 = scalar_lea.vmem %s3, %s914
      $region44: #{vae_forward.2} parent=39 // pred_fallthru
        _
    $region40: #{vae_forward.2} parent=5 // pred_fallthru
      _
  $region6: #{vae_forward.2} parent=0 // loop_footer
    %s13 = sadd.s32 1, %s9
  $region7: #{vae_forward.2} parent=0 // loop_footer_branch
    %8 = sbr.rel target = $region3
  $region8: #{vae_forward.2} parent=0 // loop_exit
    _

// kernel: vae_forward.3
$region0: #{vae_forward.3}
  #allocation0 [shape = 'u32[]', space=smem, size = 0x4, offset = 0x4, fixed_abs, tag = 'smem constant byte address 0x4 - core index']
  #allocation1 [shape = 'u32[144,128]{1,0:T(1,128)}', space=vmem, size = 0x12000, scoped, tag = 'internal scratch']
  #allocation2 [shape = 'f32[28,200]{1,0:T(8,128)}', space=vmem, size = 0x8000, scoped, tag = 'scratch operand']
  #allocation3 [shape = 'f32[32,120]{1,0:T(8,128)}', space=vmem, size = 0x4000, scoped, tag = 'scratch operand']
  %s0 = inlined_call_operand.vmem [shape: bf16[2,250,400], index: 0, kind: input, shape index: {}]
  %s1 = inlined_call_operand.vmem [shape: f32[2,1,2], index: 1, kind: input, shape index: {}]
  %s2 = inlined_call_operand.vmem [shape: bf16[20,250], index: 2, kind: input, shape index: {}]
  %s3 = inlined_call_operand.vmem [shape: f32[20,1], index: 3, kind: input, shape index: {}]
  %s4 = inlined_call_operand.vmem [shape: f32[4,20,400], index: 4, kind: input, shape index: {}]
  %s5 = inlined_call_operand.vmem [shape: f32[4,1,1], index: 5, kind: input, shape index: {}]
  %s6 = inlined_call_operand.vmem [shape: f32[2,20,200], index: 6, kind: input, shape index: {}]
  %s7 = inlined_call_operand.vmem [shape: f32[20,200], index: 7, kind: input, shape index: {}]
  %s8 = inlined_call_operand.vmem [shape: f32[5,200,120], index: 8, kind: input, shape index: {}]
  %s9 = inlined_call_operand.vmem [shape: f32[1,120], index: 9, kind: input, shape index: {}]
  %s10 = inlined_call_operand.vmem [shape: f32[5,120,28], index: 10, kind: input, shape index: {}]
  %s11 = inlined_call_operand.vmem [shape: f32[1,28], index: 11, kind: input, shape index: {}]
  %s12 = inlined_call_operand.vmem [shape: f32[2,28,28], index: 12, kind: output, shape index: {0}]
  %s13 = inlined_call_operand.hbm [shape: f32[2,1,2], index: 13, kind: output, shape index: {1}]
  %s14 = inlined_call_operand.hbm [shape: f32[2,1,2], index: 14, kind: output, shape index: {2}]
  %s15 = inlined_call_operand.hbm [shape: f32[2,1,2], index: 15, kind: output, shape index: {3}]
  %16 = xla_tuple %s12, %s13, %s14, %s15
  %s17 = sld [smem:[#allocation0]]
  $region105: #{vae_forward.3} parent=0
    _
  %s19 = ssub.s32 1, %s17
  %s20 = scalar_select 0, %s19, %s17
  $region1: #{vae_forward.3} parent=0
    #allocation4 [shape = 'u8[1024]{0}', space=vmem, size = 0x400, scoped, tag = 'output window, operand 1']
    #allocation5 [shape = 's32[2]{0}', space=sflag, size = 0x8, scoped, tag = 'scoped memory for vae_forward.3']
    #allocation6 [shape = 'u8[1024]{0}', space=vmem, size = 0x400, scoped, tag = 'output window, operand 2']
    #allocation7 [shape = 's32[2]{0}', space=sflag, size = 0x8, scoped, tag = 'scoped memory for vae_forward.3']
    #allocation8 [shape = 'u8[1024]{0}', space=vmem, size = 0x400, scoped, tag = 'output window, operand 3']
    %21 = vsyncpa [#allocation5], 0
    %s22 = scalar_lea.sflag [#allocation5], 1
    %23 = vsyncpa %s22, 0
    %24 = vsyncpa [#allocation7], 0
    %s25 = scalar_lea.sflag [#allocation7], 1
    %26 = vsyncpa %s25, 0
    loop: start=0, step=1, limit=4
    $region2: #{vae_forward.3} parent=1 // loop_pre_header
      _
    $region3: #{vae_forward.3} parent=1 // loop_header
      %s28 = sphi 0, %s32
      %p29 = scmp.ge.s32.totalorder %s28, 4
      %s38 = sphi 0, %s40
      %s41 = sphi 0, %s38
      %s42 = sphi 0, %s41
      %s58 = sphi 0, %s42
      %s64 = sphi 0, %s66
      %s67 = sphi 0, %s64
      %s68 = sphi 0, %s67
      %s84 = sphi 0, %s68
      %s88 = sphi 0, %s88
      %s90 = sphi 0, %s88
      %s91 = sphi 0, %s90
      %s105 = sphi 0, %s91
      %s109 = sphi 0, %s109
      %s111 = sphi 0, %s109
      %s112 = sphi 0, %s111
      %s126 = sphi 0, %s112
      %s130 = sphi 0, %s130
      %s132 = sphi 0, %s130
      %s133 = sphi 0, %s132
      %s147 = sphi 0, %s133
      %s151 = sphi 0, %s151
      %s153 = sphi 0, %s151
      %s154 = sphi 0, %s153
      %s168 = sphi 0, %s154
      %s172 = sphi 0, %s172
      %s174 = sphi 0, %s172
      %s175 = sphi 0, %s174
      %s189 = sphi 0, %s175
      %s193 = sphi 0, %s193
      %s195 = sphi 0, %s193
      %s196 = sphi 0, %s195
      %s210 = sphi 0, %s196
      %s214 = sphi 0, %s214
      %s216 = sphi 0, %s214
      %s217 = sphi 0, %s216
      %s231 = sphi 0, %s217
      %s235 = sphi 0, %s235
      %s237 = sphi 0, %s235
      %s238 = sphi 0, %s237
      %s252 = sphi 0, %s238
      %s256 = sphi 0, %s256
      %s258 = sphi 0, %s256
      %s259 = sphi 0, %s258
      %s273 = sphi 0, %s259
      %s277 = sphi 0, %s277
      %s279 = sphi 0, %s277
      %s280 = sphi 0, %s279
      %s294 = sphi 0, %s280
      %s300 = sphi 0, %s302
      %s303 = sphi 0, %s300
      %s304 = sphi 0, %s303
      %s320 = sphi 0, %s304
      %s326 = sphi 0, %s328
      %s329 = sphi 0, %s326
      %s330 = sphi 0, %s329
      %s346 = sphi 0, %s330
      %s352 = sphi 0, %s354
      %s355 = sphi 0, %s352
      %s356 = sphi 0, %s355
      %s372 = sphi 0, %s356
      %s378 = sphi 0, %s380
      %s381 = sphi 0, %s378
      %s382 = sphi 0, %s381
      %s398 = sphi 0, %s382
    $region4: #{vae_forward.3} parent=1 // loop_header_branch
      %31 = sbr.rel (%p29) target = $region8
    $region5: #{vae_forward.3} parent=1 // loop_body
      %s33 = ssub.s32 %s28, 1
      %s34 = ssub.s32 %s28, 2
      %s35 = sadd.s32 %s28, 1
      %s36 = ssub.s32 %s28, %s35
      %p37 = scmp.eq.s32.totalorder %s36, 0
      %s39 = sadd.s32 %s38, 1
      %s40 = scalar_select %p37, %s38, %s39
      %p43 = pneg %p37
      %p44 = scmp.eq.s32.totalorder %s28, 1
      %p45 = por %p43, %p44
      %p46 = scmp.ne.s32.totalorder %s38, %s41
      %p47 = scmp.eq.s32.totalorder %s28, 0
      %p48 = por %p46, %p47
      %p49 = scmp.ne.s32.totalorder %s38, %s41
      %p50 = scmp.eq.s32.totalorder %s33, 1
      %p51 = por %p49, %p50
      %p52 = scmp.ne.s32.totalorder %s41, %s42
      %p53 = scmp.eq.s32.totalorder %s33, 0
      %p54 = por %p52, %p53
      %p55 = scmp.ne.s32.totalorder %s41, %s42
      %p56 = scmp.eq.s32.totalorder %s34, 1
      %p57 = por %p55, %p56
      %p59 = scmp.ne.s32.totalorder %s42, %s58
      %p60 = scmp.eq.s32.totalorder %s34, 0
      %p61 = por %p59, %p60
      %s62 = ssub.s32 %s28, %s35
      %p63 = scmp.eq.s32.totalorder %s62, 0
      %s65 = sadd.s32 %s64, 1
      %s66 = scalar_select %p63, %s64, %s65
      %p69 = pneg %p63
      %p70 = scmp.eq.s32.totalorder %s28, 1
      %p71 = por %p69, %p70
      %p72 = scmp.ne.s32.totalorder %s64, %s67
      %p73 = scmp.eq.s32.totalorder %s28, 0
      %p74 = por %p72, %p73
      %p75 = scmp.ne.s32.totalorder %s64, %s67
      %p76 = scmp.eq.s32.totalorder %s33, 1
      %p77 = por %p75, %p76
      %p78 = scmp.ne.s32.totalorder %s67, %s68
      %p79 = scmp.eq.s32.totalorder %s33, 0
      %p80 = por %p78, %p79
      %p81 = scmp.ne.s32.totalorder %s67, %s68
      %p82 = scmp.eq.s32.totalorder %s34, 1
      %p83 = por %p81, %p82
      %p85 = scmp.ne.s32.totalorder %s68, %s84
      %p86 = scmp.eq.s32.totalorder %s34, 0
      %p87 = por %p85, %p86
      %s89 = sadd.s32 %s88, 1
      %p92 = scmp.eq.s32.totalorder %s28, 1
      %p93 = scmp.ne.s32.totalorder %s88, %s90
      %p94 = scmp.eq.s32.totalorder %s28, 0
      %p95 = por %p93, %p94
      %p96 = scmp.ne.s32.totalorder %s88, %s90
      %p97 = scmp.eq.s32.totalorder %s33, 1
      %p98 = por %p96, %p97
      %p99 = scmp.ne.s32.totalorder %s90, %s91
      %p100 = scmp.eq.s32.totalorder %s33, 0
      %p101 = por %p99, %p100
      %p102 = scmp.ne.s32.totalorder %s90, %s91
      %p103 = scmp.eq.s32.totalorder %s34, 1
      %p104 = por %p102, %p103
      %p106 = scmp.ne.s32.totalorder %s91, %s105
      %p107 = scmp.eq.s32.totalorder %s34, 0
      %p108 = por %p106, %p107
      %s110 = sadd.s32 %s109, 1
      %p113 = scmp.eq.s32.totalorder %s28, 1
      %p114 = scmp.ne.s32.totalorder %s109, %s111
      %p115 = scmp.eq.s32.totalorder %s28, 0
      %p116 = por %p114, %p115
      %p117 = scmp.ne.s32.totalorder %s109, %s111
      %p118 = scmp.eq.s32.totalorder %s33, 1
      %p119 = por %p117, %p118
      %p120 = scmp.ne.s32.totalorder %s111, %s112
      %p121 = scmp.eq.s32.totalorder %s33, 0
      %p122 = por %p120, %p121
      %p123 = scmp.ne.s32.totalorder %s111, %s112
      %p124 = scmp.eq.s32.totalorder %s34, 1
      %p125 = por %p123, %p124
      %p127 = scmp.ne.s32.totalorder %s112, %s126
      %p128 = scmp.eq.s32.totalorder %s34, 0
      %p129 = por %p127, %p128
      %s131 = sadd.s32 %s130, 1
      %p134 = scmp.eq.s32.totalorder %s28, 1
      %p135 = scmp.ne.s32.totalorder %s130, %s132
      %p136 = scmp.eq.s32.totalorder %s28, 0
      %p137 = por %p135, %p136
      %p138 = scmp.ne.s32.totalorder %s130, %s132
      %p139 = scmp.eq.s32.totalorder %s33, 1
      %p140 = por %p138, %p139
      %p141 = scmp.ne.s32.totalorder %s132, %s133
      %p142 = scmp.eq.s32.totalorder %s33, 0
      %p143 = por %p141, %p142
      %p144 = scmp.ne.s32.totalorder %s132, %s133
      %p145 = scmp.eq.s32.totalorder %s34, 1
      %p146 = por %p144, %p145
      %p148 = scmp.ne.s32.totalorder %s133, %s147
      %p149 = scmp.eq.s32.totalorder %s34, 0
      %p150 = por %p148, %p149
      %s152 = sadd.s32 %s151, 1
      %p155 = scmp.eq.s32.totalorder %s28, 1
      %p156 = scmp.ne.s32.totalorder %s151, %s153
      %p157 = scmp.eq.s32.totalorder %s28, 0
      %p158 = por %p156, %p157
      %p159 = scmp.ne.s32.totalorder %s151, %s153
      %p160 = scmp.eq.s32.totalorder %s33, 1
      %p161 = por %p159, %p160
      %p162 = scmp.ne.s32.totalorder %s153, %s154
      %p163 = scmp.eq.s32.totalorder %s33, 0
      %p164 = por %p162, %p163
      %p165 = scmp.ne.s32.totalorder %s153, %s154
      %p166 = scmp.eq.s32.totalorder %s34, 1
      %p167 = por %p165, %p166
      %p169 = scmp.ne.s32.totalorder %s154, %s168
      %p170 = scmp.eq.s32.totalorder %s34, 0
      %p171 = por %p169, %p170
      %s173 = sadd.s32 %s172, 1
      %p176 = scmp.eq.s32.totalorder %s28, 1
      %p177 = scmp.ne.s32.totalorder %s172, %s174
      %p178 = scmp.eq.s32.totalorder %s28, 0
      %p179 = por %p177, %p178
      %p180 = scmp.ne.s32.totalorder %s172, %s174
      %p181 = scmp.eq.s32.totalorder %s33, 1
      %p182 = por %p180, %p181
      %p183 = scmp.ne.s32.totalorder %s174, %s175
      %p184 = scmp.eq.s32.totalorder %s33, 0
      %p185 = por %p183, %p184
      %p186 = scmp.ne.s32.totalorder %s174, %s175
      %p187 = scmp.eq.s32.totalorder %s34, 1
      %p188 = por %p186, %p187
      %p190 = scmp.ne.s32.totalorder %s175, %s189
      %p191 = scmp.eq.s32.totalorder %s34, 0
      %p192 = por %p190, %p191
      %s194 = sadd.s32 %s193, 1
      %p197 = scmp.eq.s32.totalorder %s28, 1
      %p198 = scmp.ne.s32.totalorder %s193, %s195
      %p199 = scmp.eq.s32.totalorder %s28, 0
      %p200 = por %p198, %p199
      %p201 = scmp.ne.s32.totalorder %s193, %s195
      %p202 = scmp.eq.s32.totalorder %s33, 1
      %p203 = por %p201, %p202
      %p204 = scmp.ne.s32.totalorder %s195, %s196
      %p205 = scmp.eq.s32.totalorder %s33, 0
      %p206 = por %p204, %p205
      %p207 = scmp.ne.s32.totalorder %s195, %s196
      %p208 = scmp.eq.s32.totalorder %s34, 1
      %p209 = por %p207, %p208
      %p211 = scmp.ne.s32.totalorder %s196, %s210
      %p212 = scmp.eq.s32.totalorder %s34, 0
      %p213 = por %p211, %p212
      %s215 = sadd.s32 %s214, 1
      %p218 = scmp.eq.s32.totalorder %s28, 1
      %p219 = scmp.ne.s32.totalorder %s214, %s216
      %p220 = scmp.eq.s32.totalorder %s28, 0
      %p221 = por %p219, %p220
      %p222 = scmp.ne.s32.totalorder %s214, %s216
      %p223 = scmp.eq.s32.totalorder %s33, 1
      %p224 = por %p222, %p223
      %p225 = scmp.ne.s32.totalorder %s216, %s217
      %p226 = scmp.eq.s32.totalorder %s33, 0
      %p227 = por %p225, %p226
      %p228 = scmp.ne.s32.totalorder %s216, %s217
      %p229 = scmp.eq.s32.totalorder %s34, 1
      %p230 = por %p228, %p229
      %p232 = scmp.ne.s32.totalorder %s217, %s231
      %p233 = scmp.eq.s32.totalorder %s34, 0
      %p234 = por %p232, %p233
      %s236 = sadd.s32 %s235, 1
      %p239 = scmp.eq.s32.totalorder %s28, 1
      %p240 = scmp.ne.s32.totalorder %s235, %s237
      %p241 = scmp.eq.s32.totalorder %s28, 0
      %p242 = por %p240, %p241
      %p243 = scmp.ne.s32.totalorder %s235, %s237
      %p244 = scmp.eq.s32.totalorder %s33, 1
      %p245 = por %p243, %p244
      %p246 = scmp.ne.s32.totalorder %s237, %s238
      %p247 = scmp.eq.s32.totalorder %s33, 0
      %p248 = por %p246, %p247
      %p249 = scmp.ne.s32.totalorder %s237, %s238
      %p250 = scmp.eq.s32.totalorder %s34, 1
      %p251 = por %p249, %p250
      %p253 = scmp.ne.s32.totalorder %s238, %s252
      %p254 = scmp.eq.s32.totalorder %s34, 0
      %p255 = por %p253, %p254
      %s257 = sadd.s32 %s256, 1
      %p260 = scmp.eq.s32.totalorder %s28, 1
      %p261 = scmp.ne.s32.totalorder %s256, %s258
      %p262 = scmp.eq.s32.totalorder %s28, 0
      %p263 = por %p261, %p262
      %p264 = scmp.ne.s32.totalorder %s256, %s258
      %p265 = scmp.eq.s32.totalorder %s33, 1
      %p266 = por %p264, %p265
      %p267 = scmp.ne.s32.totalorder %s258, %s259
      %p268 = scmp.eq.s32.totalorder %s33, 0
      %p269 = por %p267, %p268
      %p270 = scmp.ne.s32.totalorder %s258, %s259
      %p271 = scmp.eq.s32.totalorder %s34, 1
      %p272 = por %p270, %p271
      %p274 = scmp.ne.s32.totalorder %s259, %s273
      %p275 = scmp.eq.s32.totalorder %s34, 0
      %p276 = por %p274, %p275
      %s278 = sadd.s32 %s277, 1
      %p281 = scmp.eq.s32.totalorder %s28, 1
      %p282 = scmp.ne.s32.totalorder %s277, %s279
      %p283 = scmp.eq.s32.totalorder %s28, 0
      %p284 = por %p282, %p283
      %p285 = scmp.ne.s32.totalorder %s277, %s279
      %p286 = scmp.eq.s32.totalorder %s33, 1
      %p287 = por %p285, %p286
      %p288 = scmp.ne.s32.totalorder %s279, %s280
      %p289 = scmp.eq.s32.totalorder %s33, 0
      %p290 = por %p288, %p289
      %p291 = scmp.ne.s32.totalorder %s279, %s280
      %p292 = scmp.eq.s32.totalorder %s34, 1
      %p293 = por %p291, %p292
      %p295 = scmp.ne.s32.totalorder %s280, %s294
      %p296 = scmp.eq.s32.totalorder %s34, 0
      %p297 = por %p295, %p296
      %s298 = ssub.s32 %s28, %s35
      %p299 = scmp.eq.s32.totalorder %s298, 0
      %s301 = sadd.s32 %s300, 1
      %s302 = scalar_select %p299, %s300, %s301
      %p305 = pneg %p299
      %p306 = scmp.eq.s32.totalorder %s28, 1
      %p307 = por %p305, %p306
      %p308 = scmp.ne.s32.totalorder %s300, %s303
      %p309 = scmp.eq.s32.totalorder %s28, 0
      %p310 = por %p308, %p309
      %p311 = scmp.ne.s32.totalorder %s300, %s303
      %p312 = scmp.eq.s32.totalorder %s33, 1
      %p313 = por %p311, %p312
      %p314 = scmp.ne.s32.totalorder %s303, %s304
      %p315 = scmp.eq.s32.totalorder %s33, 0
      %p316 = por %p314, %p315
      %p317 = scmp.ne.s32.totalorder %s303, %s304
      %p318 = scmp.eq.s32.totalorder %s34, 1
      %p319 = por %p317, %p318
      %p321 = scmp.ne.s32.totalorder %s304, %s320
      %p322 = scmp.eq.s32.totalorder %s34, 0
      %p323 = por %p321, %p322
      %s324 = ssub.s32 %s28, %s35
      %p325 = scmp.eq.s32.totalorder %s324, 0
      %s327 = sadd.s32 %s326, 1
      %s328 = scalar_select %p325, %s326, %s327
      %p331 = pneg %p325
      %p332 = scmp.eq.s32.totalorder %s28, 1
      %p333 = por %p331, %p332
      %p334 = scmp.ne.s32.totalorder %s326, %s329
      %p335 = scmp.eq.s32.totalorder %s28, 0
      %p336 = por %p334, %p335
      %p337 = scmp.ne.s32.totalorder %s326, %s329
      %p338 = scmp.eq.s32.totalorder %s33, 1
      %p339 = por %p337, %p338
      %p340 = scmp.ne.s32.totalorder %s329, %s330
      %p341 = scmp.eq.s32.totalorder %s33, 0
      %p342 = por %p340, %p341
      %p343 = scmp.ne.s32.totalorder %s329, %s330
      %p344 = scmp.eq.s32.totalorder %s34, 1
      %p345 = por %p343, %p344
      %p347 = scmp.ne.s32.totalorder %s330, %s346
      %p348 = scmp.eq.s32.totalorder %s34, 0
      %p349 = por %p347, %p348
      %s350 = ssub.s32 %s28, %s35
      %p351 = scmp.eq.s32.totalorder %s350, 0
      %s353 = sadd.s32 %s352, 1
      %s354 = scalar_select %p351, %s352, %s353
      %p357 = pneg %p351
      %p358 = scmp.eq.s32.totalorder %s28, 1
      %p359 = por %p357, %p358
      %p360 = scmp.ne.s32.totalorder %s352, %s355
      %p361 = scmp.eq.s32.totalorder %s28, 0
      %p362 = por %p360, %p361
      %p363 = scmp.ne.s32.totalorder %s352, %s355
      %p364 = scmp.eq.s32.totalorder %s33, 1
      %p365 = por %p363, %p364
      %p366 = scmp.ne.s32.totalorder %s355, %s356
      %p367 = scmp.eq.s32.totalorder %s33, 0
      %p368 = por %p366, %p367
      %p369 = scmp.ne.s32.totalorder %s355, %s356
      %p370 = scmp.eq.s32.totalorder %s34, 1
      %p371 = por %p369, %p370
      %p373 = scmp.ne.s32.totalorder %s356, %s372
      %p374 = scmp.eq.s32.totalorder %s34, 0
      %p375 = por %p373, %p374
      %s376 = ssub.s32 %s28, %s35
      %p377 = scmp.eq.s32.totalorder %s376, 0
      %s379 = sadd.s32 %s378, 1
      %s380 = scalar_select %p377, %s378, %s379
      %p383 = pneg %p377
      %p384 = scmp.eq.s32.totalorder %s28, 1
      %p385 = por %p383, %p384
      %p386 = scmp.ne.s32.totalorder %s378, %s381
      %p387 = scmp.eq.s32.totalorder %s28, 0
      %p388 = por %p386, %p387
      %p389 = scmp.ne.s32.totalorder %s378, %s381
      %p390 = scmp.eq.s32.totalorder %s33, 1
      %p391 = por %p389, %p390
      %p392 = scmp.ne.s32.totalorder %s381, %s382
      %p393 = scmp.eq.s32.totalorder %s33, 0
      %p394 = por %p392, %p393
      %p395 = scmp.ne.s32.totalorder %s381, %s382
      %p396 = scmp.eq.s32.totalorder %s34, 1
      %p397 = por %p395, %p396
      %p399 = scmp.ne.s32.totalorder %s382, %s398
      %p400 = scmp.eq.s32.totalorder %s34, 0
      %p401 = por %p399, %p400
      %p402 = scmp.le.s32.totalorder 1, %s28
      %p403 = scmp.lt.s32.totalorder %s28, 3
      %p404 = pnand %p402, %p403
      %p405 = pneg %p404
      // Predicated region
      $region9: #{vae_forward.3} parent=5 // pred_check
        _
      $region10: #{vae_forward.3} parent=5 // pred_check_branch
        %407 = sbr.rel (%p404) target = $region12
      $region11: #{vae_forward.3} parent=5 // pred_region
        %s408 = ssub.s32 %s28, 1
        // Predicated region
        $region13: #{vae_forward.3} parent=11 // pred_check
          %p409 = pneg %p101
        $region14: #{vae_forward.3} parent=11 // pred_check_branch
          %411 = sbr.rel (%p409) target = $region16
        $region15: #{vae_forward.3} parent=11 // pred_region
          _
        $region16: #{vae_forward.3} parent=11 // pred_fallthru
          _
        // Predicated region
        $region17: #{vae_forward.3} parent=11 // pred_check
          %p412 = pneg %p122
        $region18: #{vae_forward.3} parent=11 // pred_check_branch
          %414 = sbr.rel (%p412) target = $region20
        $region19: #{vae_forward.3} parent=11 // pred_region
          _
        $region20: #{vae_forward.3} parent=11 // pred_fallthru
          _
        // Predicated region
        $region21: #{vae_forward.3} parent=11 // pred_check
          %p415 = pneg %p143
        $region22: #{vae_forward.3} parent=11 // pred_check_branch
          %417 = sbr.rel (%p415) target = $region24
        $region23: #{vae_forward.3} parent=11 // pred_region
          _
        $region24: #{vae_forward.3} parent=11 // pred_fallthru
          _
        // Predicated region
        $region25: #{vae_forward.3} parent=11 // pred_check
          %p418 = pneg %p164
        $region26: #{vae_forward.3} parent=11 // pred_check_branch
          %420 = sbr.rel (%p418) target = $region28
        $region27: #{vae_forward.3} parent=11 // pred_region
          _
        $region28: #{vae_forward.3} parent=11 // pred_fallthru
          _
        // Predicated region
        $region29: #{vae_forward.3} parent=11 // pred_check
          %p421 = pneg %p185
        $region30: #{vae_forward.3} parent=11 // pred_check_branch
          %423 = sbr.rel (%p421) target = $region32
        $region31: #{vae_forward.3} parent=11 // pred_region
          _
        $region32: #{vae_forward.3} parent=11 // pred_fallthru
          _
        // Predicated region
        $region33: #{vae_forward.3} parent=11 // pred_check
          %p424 = pneg %p206
        $region34: #{vae_forward.3} parent=11 // pred_check_branch
          %426 = sbr.rel (%p424) target = $region36
        $region35: #{vae_forward.3} parent=11 // pred_region
          _
        $region36: #{vae_forward.3} parent=11 // pred_fallthru
          _
        // Predicated region
        $region37: #{vae_forward.3} parent=11 // pred_check
          %p427 = pneg %p227
        $region38: #{vae_forward.3} parent=11 // pred_check_branch
          %429 = sbr.rel (%p427) target = $region40
        $region39: #{vae_forward.3} parent=11 // pred_region
          _
        $region40: #{vae_forward.3} parent=11 // pred_fallthru
          _
        // Predicated region
        $region41: #{vae_forward.3} parent=11 // pred_check
          %p430 = pneg %p248
        $region42: #{vae_forward.3} parent=11 // pred_check_branch
          %432 = sbr.rel (%p430) target = $region44
        $region43: #{vae_forward.3} parent=11 // pred_region
          _
        $region44: #{vae_forward.3} parent=11 // pred_fallthru
          _
        // Predicated region
        $region45: #{vae_forward.3} parent=11 // pred_check
          %p433 = pneg %p269
        $region46: #{vae_forward.3} parent=11 // pred_check_branch
          %435 = sbr.rel (%p433) target = $region48
        $region47: #{vae_forward.3} parent=11 // pred_region
          _
        $region48: #{vae_forward.3} parent=11 // pred_fallthru
          _
        // Predicated region
        $region49: #{vae_forward.3} parent=11 // pred_check
          %p436 = pneg %p290
        $region50: #{vae_forward.3} parent=11 // pred_check_branch
          %438 = sbr.rel (%p436) target = $region52
        $region51: #{vae_forward.3} parent=11 // pred_region
          _
        $region52: #{vae_forward.3} parent=11 // pred_fallthru
          _
      $region12: #{vae_forward.3} parent=5 // pred_fallthru
        _
      %p439 = scmp.lt.s32.totalorder %s28, 2
      // Predicated region
      $region53: #{vae_forward.3} parent=5 // pred_check
        %p440 = pneg %p439
      $region54: #{vae_forward.3} parent=5 // pred_check_branch
        %442 = sbr.rel (%p440) target = $region56
      $region55: #{vae_forward.3} parent=5 // pred_region
        // Predicated region
        $region57: #{vae_forward.3} parent=55 // pred_check
          %p443 = pneg %p48
        $region58: #{vae_forward.3} parent=55 // pred_check_branch
          %445 = sbr.rel (%p443) target = $region60
        $region59: #{vae_forward.3} parent=55 // pred_region
          %p446 = scmp.lt.s32.totalorder %s28, 1
          %s447 = scalar_select %p446, %s28, 1
          %s448 = smul.addr %s447, 128
          %s449 = smul.addr %s448, 4
          %s450 = scalar_lea.vmem %s0, %s449
        $region60: #{vae_forward.3} parent=55 // pred_fallthru
          _
        // Predicated region
        $region61: #{vae_forward.3} parent=55 // pred_check
          %p451 = pneg %p74
        $region62: #{vae_forward.3} parent=55 // pred_check_branch
          %453 = sbr.rel (%p451) target = $region64
        $region63: #{vae_forward.3} parent=55 // pred_region
          %p454 = scmp.lt.s32.totalorder %s28, 1
          %s455 = scalar_select %p454, %s28, 1
          %s456 = scalar_lea.vmem %s1, %s455
        $region64: #{vae_forward.3} parent=55 // pred_fallthru
          _
      $region56: #{vae_forward.3} parent=5 // pred_fallthru
        _
      %p457 = scmp.le.s32.totalorder 1, %s28
      %p458 = scmp.lt.s32.totalorder %s28, 3
      %p459 = pnand %p457, %p458
      %p460 = pneg %p459
      // Predicated region
      $region65: #{vae_forward.3} parent=5 // pred_check
        _
      $region66: #{vae_forward.3} parent=5 // pred_check_branch
        %462 = sbr.rel (%p459) target = $region68
      $region67: #{vae_forward.3} parent=5 // pred_region
        %s463 = ssub.s32 %s28, 1
        %p464 = scmp.lt.s32.totalorder %s33, 1
        %s465 = scalar_select %p464, %s33, 1
        %s466 = smul.addr %s465, 128
        %s467 = smul.addr %s466, 4
        %s468 = scalar_lea.vmem %s0, %s467
        %p469 = pneg %p54
        %p470 = pneg %p51
        %p471 = scmp.lt.s32.totalorder %s33, 1
        %s472 = scalar_select %p471, %s33, 1
        %s473 = scalar_lea.vmem %s1, %s472
        %p474 = pneg %p80
        %p475 = pneg %p77
        %p476 = pneg %p101
        %p477 = pneg %p98
        %p478 = pneg %p122
        %p479 = pneg %p119
        %p480 = pneg %p143
        %p481 = pneg %p140
        %p482 = pneg %p164
        %p483 = pneg %p161
        %p484 = pneg %p185
        %p485 = pneg %p182
        %p486 = pneg %p206
        %p487 = pneg %p203
        %p488 = pneg %p227
        %p489 = pneg %p224
        %p490 = pneg %p248
        %p491 = pneg %p245
        %p492 = pneg %p269
        %p493 = pneg %p266
        %p494 = pneg %p290
        %p495 = pneg %p287
        %p496 = pneg %p316
        %p497 = pneg %p313
        %p498 = scmp.lt.s32.totalorder %s33, 1
        %s499 = scalar_select %p498, %s33, 1
        %s500 = smul.addr %s499, 4
        %s501 = smul.addr %s500, 8
        %s502 = scalar_lea.vmem %s12, %s501
        %p503 = pneg %p342
        %p504 = pneg %p339
        %s505 = sand.u32 %s329, 1
        %s506 = scalar_lea.sflag [#allocation5], %s505
        %s507 = sand.u32 %s329, 1
        %s508 = scalar_lea.vmem [#allocation4], %s507
        %p509 = pneg %p368
        %p510 = pneg %p365
        %s511 = sand.u32 %s33, 1
        %s512 = scalar_lea.sflag [#allocation7], %s511
        %s513 = sand.u32 %s355, 1
        %s514 = scalar_lea.vmem [#allocation6], %s513
        %p515 = pneg %p394
        %p516 = pneg %p391
        %s517 = sand.u32 %s33, 1
        %s518 = scalar_lea.sflag [#allocation7], %s517
        %s519 = sand.u32 %s381, 1
        %s520 = scalar_lea.vmem [#allocation8], %s519
        %p521 = scmp.lt.s32.totalorder %s33, 1
        %s522 = scalar_select %p521, %s33, 1
        %s523 = smul.addr %s522, 128
        %s524 = smul.addr %s523, 4
        %s525 = scalar_lea.vmem %s0, %s524
        %p526 = scmp.lt.s32.totalorder %s33, 1
        %s527 = scalar_select %p526, %s33, 1
        %s528 = scalar_lea.vmem %s1, %s527
        %p529 = scmp.lt.s32.totalorder %s33, 1
        %s530 = scalar_select %p529, %s33, 1
        %s531 = smul.addr %s530, 4
        %s532 = smul.addr %s531, 8
        %s533 = scalar_lea.vmem %s12, %s532
        %v534 = vld [vmem:[%s2] sm:$0xff]
        %v535 = vld [vmem:[%s2 + $0x8] sm:$0xff]
        %v536 = vld [vmem:[%s2 + $0x10] sm:$0x33]
        %v537 = vld [vmem:[%s525] sm:$0xff]
        %v538 = vld [vmem:[%s525 + $0x8] sm:$0xff]
        %v539 = vld [vmem:[%s525 + $0x10] sm:$0xff]
        %v540 = vld [vmem:[%s525 + $0x18] sm:$0xff]
        %v541 = vld [vmem:[%s525 + $0x20] sm:$0xff]
        %v542 = vld [vmem:[%s525 + $0x28] sm:$0xff]
        %v543 = vld [vmem:[%s525 + $0x30] sm:$0xff]
        %v544 = vld [vmem:[%s525 + $0x38] sm:$0xff]
        %v545 = vld [vmem:[%s525 + $0x40] sm:$0xff]
        %v546 = vld [vmem:[%s525 + $0x48] sm:$0xff]
        %v547 = vld [vmem:[%s525 + $0x50] sm:$0xff]
        %v548 = vld [vmem:[%s525 + $0x58] sm:$0xff]
        %v549 = vld [vmem:[%s525 + $0x60] sm:$0xff]
        %v550 = vld [vmem:[%s525 + $0x68] sm:$0xff]
        %v551 = vld [vmem:[%s525 + $0x70] sm:$0xff]
        %v552 = vld [vmem:[%s525 + $0x78] sm:$0xff]
        %v553 = vld [vmem:[%s525 + $0x80] sm:$0xff]
        %v554 = vld [vmem:[%s525 + $0x88] sm:$0xff]
        %v555 = vld [vmem:[%s525 + $0x90] sm:$0xff]
        %v556 = vld [vmem:[%s525 + $0x98] sm:$0xff]
        %v557 = vld [vmem:[%s525 + $0xa0] sm:$0xff]
        %v558 = vld [vmem:[%s525 + $0xa8] sm:$0xff]
        %v559 = vld [vmem:[%s525 + $0xb0] sm:$0xff]
        %v560 = vld [vmem:[%s525 + $0xb8] sm:$0xff]
        %v561 = vld [vmem:[%s525 + $0xc0] sm:$0xff]
        %v562 = vld [vmem:[%s525 + $0xc8] sm:$0xff]
        %v563 = vld [vmem:[%s525 + $0xd0] sm:$0xff]
        %v564 = vld [vmem:[%s525 + $0xd8] sm:$0xff]
        %v565 = vld [vmem:[%s525 + $0xe0] sm:$0xff]
        %v566 = vld [vmem:[%s525 + $0xe8] sm:$0xff]
        %v567 = vld [vmem:[%s525 + $0xf0] sm:$0xff]
        %v568 = vld [vmem:[%s525 + $0xf8] sm:$0xff]
        %v569 = vld [vmem:[%s525 + $0x100] sm:$0xff]
        %v570 = vld [vmem:[%s525 + $0x108] sm:$0xff]
        %v571 = vld [vmem:[%s525 + $0x110] sm:$0xff]
        %v572 = vld [vmem:[%s525 + $0x118] sm:$0xff]
        %v573 = vld [vmem:[%s525 + $0x120] sm:$0xff]
        %v574 = vld [vmem:[%s525 + $0x128] sm:$0xff]
        %v575 = vld [vmem:[%s525 + $0x130] sm:$0xff]
        %v576 = vld [vmem:[%s525 + $0x138] sm:$0xff]
        %v577 = vld [vmem:[%s525 + $0x140] sm:$0xff]
        %v578 = vld [vmem:[%s525 + $0x148] sm:$0xff]
        %v579 = vld [vmem:[%s525 + $0x150] sm:$0xff]
        %v580 = vld [vmem:[%s525 + $0x158] sm:$0xff]
        %v581 = vld [vmem:[%s525 + $0x160] sm:$0xff]
        %v582 = vld [vmem:[%s525 + $0x168] sm:$0xff]
        %v583 = vld [vmem:[%s525 + $0x170] sm:$0xff]
        %v584 = vld [vmem:[%s525 + $0x178] sm:$0xff]
        %v585 = vld [vmem:[%s525 + $0x180] sm:$0xff]
        %v586 = vld [vmem:[%s525 + $0x188] sm:$0xff]
        %v587 = vld [vmem:[%s525 + $0x190] sm:$0xff]
        %v588 = vld [vmem:[%s525 + $0x198] sm:$0xff]
        %v589 = vld [vmem:[%s525 + $0x1a0] sm:$0xff]
        %v590 = vld [vmem:[%s525 + $0x1a8] sm:$0xff]
        %v591 = vld [vmem:[%s525 + $0x1b0] sm:$0xff]
        %v592 = vld [vmem:[%s525 + $0x1b8] sm:$0xff]
        %v593 = vld [vmem:[%s525 + $0x1c0] sm:$0xff]
        %v594 = vld [vmem:[%s525 + $0x1c8] sm:$0xff]
        %v595 = vld [vmem:[%s525 + $0x1d0] sm:$0xff]
        %v596 = vld [vmem:[%s525 + $0x1d8] sm:$0xff]
        %v597 = vld [vmem:[%s525 + $0x1e0] sm:$0xff]
        %v598 = vld [vmem:[%s525 + $0x1e8] sm:$0xff]
        %v599 = vld [vmem:[%s525 + $0x1f0] sm:$0x11]
        %v600 = vld [vmem:[%s525 + $0x1f8] sm:$0x11]
        %v601 = vld [vmem:[%s3] sm:$0xff]
        %v602 = vld [vmem:[%s3 + $0x8] sm:$0xff]
        %v603 = vld [vmem:[%s3 + $0x10] sm:$0xf]
        %605 = vset.pattern.permute.xlu0 0
        %606 = vperm.xlu0 %605, %v601
        %v607 = vpop.permute.xlu0 %606
        %610 = vset.pattern.permute.xlu0 0
        %611 = vperm.xlu0 %610, %v602
        %v612 = vpop.permute.xlu0 %611
        %615 = vset.pattern.permute.xlu0 0
        %616 = vperm.xlu0 %615, %v603
        %v617 = vpop.permute.xlu0 %616
        %v622 = vunpack.c.l.b16 %v534
        %v623 = vunpack.c.h.b16 %v534
        %v624 = vunpack.c.l.b16 %v535
        %v625 = vunpack.c.h.b16 %v535
        %v626 = vunpack.c.l.b16 %v536
        %v627 = vunpack.c.h.b16 %v536
        %v628 = vpack.c.b16 %v624, %v622
        %v629 = vpack.c.b16 %v625, %v623
        %v630 = vpack.c.b16 %v626, %v626
        %v631 = vpack.c.b16 %v627, %v627
        %v698 = vunpack.c.l.b16 %v537
        %v699 = vunpack.c.h.b16 %v537
        %v700 = vunpack.c.l.b16 %v538
        %v701 = vunpack.c.h.b16 %v538
        %v702 = vunpack.c.l.b16 %v539
        %v703 = vunpack.c.h.b16 %v539
        %v704 = vunpack.c.l.b16 %v540
        %v705 = vunpack.c.h.b16 %v540
        %v706 = vunpack.c.l.b16 %v541
        %v707 = vunpack.c.h.b16 %v541
        %v708 = vunpack.c.l.b16 %v542
        %v709 = vunpack.c.h.b16 %v542
        %v710 = vunpack.c.l.b16 %v543
        %v711 = vunpack.c.h.b16 %v543
        %v712 = vunpack.c.l.b16 %v544
        %v713 = vunpack.c.h.b16 %v544
        %v714 = vunpack.c.l.b16 %v545
        %v715 = vunpack.c.h.b16 %v545
        %v716 = vunpack.c.l.b16 %v546
        %v717 = vunpack.c.h.b16 %v546
        %v718 = vunpack.c.l.b16 %v547
        %v719 = vunpack.c.h.b16 %v547
        %v720 = vunpack.c.l.b16 %v548
        %v721 = vunpack.c.h.b16 %v548
        %v722 = vunpack.c.l.b16 %v549
        %v723 = vunpack.c.h.b16 %v549
        %v724 = vunpack.c.l.b16 %v550
        %v725 = vunpack.c.h.b16 %v550
        %v726 = vunpack.c.l.b16 %v551
        %v727 = vunpack.c.h.b16 %v551
        %v728 = vunpack.c.l.b16 %v552
        %v729 = vunpack.c.h.b16 %v552
        %v730 = vunpack.c.l.b16 %v553
        %v731 = vunpack.c.h.b16 %v553
        %v732 = vunpack.c.l.b16 %v554
        %v733 = vunpack.c.h.b16 %v554
        %v734 = vunpack.c.l.b16 %v555
        %v735 = vunpack.c.h.b16 %v555
        %v736 = vunpack.c.l.b16 %v556
        %v737 = vunpack.c.h.b16 %v556
        %v738 = vunpack.c.l.b16 %v557
        %v739 = vunpack.c.h.b16 %v557
        %v740 = vunpack.c.l.b16 %v558
        %v741 = vunpack.c.h.b16 %v558
        %v742 = vunpack.c.l.b16 %v559
        %v743 = vunpack.c.h.b16 %v559
        %v744 = vunpack.c.l.b16 %v560
        %v745 = vunpack.c.h.b16 %v560
        %v746 = vunpack.c.l.b16 %v561
        %v747 = vunpack.c.h.b16 %v561
        %v748 = vunpack.c.l.b16 %v562
        %v749 = vunpack.c.h.b16 %v562
        %v750 = vunpack.c.l.b16 %v563
        %v751 = vunpack.c.h.b16 %v563
        %v752 = vunpack.c.l.b16 %v564
        %v753 = vunpack.c.h.b16 %v564
        %v754 = vunpack.c.l.b16 %v565
        %v755 = vunpack.c.h.b16 %v565
        %v756 = vunpack.c.l.b16 %v566
        %v757 = vunpack.c.h.b16 %v566
        %v758 = vunpack.c.l.b16 %v567
        %v759 = vunpack.c.h.b16 %v567
        %v760 = vunpack.c.l.b16 %v568
        %v761 = vunpack.c.h.b16 %v568
        %v762 = vunpack.c.l.b16 %v569
        %v763 = vunpack.c.h.b16 %v569
        %v764 = vunpack.c.l.b16 %v570
        %v765 = vunpack.c.h.b16 %v570
        %v766 = vunpack.c.l.b16 %v571
        %v767 = vunpack.c.h.b16 %v571
        %v768 = vunpack.c.l.b16 %v572
        %v769 = vunpack.c.h.b16 %v572
        %v770 = vunpack.c.l.b16 %v573
        %v771 = vunpack.c.h.b16 %v573
        %v772 = vunpack.c.l.b16 %v574
        %v773 = vunpack.c.h.b16 %v574
        %v774 = vunpack.c.l.b16 %v575
        %v775 = vunpack.c.h.b16 %v575
        %v776 = vunpack.c.l.b16 %v576
        %v777 = vunpack.c.h.b16 %v576
        %v778 = vunpack.c.l.b16 %v577
        %v779 = vunpack.c.h.b16 %v577
        %v780 = vunpack.c.l.b16 %v578
        %v781 = vunpack.c.h.b16 %v578
        %v782 = vunpack.c.l.b16 %v579
        %v783 = vunpack.c.h.b16 %v579
        %v784 = vunpack.c.l.b16 %v580
        %v785 = vunpack.c.h.b16 %v580
        %v786 = vunpack.c.l.b16 %v581
        %v787 = vunpack.c.h.b16 %v581
        %v788 = vunpack.c.l.b16 %v582
        %v789 = vunpack.c.h.b16 %v582
        %v790 = vunpack.c.l.b16 %v583
        %v791 = vunpack.c.h.b16 %v583
        %v792 = vunpack.c.l.b16 %v584
        %v793 = vunpack.c.h.b16 %v584
        %v794 = vunpack.c.l.b16 %v585
        %v795 = vunpack.c.h.b16 %v585
        %v796 = vunpack.c.l.b16 %v586
        %v797 = vunpack.c.h.b16 %v586
        %v798 = vunpack.c.l.b16 %v587
        %v799 = vunpack.c.h.b16 %v587
        %v800 = vunpack.c.l.b16 %v588
        %v801 = vunpack.c.h.b16 %v588
        %v802 = vunpack.c.l.b16 %v589
        %v803 = vunpack.c.h.b16 %v589
        %v804 = vunpack.c.l.b16 %v590
        %v805 = vunpack.c.h.b16 %v590
        %v806 = vunpack.c.l.b16 %v591
        %v807 = vunpack.c.h.b16 %v591
        %v808 = vunpack.c.l.b16 %v592
        %v809 = vunpack.c.h.b16 %v592
        %v810 = vunpack.c.l.b16 %v593
        %v811 = vunpack.c.h.b16 %v593
        %v812 = vunpack.c.l.b16 %v594
        %v813 = vunpack.c.h.b16 %v594
        %v814 = vunpack.c.l.b16 %v595
        %v815 = vunpack.c.h.b16 %v595
        %v816 = vunpack.c.l.b16 %v596
        %v817 = vunpack.c.h.b16 %v596
        %v818 = vunpack.c.l.b16 %v597
        %v819 = vunpack.c.h.b16 %v597
        %v820 = vunpack.c.l.b16 %v598
        %v821 = vunpack.c.h.b16 %v598
        %v822 = vunpack.c.l.b16 %v599
        %v823 = vunpack.c.h.b16 %v599
        %v824 = vunpack.c.l.b16 %v600
        %v825 = vunpack.c.h.b16 %v600
        %v826 = vpack.c.b16 %v702, %v698
        %v827 = vpack.c.b16 %v703, %v699
        %v828 = vpack.c.b16 %v704, %v700
        %v829 = vpack.c.b16 %v705, %v701
        %v830 = vpack.c.b16 %v710, %v706
        %v831 = vpack.c.b16 %v711, %v707
        %v832 = vpack.c.b16 %v712, %v708
        %v833 = vpack.c.b16 %v713, %v709
        %v834 = vpack.c.b16 %v718, %v714
        %v835 = vpack.c.b16 %v719, %v715
        %v836 = vpack.c.b16 %v720, %v716
        %v837 = vpack.c.b16 %v721, %v717
        %v838 = vpack.c.b16 %v726, %v722
        %v839 = vpack.c.b16 %v727, %v723
        %v840 = vpack.c.b16 %v728, %v724
        %v841 = vpack.c.b16 %v729, %v725
        %v842 = vpack.c.b16 %v734, %v730
        %v843 = vpack.c.b16 %v735, %v731
        %v844 = vpack.c.b16 %v736, %v732
        %v845 = vpack.c.b16 %v737, %v733
        %v846 = vpack.c.b16 %v742, %v738
        %v847 = vpack.c.b16 %v743, %v739
        %v848 = vpack.c.b16 %v744, %v740
        %v849 = vpack.c.b16 %v745, %v741
        %v850 = vpack.c.b16 %v750, %v746
        %v851 = vpack.c.b16 %v751, %v747
        %v852 = vpack.c.b16 %v752, %v748
        %v853 = vpack.c.b16 %v753, %v749
        %v854 = vpack.c.b16 %v758, %v754
        %v855 = vpack.c.b16 %v759, %v755
        %v856 = vpack.c.b16 %v760, %v756
        %v857 = vpack.c.b16 %v761, %v757
        %v858 = vpack.c.b16 %v766, %v762
        %v859 = vpack.c.b16 %v767, %v763
        %v860 = vpack.c.b16 %v768, %v764
        %v861 = vpack.c.b16 %v769, %v765
        %v862 = vpack.c.b16 %v774, %v770
        %v863 = vpack.c.b16 %v775, %v771
        %v864 = vpack.c.b16 %v776, %v772
        %v865 = vpack.c.b16 %v777, %v773
        %v866 = vpack.c.b16 %v782, %v778
        %v867 = vpack.c.b16 %v783, %v779
        %v868 = vpack.c.b16 %v784, %v780
        %v869 = vpack.c.b16 %v785, %v781
        %v870 = vpack.c.b16 %v790, %v786
        %v871 = vpack.c.b16 %v791, %v787
        %v872 = vpack.c.b16 %v792, %v788
        %v873 = vpack.c.b16 %v793, %v789
        %v874 = vpack.c.b16 %v798, %v794
        %v875 = vpack.c.b16 %v799, %v795
        %v876 = vpack.c.b16 %v800, %v796
        %v877 = vpack.c.b16 %v801, %v797
        %v878 = vpack.c.b16 %v806, %v802
        %v879 = vpack.c.b16 %v807, %v803
        %v880 = vpack.c.b16 %v808, %v804
        %v881 = vpack.c.b16 %v809, %v805
        %v882 = vpack.c.b16 %v814, %v810
        %v883 = vpack.c.b16 %v815, %v811
        %v884 = vpack.c.b16 %v816, %v812
        %v885 = vpack.c.b16 %v817, %v813
        %v886 = vpack.c.b16 %v822, %v818
        %v887 = vpack.c.b16 %v823, %v819
        %v888 = vpack.c.b16 %v824, %v820
        %v889 = vpack.c.b16 %v825, %v821
        %vm950 = vcmask 998400
        %v952 = vsel %vm950, %v629, 0
        %v955 = vsel %vm950, %v631, 0
        %vm957 = vcmask 1044480
        %v959 = vsel %vm957, %v886, 0
        %v962 = vsel %vm957, %v887, 0
        %v965 = vsel %vm957, %v888, 0
        %v968 = vsel %vm957, %v889, 0
        %970 = vmatprep.subr.bf16.mxu0 %v827
        %971 = vmatpush1.bf16.msra.mxu0 %v826
        %972 = vmatprep.subr.bf16.mxu0 %v831
        %973 = vmatpush1.bf16.msra.mxu0 %v830
        %974 = vmatprep.subr.bf16.mxu0 %v835
        %975 = vmatpush1.bf16.msra.mxu0 %v834
        %976 = vmatprep.subr.bf16.mxu0 %v839
        %977 = vmatpush1.bf16.msra.mxu0 %v838
        %978 = vmatprep.subr.bf16.mxu0 %v843
        %979 = vmatpush1.bf16.msra.mxu0 %v842
        %980 = vmatprep.subr.bf16.mxu0 %v847
        %981 = vmatpush1.bf16.msra.mxu0 %v846
        %982 = vmatprep.subr.bf16.mxu0 %v851
        %983 = vmatpush1.bf16.msra.mxu0 %v850
        %984 = vmatprep.subr.bf16.mxu0 %v855
        %985 = vmatpush1.bf16.msra.mxu0 %v854
        %986 = vmatprep.subr.bf16.mxu0 %v859
        %987 = vmatpush1.bf16.msra.mxu0 %v858
        %988 = vmatprep.subr.bf16.mxu0 %v863
        %989 = vmatpush1.bf16.msra.mxu0 %v862
        %990 = vmatprep.subr.bf16.mxu0 %v867
        %991 = vmatpush1.bf16.msra.mxu0 %v866
        %992 = vmatprep.subr.bf16.mxu0 %v871
        %993 = vmatpush1.bf16.msra.mxu0 %v870
        %994 = vmatprep.subr.bf16.mxu0 %v875
        %995 = vmatpush1.bf16.msra.mxu0 %v874
        %996 = vmatprep.subr.bf16.mxu0 %v879
        %997 = vmatpush1.bf16.msra.mxu0 %v878
        %998 = vmatprep.subr.bf16.mxu0 %v883
        %999 = vmatpush1.bf16.msra.mxu0 %v882
        %1000 = vmatprep.subr.bf16.mxu0 %v962
        %1001 = vmatpush1.bf16.msra.mxu0 %v959
        %1002 = vmatprep.mubr.bf16.mxu0 %v952
        %1003 = vmatmul.mubr.bf16.gmra.mrb[0].mxu0 %v628
        %v1004 = vpop.f32.mrb[0].mxu0
        %v1005 = vadd.f32 %v607, %v1004
        %v1006 = vpop.f32.mrb[0].mxu0
        %v1007 = vadd.f32 %v607, %v1006
        %v1008 = vpop.f32.mrb[0].mxu0
        %v1009 = vadd.f32 %v612, %v1008
        %v1010 = vpop.f32.mrb[0].mxu0
        %v1011 = vadd.f32 %v612, %v1010
        %1012 = vmatprep.mubr.bf16.mxu0 %v955
        %1013 = vmatmul.mubr.bf16.gmra.mrb[0].mxu0 %v630
        %v1014 = vpop.f32.mrb[0].mxu0
        %v1015 = vadd.f32 %v617, %v1014
        %v1016 = vpop.f32.mrb[0].mxu0
        %v1017 = vadd.f32 %v617, %v1016
        %v1018 = vpop.f32.mrb[0].mxu0
        %v1019 = vpop.f32.mrb[0].mxu0
        %1020 = vdwg.mxu0
        %1021 = vmatprep.subr.bf16.mxu0 %v829
        %1022 = vmatpush1.bf16.msra.mxu0 %v828
        %1023 = vmatprep.subr.bf16.mxu0 %v833
        %1024 = vmatpush1.bf16.msra.mxu0 %v832
        %1025 = vmatprep.subr.bf16.mxu0 %v837
        %1026 = vmatpush1.bf16.msra.mxu0 %v836
        %1027 = vmatprep.subr.bf16.mxu0 %v841
        %1028 = vmatpush1.bf16.msra.mxu0 %v840
        %1029 = vmatprep.subr.bf16.mxu0 %v845
        %1030 = vmatpush1.bf16.msra.mxu0 %v844
        %1031 = vmatprep.subr.bf16.mxu0 %v849
        %1032 = vmatpush1.bf16.msra.mxu0 %v848
        %1033 = vmatprep.subr.bf16.mxu0 %v853
        %1034 = vmatpush1.bf16.msra.mxu0 %v852
        %1035 = vmatprep.subr.bf16.mxu0 %v857
        %1036 = vmatpush1.bf16.msra.mxu0 %v856
        %1037 = vmatprep.subr.bf16.mxu0 %v861
        %1038 = vmatpush1.bf16.msra.mxu0 %v860
        %1039 = vmatprep.subr.bf16.mxu0 %v865
        %1040 = vmatpush1.bf16.msra.mxu0 %v864
        %1041 = vmatprep.subr.bf16.mxu0 %v869
        %1042 = vmatpush1.bf16.msra.mxu0 %v868
        %1043 = vmatprep.subr.bf16.mxu0 %v873
        %1044 = vmatpush1.bf16.msra.mxu0 %v872
        %1045 = vmatprep.subr.bf16.mxu0 %v877
        %1046 = vmatpush1.bf16.msra.mxu0 %v876
        %1047 = vmatprep.subr.bf16.mxu0 %v881
        %1048 = vmatpush1.bf16.msra.mxu0 %v880
        %1049 = vmatprep.subr.bf16.mxu0 %v885
        %1050 = vmatpush1.bf16.msra.mxu0 %v884
        %1051 = vmatprep.subr.bf16.mxu0 %v968
        %1052 = vmatpush1.bf16.msra.mxu0 %v965
        %1053 = vmatprep.mubr.bf16.mxu0 %v952
        %1054 = vmatmul.mubr.bf16.gmra.mrb[0].mxu0 %v628
        %v1055 = vpop.f32.mrb[0].mxu0
        %v1056 = vadd.f32 %v607, %v1055
        %v1057 = vpop.f32.mrb[0].mxu0
        %v1058 = vadd.f32 %v607, %v1057
        %v1059 = vpop.f32.mrb[0].mxu0
        %v1060 = vadd.f32 %v612, %v1059
        %v1061 = vpop.f32.mrb[0].mxu0
        %v1062 = vadd.f32 %v612, %v1061
        %1063 = vmatprep.mubr.bf16.mxu0 %v955
        %1064 = vmatmul.mubr.bf16.gmra.mrb[0].mxu0 %v630
        %v1065 = vpop.f32.mrb[0].mxu0
        %v1066 = vadd.f32 %v617, %v1065
        %v1067 = vpop.f32.mrb[0].mxu0
        %v1068 = vadd.f32 %v617, %v1067
        %v1069 = vpop.f32.mrb[0].mxu0
        %v1070 = vpop.f32.mrb[0].mxu0
        %1071 = vdwg.mxu0
        %v1072 = vmax.f32 %v1005, 0.0
        %v1073 = vmax.f32 %v1007, 0.0
        %v1074 = vmax.f32 %v1056, 0.0
        %v1075 = vmax.f32 %v1058, 0.0
        %v1076 = vmax.f32 %v1009, 0.0
        %v1077 = vmax.f32 %v1011, 0.0
        %v1078 = vmax.f32 %v1060, 0.0
        %v1079 = vmax.f32 %v1062, 0.0
        %v1080 = vmax.f32 %v1015, 0.0
        %v1081 = vmax.f32 %v1017, 0.0
        %v1082 = vmax.f32 %v1066, 0.0
        %v1083 = vmax.f32 %v1068, 0.0
        %v1084 = vld [vmem:[%s4] sm:$0xff]
        %v1085 = vld [vmem:[%s4 + $0x8] sm:$0xff]
        %v1086 = vld [vmem:[%s4 + $0x10] sm:$0xff]
        %v1087 = vld [vmem:[%s4 + $0x18] sm:$0xff]
        %v1088 = vld [vmem:[%s4 + $0x20] sm:$0xff]
        %v1089 = vld [vmem:[%s4 + $0x28] sm:$0xff]
        %v1090 = vld [vmem:[%s4 + $0x30] sm:$0xff]
        %v1091 = vld [vmem:[%s4 + $0x38] sm:$0xff]
        %v1092 = vld [vmem:[%s4 + $0x40] sm:$0xf]
        %v1093 = vld [vmem:[%s4 + $0x48] sm:$0xf]
        %v1094 = vld [vmem:[%s4 + $0x50] sm:$0xf]
        %v1095 = vld [vmem:[%s4 + $0x58] sm:$0xf]
        %v1096 = vmul.f32 %v1072, %v1084
        %v1097 = vmul.f32 %v1073, %v1085
        %v1098 = vmul.f32 %v1074, %v1086
        %v1099 = vmul.f32 %v1075, %v1087
        %v1100 = vmul.f32 %v1076, %v1088
        %v1101 = vmul.f32 %v1077, %v1089
        %v1102 = vmul.f32 %v1078, %v1090
        %v1103 = vmul.f32 %v1079, %v1091
        %v1104 = vmul.f32 %v1080, %v1092
        %v1105 = vmul.f32 %v1081, %v1093
        %v1106 = vmul.f32 %v1082, %v1094
        %v1107 = vmul.f32 %v1083, %v1095
        %v1108 = vadd.f32 %v1096, %v1097
        %v1109 = vadd.f32 %v1108, %v1098
        %vm1110 = vcmask 130048
        %v1111 = vsel %vm1110, %v1099, 0.0
        %v1112 = vadd.f32 %v1109, %v1111
        %1113 = vadd.xlane.f32.xlu0 %v1112
        %v1114 = vpop.xlane.xlu0 %1113
        %v1115 = vadd.f32 %v1100, %v1101
        %v1116 = vadd.f32 %v1115, %v1102
        %v1117 = vsel %vm1110, %v1103, 0.0
        %v1118 = vadd.f32 %v1116, %v1117
        %1119 = vadd.xlane.f32.xlu0 %v1118
        %v1120 = vpop.xlane.xlu0 %1119
        %vm1121 = vcmask 1043456
        %v1122 = vsel %vm1121, %v1104, 0.0
        %v1123 = vsel %vm1121, %v1105, 0.0
        %v1124 = vadd.f32 %v1122, %v1123
        %v1125 = vsel %vm1121, %v1106, 0.0
        %v1126 = vadd.f32 %v1124, %v1125
        %vm1127 = vcmask 125952
        %v1128 = vsel %vm1127, %v1107, 0.0
        %v1129 = vadd.f32 %v1126, %v1128
        %1130 = vadd.xlane.f32.xlu0 %v1129
        %v1131 = vpop.xlane.xlu0 %1130
        %v1132 = vadd.f32 %v1114, %v1120
        %v1133 = vsel %vm1121, %v1131, 0.0
        %v1134 = vadd.f32 %v1132, %v1133
        %v1135 = vrot.slane %v1134, 4
        %v1136 = vadd.f32 %v1134, %v1135
        %v1137 = vrot.slane %v1136, 2
        %v1138 = vadd.f32 %v1136, %v1137
        %v1139 = vrot.slane %v1138, 1
        %v1140 = vadd.f32 %v1138, %v1139
        %v1141 = vld [vmem:[%s5] sm:$0x1]
        %v1142 = vadd.f32 %v1140, %v1141
        %s1143 = scalar_lea.vmem %s4, 96
        %v1144 = vld [vmem:[%s1143] sm:$0xff]
        %v1145 = vld [vmem:[%s1143 + $0x8] sm:$0xff]
        %v1146 = vld [vmem:[%s1143 + $0x10] sm:$0xff]
        %v1147 = vld [vmem:[%s1143 + $0x18] sm:$0xff]
        %v1148 = vld [vmem:[%s1143 + $0x20] sm:$0xff]
        %v1149 = vld [vmem:[%s1143 + $0x28] sm:$0xff]
        %v1150 = vld [vmem:[%s1143 + $0x30] sm:$0xff]
        %v1151 = vld [vmem:[%s1143 + $0x38] sm:$0xff]
        %v1152 = vld [vmem:[%s1143 + $0x40] sm:$0xf]
        %v1153 = vld [vmem:[%s1143 + $0x48] sm:$0xf]
        %v1154 = vld [vmem:[%s1143 + $0x50] sm:$0xf]
        %v1155 = vld [vmem:[%s1143 + $0x58] sm:$0xf]
        %v1156 = vmul.f32 %v1072, %v1144
        %v1157 = vmul.f32 %v1073, %v1145
        %v1158 = vmul.f32 %v1074, %v1146
        %v1159 = vmul.f32 %v1075, %v1147
        %v1160 = vmul.f32 %v1076, %v1148
        %v1161 = vmul.f32 %v1077, %v1149
        %v1162 = vmul.f32 %v1078, %v1150
        %v1163 = vmul.f32 %v1079, %v1151
        %v1164 = vmul.f32 %v1080, %v1152
        %v1165 = vmul.f32 %v1081, %v1153
        %v1166 = vmul.f32 %v1082, %v1154
        %v1167 = vmul.f32 %v1083, %v1155
        %v1168 = vadd.f32 %v1156, %v1157
        %v1169 = vadd.f32 %v1168, %v1158
        %v1170 = vsel %vm1110, %v1159, 0.0
        %v1171 = vadd.f32 %v1169, %v1170
        %1172 = vadd.xlane.f32.xlu0 %v1171
        %v1173 = vpop.xlane.xlu0 %1172
        %v1174 = vadd.f32 %v1160, %v1161
        %v1175 = vadd.f32 %v1174, %v1162
        %v1176 = vsel %vm1110, %v1163, 0.0
        %v1177 = vadd.f32 %v1175, %v1176
        %1178 = vadd.xlane.f32.xlu0 %v1177
        %v1179 = vpop.xlane.xlu0 %1178
        %v1180 = vsel %vm1121, %v1164, 0.0
        %v1181 = vsel %vm1121, %v1165, 0.0
        %v1182 = vadd.f32 %v1180, %v1181
        %v1183 = vsel %vm1121, %v1166, 0.0
        %v1184 = vadd.f32 %v1182, %v1183
        %v1185 = vsel %vm1127, %v1167, 0.0
        %v1186 = vadd.f32 %v1184, %v1185
        %1187 = vadd.xlane.f32.xlu0 %v1186
        %v1188 = vpop.xlane.xlu0 %1187
        %v1189 = vadd.f32 %v1173, %v1179
        %v1190 = vsel %vm1121, %v1188, 0.0
        %v1191 = vadd.f32 %v1189, %v1190
        %v1192 = vrot.slane %v1191, 4
        %v1193 = vadd.f32 %v1191, %v1192
        %v1194 = vrot.slane %v1193, 2
        %v1195 = vadd.f32 %v1193, %v1194
        %v1196 = vrot.slane %v1195, 1
        %v1197 = vadd.f32 %v1195, %v1196
        %s1198 = scalar_lea.vmem %s5, 1
        %v1199 = vld [vmem:[%s1198] sm:$0x1]
        %v1200 = vadd.f32 %v1197, %v1199
        %s1201 = scalar_lea.vmem %s4, 192
        %v1202 = vld [vmem:[%s1201] sm:$0xff]
        %v1203 = vld [vmem:[%s1201 + $0x8] sm:$0xff]
        %v1204 = vld [vmem:[%s1201 + $0x10] sm:$0xff]
        %v1205 = vld [vmem:[%s1201 + $0x18] sm:$0xff]
        %v1206 = vld [vmem:[%s1201 + $0x20] sm:$0xff]
        %v1207 = vld [vmem:[%s1201 + $0x28] sm:$0xff]
        %v1208 = vld [vmem:[%s1201 + $0x30] sm:$0xff]
        %v1209 = vld [vmem:[%s1201 + $0x38] sm:$0xff]
        %v1210 = vld [vmem:[%s1201 + $0x40] sm:$0xf]
        %v1211 = vld [vmem:[%s1201 + $0x48] sm:$0xf]
        %v1212 = vld [vmem:[%s1201 + $0x50] sm:$0xf]
        %v1213 = vld [vmem:[%s1201 + $0x58] sm:$0xf]
        %v1214 = vmul.f32 %v1072, %v1202
        %v1215 = vmul.f32 %v1073, %v1203
        %v1216 = vmul.f32 %v1074, %v1204
        %v1217 = vmul.f32 %v1075, %v1205
        %v1218 = vmul.f32 %v1076, %v1206
        %v1219 = vmul.f32 %v1077, %v1207
        %v1220 = vmul.f32 %v1078, %v1208
        %v1221 = vmul.f32 %v1079, %v1209
        %v1222 = vmul.f32 %v1080, %v1210
        %v1223 = vmul.f32 %v1081, %v1211
        %v1224 = vmul.f32 %v1082, %v1212
        %v1225 = vmul.f32 %v1083, %v1213
        %v1226 = vadd.f32 %v1214, %v1215
        %v1227 = vadd.f32 %v1226, %v1216
        %v1228 = vsel %vm1110, %v1217, 0.0
        %v1229 = vadd.f32 %v1227, %v1228
        %1230 = vadd.xlane.f32.xlu0 %v1229
        %v1231 = vpop.xlane.xlu0 %1230
        %v1232 = vadd.f32 %v1218, %v1219
        %v1233 = vadd.f32 %v1232, %v1220
        %v1234 = vsel %vm1110, %v1221, 0.0
        %v1235 = vadd.f32 %v1233, %v1234
        %1236 = vadd.xlane.f32.xlu0 %v1235
        %v1237 = vpop.xlane.xlu0 %1236
        %v1238 = vsel %vm1121, %v1222, 0.0
        %v1239 = vsel %vm1121, %v1223, 0.0
        %v1240 = vadd.f32 %v1238, %v1239
        %v1241 = vsel %vm1121, %v1224, 0.0
        %v1242 = vadd.f32 %v1240, %v1241
        %v1243 = vsel %vm1127, %v1225, 0.0
        %v1244 = vadd.f32 %v1242, %v1243
        %1245 = vadd.xlane.f32.xlu0 %v1244
        %v1246 = vpop.xlane.xlu0 %1245
        %v1247 = vadd.f32 %v1231, %v1237
        %v1248 = vsel %vm1121, %v1246, 0.0
        %v1249 = vadd.f32 %v1247, %v1248
        %v1250 = vrot.slane %v1249, 4
        %v1251 = vadd.f32 %v1249, %v1250
        %v1252 = vrot.slane %v1251, 2
        %v1253 = vadd.f32 %v1251, %v1252
        %v1254 = vrot.slane %v1253, 1
        %v1255 = vadd.f32 %v1253, %v1254
        %s1256 = scalar_lea.vmem %s5, 2
        %v1257 = vld [vmem:[%s1256] sm:$0x1]
        %v1258 = vadd.f32 %v1255, %v1257
        %s1259 = scalar_lea.vmem %s4, 288
        %v1260 = vld [vmem:[%s1259] sm:$0xff]
        %v1261 = vld [vmem:[%s1259 + $0x8] sm:$0xff]
        %v1262 = vld [vmem:[%s1259 + $0x10] sm:$0xff]
        %v1263 = vld [vmem:[%s1259 + $0x18] sm:$0xff]
        %v1264 = vld [vmem:[%s1259 + $0x20] sm:$0xff]
        %v1265 = vld [vmem:[%s1259 + $0x28] sm:$0xff]
        %v1266 = vld [vmem:[%s1259 + $0x30] sm:$0xff]
        %v1267 = vld [vmem:[%s1259 + $0x38] sm:$0xff]
        %v1268 = vld [vmem:[%s1259 + $0x40] sm:$0xf]
        %v1269 = vld [vmem:[%s1259 + $0x48] sm:$0xf]
        %v1270 = vld [vmem:[%s1259 + $0x50] sm:$0xf]
        %v1271 = vld [vmem:[%s1259 + $0x58] sm:$0xf]
        %v1272 = vmul.f32 %v1072, %v1260
        %v1273 = vmul.f32 %v1073, %v1261
        %v1274 = vmul.f32 %v1074, %v1262
        %v1275 = vmul.f32 %v1075, %v1263
        %v1276 = vmul.f32 %v1076, %v1264
        %v1277 = vmul.f32 %v1077, %v1265
        %v1278 = vmul.f32 %v1078, %v1266
        %v1279 = vmul.f32 %v1079, %v1267
        %v1280 = vmul.f32 %v1080, %v1268
        %v1281 = vmul.f32 %v1081, %v1269
        %v1282 = vmul.f32 %v1082, %v1270
        %v1283 = vmul.f32 %v1083, %v1271
        %v1284 = vadd.f32 %v1272, %v1273
        %v1285 = vadd.f32 %v1284, %v1274
        %v1286 = vsel %vm1110, %v1275, 0.0
        %v1287 = vadd.f32 %v1285, %v1286
        %1288 = vadd.xlane.f32.xlu0 %v1287
        %v1289 = vpop.xlane.xlu0 %1288
        %v1290 = vadd.f32 %v1276, %v1277
        %v1291 = vadd.f32 %v1290, %v1278
        %v1292 = vsel %vm1110, %v1279, 0.0
        %v1293 = vadd.f32 %v1291, %v1292
        %1294 = vadd.xlane.f32.xlu0 %v1293
        %v1295 = vpop.xlane.xlu0 %1294
        %v1296 = vsel %vm1121, %v1280, 0.0
        %v1297 = vsel %vm1121, %v1281, 0.0
        %v1298 = vadd.f32 %v1296, %v1297
        %v1299 = vsel %vm1121, %v1282, 0.0
        %v1300 = vadd.f32 %v1298, %v1299
        %v1301 = vsel %vm1127, %v1283, 0.0
        %v1302 = vadd.f32 %v1300, %v1301
        %1303 = vadd.xlane.f32.xlu0 %v1302
        %v1304 = vpop.xlane.xlu0 %1303
        %v1305 = vadd.f32 %v1289, %v1295
        %v1306 = vsel %vm1121, %v1304, 0.0
        %v1307 = vadd.f32 %v1305, %v1306
        %v1308 = vrot.slane %v1307, 4
        %v1309 = vadd.f32 %v1307, %v1308
        %v1310 = vrot.slane %v1309, 2
        %v1311 = vadd.f32 %v1309, %v1310
        %v1312 = vrot.slane %v1311, 1
        %v1313 = vadd.f32 %v1311, %v1312
        %s1314 = scalar_lea.vmem %s5, 3
        %v1315 = vld [vmem:[%s1314] sm:$0x1]
        %v1316 = vadd.f32 %v1313, %v1315
        %v1317 = vld [vmem:[%s528] sm:$0x1]
        %v1318 = vmul.f32 %v1258, 0.5
        %v1319 = vmul.f32 %v1318, 1.442695
        %v1320 = vpow.pop %v1319
        %v1321 = vmul.f32 %v1317, %v1320
        %v1322 = vadd.f32 %v1142, %v1321
        %v1323 = vmul.f32 %v1316, 0.5
        %v1324 = vmul.f32 %v1323, 1.442695
        %v1325 = vpow.pop %v1324
        %1327 = vrot.lane.b32.xlu0 %v1325, 1
        %v1328 = vpop.permute.xlu0 %1327
        %v1330 = vmul.f32 %v1317, %v1328
        %1332 = vrot.lane.b32.xlu0 %v1330, 127
        %v1333 = vpop.permute.xlu0 %1332
        %v1335 = vadd.f32 %v1200, %v1333
        %v1337 = vlaneseq
        %v1338 = vshrl.u32 %v1337, 7
        %v1339 = vsub.s32 0, %v1338
        %v1340 = vrot.slane %v1200, %v1339
        %1341 = vrot.lane.b32.xlu0 %v1340, 1
        %v1342 = vpop.permute.xlu0 %1341
        %vm1344 = vcmask 7168
        %v1345 = vsel %vm1344, %v1142, %v1342
        %vm1346 = vcmask 8192
        %1347 = vst.msk [vmem:[%s508] sm:$0x1] %vm1346, %v1345
        %v1349 = vlaneseq
        %v1350 = vshrl.u32 %v1349, 7
        %v1351 = vsub.s32 0, %v1350
        %v1352 = vrot.slane %v1316, %v1351
        %1353 = vrot.lane.b32.xlu0 %v1352, 1
        %v1354 = vpop.permute.xlu0 %1353
        %v1356 = vsel %vm1344, %v1258, %v1354
        %1357 = vst.msk [vmem:[%s514] sm:$0x1] %vm1346, %v1356
        %v1359 = vlaneseq
        %v1360 = vshrl.u32 %v1359, 7
        %v1361 = vsub.s32 0, %v1360
        %v1362 = vrot.slane %v1335, %v1361
        %1363 = vrot.lane.b32.xlu0 %v1362, 1
        %v1364 = vpop.permute.xlu0 %1363
        %v1366 = vsel %vm1344, %v1322, %v1364
        %1367 = vst.msk [vmem:[%s520] sm:$0x1] %vm1346, %v1366
        %v1368 = vld [vmem:[%s6] sm:$0xff]
        %v1369 = vld [vmem:[%s6 + $0x8] sm:$0xff]
        %v1370 = vld [vmem:[%s6 + $0x10] sm:$0xff]
        %v1371 = vld [vmem:[%s6 + $0x18] sm:$0xff]
        %v1372 = vld [vmem:[%s6 + $0x20] sm:$0xf]
        %v1373 = vld [vmem:[%s6 + $0x28] sm:$0xf]
        %v1375 = vlaneseq
        %v1376 = vshrl.u32 %v1375, 7
        %v1377 = vsub.s32 0, %v1376
        %v1378 = vrot.slane %v1322, %v1377
        %1379 = vset.pattern.permute.xlu0 0
        %1380 = vperm.xlu0 %1379, %v1378
        %v1381 = vpop.permute.xlu0 %1380
        %v1383 = vmul.f32 %v1381, %v1368
        %v1384 = vmul.f32 %v1381, %v1369
        %v1385 = vmul.f32 %v1381, %v1370
        %v1386 = vmul.f32 %v1381, %v1371
        %v1387 = vmul.f32 %v1381, %v1372
        %v1388 = vmul.f32 %v1381, %v1373
        %s1389 = scalar_lea.vmem %s6, 48
        %v1390 = vld [vmem:[%s1389] sm:$0xff]
        %v1391 = vld [vmem:[%s1389 + $0x8] sm:$0xff]
        %v1392 = vld [vmem:[%s1389 + $0x10] sm:$0xff]
        %v1393 = vld [vmem:[%s1389 + $0x18] sm:$0xff]
        %v1394 = vld [vmem:[%s1389 + $0x20] sm:$0xf]
        %v1395 = vld [vmem:[%s1389 + $0x28] sm:$0xf]
        %1396 = vset.pattern.permute.xlu0 0
        %1397 = vperm.xlu0 %1396, %v1362
        %v1398 = vpop.permute.xlu0 %1397
        %v1400 = vmul.f32 %v1398, %v1390
        %v1401 = vmul.f32 %v1398, %v1391
        %v1402 = vmul.f32 %v1398, %v1392
        %v1403 = vmul.f32 %v1398, %v1393
        %v1404 = vmul.f32 %v1398, %v1394
        %v1405 = vmul.f32 %v1398, %v1395
        %v1406 = vadd.f32 %v1383, %v1400
        %v1407 = vadd.f32 %v1384, %v1401
        %v1408 = vadd.f32 %v1385, %v1402
        %v1409 = vadd.f32 %v1386, %v1403
        %v1410 = vadd.f32 %v1387, %v1404
        %v1411 = vadd.f32 %v1388, %v1405
        %v1412 = vld [vmem:[%s7] sm:$0xff]
        %v1413 = vld [vmem:[%s7 + $0x8] sm:$0xff]
        %v1414 = vld [vmem:[%s7 + $0x10] sm:$0xff]
        %v1415 = vld [vmem:[%s7 + $0x18] sm:$0xff]
        %v1416 = vld [vmem:[%s7 + $0x20] sm:$0xf]
        %v1417 = vld [vmem:[%s7 + $0x28] sm:$0xf]
        %v1418 = vadd.f32 %v1406, %v1412
        %v1419 = vadd.f32 %v1407, %v1413
        %v1420 = vadd.f32 %v1408, %v1414
        %v1421 = vadd.f32 %v1409, %v1415
        %v1422 = vadd.f32 %v1410, %v1416
        %v1423 = vadd.f32 %v1411, %v1417
        %v1424 = vmax.f32 %v1418, 0.0
        %v1425 = vmax.f32 %v1419, 0.0
        %v1426 = vmax.f32 %v1420, 0.0
        %v1427 = vmax.f32 %v1421, 0.0
        %v1428 = vmax.f32 %v1422, 0.0
        %v1429 = vmax.f32 %v1423, 0.0
        %1430 = vst [vmem:[#allocation2] sm:$0xff] 0.0
        %vm1431 = vcmask 588800
        %1432 = vst.msk [vmem:[#allocation2 + $0x8] sm:$0xff] %vm1431, 0.0
        %1433 = vst [vmem:[#allocation2 + $0x10] sm:$0xff] 0.0
        %1434 = vst.msk [vmem:[#allocation2 + $0x18] sm:$0xff] %vm1431, 0.0
        %1435 = vst [vmem:[#allocation2 + $0x20] sm:$0xff] 0.0
        %1436 = vst.msk [vmem:[#allocation2 + $0x28] sm:$0xff] %vm1431, 0.0
        %1437 = vst [vmem:[#allocation2 + $0x30] sm:$0xf] 0.0
        %vm1438 = vcmask 584704
        %1439 = vst.msk [vmem:[#allocation2 + $0x38] sm:$0xf] %vm1438, 0.0
        %v1446 = vrot.slane %v1424, 4
        %v1447 = vrot.slane %v1425, 4
        %v1448 = vrot.slane %v1426, 4
        %v1449 = vsel %vm1121, %v1446, %v1448
        %v1450 = vrot.slane %v1427, 4
        %v1451 = vsel %vm1121, %v1447, %v1450
        %v1452 = vrot.slane %v1428, 4
        %v1453 = vsel %vm1121, %v1448, %v1452
        %v1454 = vrot.slane %v1429, 4
        %v1455 = vsel %vm1121, %v1450, %v1454
        %1462 = vst [vmem:[#allocation2] sm:$0xf0] %v1446
        %vm1463 = vcmask 588804
        %1464 = vst.msk [vmem:[#allocation2 + $0x8] sm:$0xf0] %vm1463, %v1447
        %1465 = vst [vmem:[#allocation2 + $0x10] sm:$0xff] %v1449
        %1466 = vst.msk [vmem:[#allocation2 + $0x18] sm:$0xff] %vm1431, %v1451
        %1467 = vst [vmem:[#allocation2 + $0x20] sm:$0xff] %v1453
        %1468 = vst.msk [vmem:[#allocation2 + $0x28] sm:$0xff] %vm1431, %v1455
        %v1469 = vld [vmem:[#allocation2] sm:$0xff]
        %v1470 = vld [vmem:[#allocation2 + $0x8] sm:$0xff]
        %v1471 = vld [vmem:[#allocation2 + $0x10] sm:$0xff]
        %v1472 = vld [vmem:[#allocation2 + $0x18] sm:$0xff]
        %v1473 = vld [vmem:[#allocation2 + $0x20] sm:$0xff]
        %v1474 = vld [vmem:[#allocation2 + $0x28] sm:$0xff]
        %v1475 = vld [vmem:[%s8] sm:$0xff]
        %v1476 = vld [vmem:[%s8 + $0x8] sm:$0xff]
        %v1477 = vld [vmem:[%s8 + $0x10] sm:$0xff]
        %v1478 = vld [vmem:[%s8 + $0x18] sm:$0xff]
        %v1479 = vld [vmem:[%s8 + $0x20] sm:$0xff]
        %v1480 = vld [vmem:[%s8 + $0x28] sm:$0xff]
        %v1481 = vld [vmem:[%s8 + $0x30] sm:$0xff]
        %v1482 = vld [vmem:[%s8 + $0x38] sm:$0xff]
        %v1483 = vld [vmem:[%s8 + $0x40] sm:$0xff]
        %v1484 = vld [vmem:[%s8 + $0x48] sm:$0xff]
        %v1485 = vld [vmem:[%s8 + $0x50] sm:$0xff]
        %v1486 = vld [vmem:[%s8 + $0x58] sm:$0xff]
        %v1487 = vld [vmem:[%s8 + $0x60] sm:$0xff]
        %v1488 = vld [vmem:[%s8 + $0x68] sm:$0xff]
        %v1489 = vld [vmem:[%s8 + $0x70] sm:$0xff]
        %v1490 = vld [vmem:[%s8 + $0x78] sm:$0xff]
        %v1491 = vld [vmem:[%s8 + $0x80] sm:$0xff]
        %v1492 = vld [vmem:[%s8 + $0x88] sm:$0xff]
        %v1493 = vld [vmem:[%s8 + $0x90] sm:$0xff]
        %v1494 = vld [vmem:[%s8 + $0x98] sm:$0xff]
        %v1495 = vld [vmem:[%s8 + $0xa0] sm:$0xff]
        %v1496 = vld [vmem:[%s8 + $0xa8] sm:$0xff]
        %v1497 = vld [vmem:[%s8 + $0xb0] sm:$0xff]
        %v1498 = vld [vmem:[%s8 + $0xb8] sm:$0xff]
        %v1499 = vld [vmem:[%s8 + $0xc0] sm:$0xff]
        %v1500 = vld [vmem:[#allocation2] sm:$0xfe]
        %v1501 = vld [vmem:[#allocation2 + $0x8] sm:$0xfe]
        %v1502 = vld [vmem:[#allocation2 + $0x30] sm:$0x1]
        %v1503 = vld [vmem:[#allocation2 + $0x38] sm:$0x1]
        %s1504 = scalar_lea.vmem %s8, 200
        %v1505 = vld [vmem:[%s1504] sm:$0xff]
        %v1506 = vld [vmem:[%s1504 + $0x8] sm:$0xff]
        %v1507 = vld [vmem:[%s1504 + $0x10] sm:$0xff]
        %v1508 = vld [vmem:[%s1504 + $0x18] sm:$0xff]
        %v1509 = vld [vmem:[%s1504 + $0x20] sm:$0xff]
        %v1510 = vld [vmem:[%s1504 + $0x28] sm:$0xff]
        %v1511 = vld [vmem:[%s1504 + $0x30] sm:$0xff]
        %v1512 = vld [vmem:[%s1504 + $0x38] sm:$0xff]
        %v1513 = vld [vmem:[%s1504 + $0x40] sm:$0xff]
        %v1514 = vld [vmem:[%s1504 + $0x48] sm:$0xff]
        %v1515 = vld [vmem:[%s1504 + $0x50] sm:$0xff]
        %v1516 = vld [vmem:[%s1504 + $0x58] sm:$0xff]
        %v1517 = vld [vmem:[%s1504 + $0x60] sm:$0xff]
        %v1518 = vld [vmem:[%s1504 + $0x68] sm:$0xff]
        %v1519 = vld [vmem:[%s1504 + $0x70] sm:$0xff]
        %v1520 = vld [vmem:[%s1504 + $0x78] sm:$0xff]
        %v1521 = vld [vmem:[%s1504 + $0x80] sm:$0xff]
        %v1522 = vld [vmem:[%s1504 + $0x88] sm:$0xff]
        %v1523 = vld [vmem:[%s1504 + $0x90] sm:$0xff]
        %v1524 = vld [vmem:[%s1504 + $0x98] sm:$0xff]
        %v1525 = vld [vmem:[%s1504 + $0xa0] sm:$0xff]
        %v1526 = vld [vmem:[%s1504 + $0xa8] sm:$0xff]
        %v1527 = vld [vmem:[%s1504 + $0xb0] sm:$0xff]
        %v1528 = vld [vmem:[%s1504 + $0xb8] sm:$0xff]
        %v1529 = vld [vmem:[%s1504 + $0xc0] sm:$0xff]
        %vm1538 = vcmask 1046528
        %v1539 = vrot.slane %v1500, 1
        %v1540 = vrot.slane %v1471, 1
        %v1541 = vsel %vm1538, %v1539, %v1540
        %v1542 = vrot.slane %v1501, 1
        %v1543 = vrot.slane %v1472, 1
        %v1544 = vsel %vm1538, %v1542, %v1543
        %v1545 = vrot.slane %v1473, 1
        %v1546 = vsel %vm1538, %v1540, %v1545
        %v1547 = vrot.slane %v1474, 1
        %v1548 = vsel %vm1538, %v1543, %v1547
        %v1549 = vrot.slane %v1502, 1
        %v1550 = vsel %vm1538, %v1545, %v1549
        %v1551 = vrot.slane %v1503, 1
        %v1552 = vsel %vm1538, %v1547, %v1551
        %v1556 = vsel %vm1431, %v1544, 0
        %v1558 = vsel %vm1431, %v1548, 0
        %v1560 = vsel %vm1431, %v1552, 0
        %1562 = vmatprep.subr.mxu0 0.0
        %1563 = vmatpush1.msra.mxu0 %v1505
        %1564 = vmatprep.subr.mxu0 0.0
        %1565 = vmatpush1.msra.mxu0 %v1506
        %1566 = vmatprep.subr.mxu0 0.0
        %1567 = vmatpush1.msra.mxu0 %v1507
        %1568 = vmatprep.subr.mxu0 0.0
        %1569 = vmatpush1.msra.mxu0 %v1508
        %1570 = vmatprep.subr.mxu0 0.0
        %1571 = vmatpush1.msra.mxu0 %v1509
        %1572 = vmatprep.subr.mxu0 0.0
        %1573 = vmatpush1.msra.mxu0 %v1510
        %1574 = vmatprep.subr.mxu0 0.0
        %1575 = vmatpush1.msra.mxu0 %v1511
        %1576 = vmatprep.subr.mxu0 0.0
        %1577 = vmatpush1.msra.mxu0 %v1512
        %1578 = vmatprep.subr.mxu0 0.0
        %1579 = vmatpush1.msra.mxu0 %v1513
        %1580 = vmatprep.subr.mxu0 0.0
        %1581 = vmatpush1.msra.mxu0 %v1514
        %1582 = vmatprep.subr.mxu0 0.0
        %1583 = vmatpush1.msra.mxu0 %v1515
        %1584 = vmatprep.subr.mxu0 0.0
        %1585 = vmatpush1.msra.mxu0 %v1516
        %1586 = vmatprep.subr.mxu0 0.0
        %1587 = vmatpush1.msra.mxu0 %v1517
        %1588 = vmatprep.subr.mxu0 0.0
        %1589 = vmatpush1.msra.mxu0 %v1518
        %1590 = vmatprep.subr.mxu0 0.0
        %1591 = vmatpush1.msra.mxu0 %v1519
        %1592 = vmatprep.subr.mxu0 0.0
        %1593 = vmatpush1.msra.mxu0 %v1520
        %1594 = vmatprep.subr.mxu0 0.0
        %1595 = vmatpush1.msra.mxu0 %v1521
        %1596 = vmatprep.subr.mxu0 0.0
        %1597 = vmatpush1.msra.mxu0 %v1522
        %1598 = vmatprep.subr.mxu0 0.0
        %1599 = vmatpush1.msra.mxu0 %v1523
        %1600 = vmatprep.subr.mxu0 0.0
        %1601 = vmatpush1.msra.mxu0 %v1524
        %1602 = vmatprep.subr.mxu0 0.0
        %1603 = vmatpush1.msra.mxu0 %v1525
        %1604 = vmatprep.subr.mxu0 0.0
        %1605 = vmatpush1.msra.mxu0 %v1526
        %1606 = vmatprep.subr.mxu0 0.0
        %1607 = vmatpush1.msra.mxu0 %v1527
        %1608 = vmatprep.subr.mxu0 0.0
        %1609 = vmatpush1.msra.mxu0 %v1528
        %1610 = vmatprep.subr.mxu0 0.0
        %1611 = vmatpush1.msra.mxu0 %v1529
        %1612 = vmatprep.subr.mxu0 0.0
        %1613 = vmatpush1.msra.mxu0 0.0
        %1614 = vmatprep.subr.mxu0 0.0
        %1615 = vmatpush1.msra.mxu0 0.0
        %1616 = vmatprep.subr.mxu0 0.0
        %1617 = vmatpush1.msra.mxu0 0.0
        %1618 = vmatprep.subr.mxu0 0.0
        %1619 = vmatpush1.msra.mxu0 0.0
        %1620 = vmatprep.subr.mxu0 0.0
        %1621 = vmatpush1.msra.mxu0 0.0
        %1622 = vmatprep.subr.mxu0 0.0
        %1623 = vmatpush1.msra.mxu0 0.0
        %1624 = vmatprep.subr.mxu0 0.0
        %1625 = vmatpush1.msra.mxu0 0.0
        %1626 = vmatprep.mubr.f32.mxu0 %v1556
        %1627 = vmatmul.mubr.f32.gmra.mrb[0].mxu0 %v1541
        %v1628 = vpop.f32.mrb[0].mxu0
        %v1629 = vadd.f32 0.0, %v1628
        %v1630 = vpop.f32.mrb[0].mxu0
        %1631 = vmatprep.mubr.f32.mxu0 %v1558
        %1632 = vmatmul.mubr.f32.gmra.mrb[0].mxu0 %v1546
        %v1633 = vpop.f32.mrb[0].mxu0
        %v1634 = vadd.f32 0.0, %v1633
        %v1635 = vpop.f32.mrb[0].mxu0
        %1636 = vmatprep.mubr.f32.mxu0 %v1560
        %1637 = vmatmul.mubr.f32.gmra.mrb[0].mxu0 %v1550
        %v1638 = vpop.f32.mrb[0].mxu0
        %v1639 = vadd.f32 0.0, %v1638
        %v1640 = vpop.f32.mrb[0].mxu0
        %1641 = vdwg.mxu0
        %v1643 = vsel %vm1431, %v1470, 0
        %v1645 = vsel %vm1431, %v1472, 0
        %v1647 = vsel %vm1431, %v1474, 0
        %1649 = vmatprep.subr.mxu0 0.0
        %1650 = vmatpush1.msra.mxu0 %v1475
        %1651 = vmatprep.subr.mxu0 0.0
        %1652 = vmatpush1.msra.mxu0 %v1476
        %1653 = vmatprep.subr.mxu0 0.0
        %1654 = vmatpush1.msra.mxu0 %v1477
        %1655 = vmatprep.subr.mxu0 0.0
        %1656 = vmatpush1.msra.mxu0 %v1478
        %1657 = vmatprep.subr.mxu0 0.0
        %1658 = vmatpush1.msra.mxu0 %v1479
        %1659 = vmatprep.subr.mxu0 0.0
        %1660 = vmatpush1.msra.mxu0 %v1480
        %1661 = vmatprep.subr.mxu0 0.0
        %1662 = vmatpush1.msra.mxu0 %v1481
        %1663 = vmatprep.subr.mxu0 0.0
        %1664 = vmatpush1.msra.mxu0 %v1482
        %1665 = vmatprep.subr.mxu0 0.0
        %1666 = vmatpush1.msra.mxu0 %v1483
        %1667 = vmatprep.subr.mxu0 0.0
        %1668 = vmatpush1.msra.mxu0 %v1484
        %1669 = vmatprep.subr.mxu0 0.0
        %1670 = vmatpush1.msra.mxu0 %v1485
        %1671 = vmatprep.subr.mxu0 0.0
        %1672 = vmatpush1.msra.mxu0 %v1486
        %1673 = vmatprep.subr.mxu0 0.0
        %1674 = vmatpush1.msra.mxu0 %v1487
        %1675 = vmatprep.subr.mxu0 0.0
        %1676 = vmatpush1.msra.mxu0 %v1488
        %1677 = vmatprep.subr.mxu0 0.0
        %1678 = vmatpush1.msra.mxu0 %v1489
        %1679 = vmatprep.subr.mxu0 0.0
        %1680 = vmatpush1.msra.mxu0 %v1490
        %1681 = vmatprep.subr.mxu0 0.0
        %1682 = vmatpush1.msra.mxu0 %v1491
        %1683 = vmatprep.subr.mxu0 0.0
        %1684 = vmatpush1.msra.mxu0 %v1492
        %1685 = vmatprep.subr.mxu0 0.0
        %1686 = vmatpush1.msra.mxu0 %v1493
        %1687 = vmatprep.subr.mxu0 0.0
        %1688 = vmatpush1.msra.mxu0 %v1494
        %1689 = vmatprep.subr.mxu0 0.0
        %1690 = vmatpush1.msra.mxu0 %v1495
        %1691 = vmatprep.subr.mxu0 0.0
        %1692 = vmatpush1.msra.mxu0 %v1496
        %1693 = vmatprep.subr.mxu0 0.0
        %1694 = vmatpush1.msra.mxu0 %v1497
        %1695 = vmatprep.subr.mxu0 0.0
        %1696 = vmatpush1.msra.mxu0 %v1498
        %1697 = vmatprep.subr.mxu0 0.0
        %1698 = vmatpush1.msra.mxu0 %v1499
        %1699 = vmatprep.subr.mxu0 0.0
        %1700 = vmatpush1.msra.mxu0 0.0
        %1701 = vmatprep.subr.mxu0 0.0
        %1702 = vmatpush1.msra.mxu0 0.0
        %1703 = vmatprep.subr.mxu0 0.0
        %1704 = vmatpush1.msra.mxu0 0.0
        %1705 = vmatprep.subr.mxu0 0.0
        %1706 = vmatpush1.msra.mxu0 0.0
        %1707 = vmatprep.subr.mxu0 0.0
        %1708 = vmatpush1.msra.mxu0 0.0
        %1709 = vmatprep.subr.mxu0 0.0
        %1710 = vmatpush1.msra.mxu0 0.0
        %1711 = vmatprep.subr.mxu0 0.0
        %1712 = vmatpush1.msra.mxu0 0.0
        %1713 = vmatprep.mubr.f32.mxu0 %v1643
        %1714 = vmatmul.mubr.f32.gmra.mrb[0].mxu0 %v1469
        %v1715 = vpop.f32.mrb[0].mxu0
        %v1716 = vadd.f32 %v1629, %v1715
        %v1717 = vpop.f32.mrb[0].mxu0
        %1718 = vmatprep.mubr.f32.mxu0 %v1645
        %1719 = vmatmul.mubr.f32.gmra.mrb[0].mxu0 %v1471
        %v1720 = vpop.f32.mrb[0].mxu0
        %v1721 = vadd.f32 %v1634, %v1720
        %v1722 = vpop.f32.mrb[0].mxu0
        %1723 = vmatprep.mubr.f32.mxu0 %v1647
        %1724 = vmatmul.mubr.f32.gmra.mrb[0].mxu0 %v1473
        %v1725 = vpop.f32.mrb[0].mxu0
        %v1726 = vadd.f32 %v1639, %v1725
        %v1727 = vpop.f32.mrb[0].mxu0
        %1728 = vdwg.mxu0
        %v1729 = vld [vmem:[#allocation2] sm:$0xfc]
        %v1730 = vld [vmem:[#allocation2 + $0x8] sm:$0xfc]
        %v1731 = vld [vmem:[#allocation2 + $0x30] sm:$0x3]
        %v1732 = vld [vmem:[#allocation2 + $0x38] sm:$0x3]
        %s1733 = scalar_lea.vmem %s8, 400
        %v1734 = vld [vmem:[%s1733] sm:$0xff]
        %v1735 = vld [vmem:[%s1733 + $0x8] sm:$0xff]
        %v1736 = vld [vmem:[%s1733 + $0x10] sm:$0xff]
        %v1737 = vld [vmem:[%s1733 + $0x18] sm:$0xff]
        %v1738 = vld [vmem:[%s1733 + $0x20] sm:$0xff]
        %v1739 = vld [vmem:[%s1733 + $0x28] sm:$0xff]
        %v1740 = vld [vmem:[%s1733 + $0x30] sm:$0xff]
        %v1741 = vld [vmem:[%s1733 + $0x38] sm:$0xff]
        %v1742 = vld [vmem:[%s1733 + $0x40] sm:$0xff]
        %v1743 = vld [vmem:[%s1733 + $0x48] sm:$0xff]
        %v1744 = vld [vmem:[%s1733 + $0x50] sm:$0xff]
        %v1745 = vld [vmem:[%s1733 + $0x58] sm:$0xff]
        %v1746 = vld [vmem:[%s1733 + $0x60] sm:$0xff]
        %v1747 = vld [vmem:[%s1733 + $0x68] sm:$0xff]
        %v1748 = vld [vmem:[%s1733 + $0x70] sm:$0xff]
        %v1749 = vld [vmem:[%s1733 + $0x78] sm:$0xff]
        %v1750 = vld [vmem:[%s1733 + $0x80] sm:$0xff]
        %v1751 = vld [vmem:[%s1733 + $0x88] sm:$0xff]
        %v1752 = vld [vmem:[%s1733 + $0x90] sm:$0xff]
        %v1753 = vld [vmem:[%s1733 + $0x98] sm:$0xff]
        %v1754 = vld [vmem:[%s1733 + $0xa0] sm:$0xff]
        %v1755 = vld [vmem:[%s1733 + $0xa8] sm:$0xff]
        %v1756 = vld [vmem:[%s1733 + $0xb0] sm:$0xff]
        %v1757 = vld [vmem:[%s1733 + $0xb8] sm:$0xff]
        %v1758 = vld [vmem:[%s1733 + $0xc0] sm:$0xff]
        %vm1763 = vcmask 1045504
        %v1764 = vrot.slane %v1729, 2
        %v1765 = vrot.slane %v1471, 2
        %v1766 = vsel %vm1763, %v1764, %v1765
        %v1767 = vrot.slane %v1730, 2
        %v1768 = vrot.slane %v1472, 2
        %v1769 = vsel %vm1763, %v1767, %v1768
        %v1770 = vrot.slane %v1473, 2
        %v1771 = vsel %vm1763, %v1765, %v1770
        %v1772 = vrot.slane %v1474, 2
        %v1773 = vsel %vm1763, %v1768, %v1772
        %v1774 = vrot.slane %v1731, 2
        %v1775 = vsel %vm1763, %v1770, %v1774
        %v1776 = vrot.slane %v1732, 2
        %v1777 = vsel %vm1763, %v1772, %v1776
        %v1781 = vsel %vm1431, %v1769, 0
        %v1783 = vsel %vm1431, %v1773, 0
        %v1785 = vsel %vm1431, %v1777, 0
        %1787 = vmatprep.subr.mxu0 0.0
        %1788 = vmatpush1.msra.mxu0 %v1734
        %1789 = vmatprep.subr.mxu0 0.0
        %1790 = vmatpush1.msra.mxu0 %v1735
        %1791 = vmatprep.subr.mxu0 0.0
        %1792 = vmatpush1.msra.mxu0 %v1736
        %1793 = vmatprep.subr.mxu0 0.0
        %1794 = vmatpush1.msra.mxu0 %v1737
        %1795 = vmatprep.subr.mxu0 0.0
        %1796 = vmatpush1.msra.mxu0 %v1738
        %1797 = vmatprep.subr.mxu0 0.0
        %1798 = vmatpush1.msra.mxu0 %v1739
        %1799 = vmatprep.subr.mxu0 0.0
        %1800 = vmatpush1.msra.mxu0 %v1740
        %1801 = vmatprep.subr.mxu0 0.0
        %1802 = vmatpush1.msra.mxu0 %v1741
        %1803 = vmatprep.subr.mxu0 0.0
        %1804 = vmatpush1.msra.mxu0 %v1742
        %1805 = vmatprep.subr.mxu0 0.0
        %1806 = vmatpush1.msra.mxu0 %v1743
        %1807 = vmatprep.subr.mxu0 0.0
        %1808 = vmatpush1.msra.mxu0 %v1744
        %1809 = vmatprep.subr.mxu0 0.0
        %1810 = vmatpush1.msra.mxu0 %v1745
        %1811 = vmatprep.subr.mxu0 0.0
        %1812 = vmatpush1.msra.mxu0 %v1746
        %1813 = vmatprep.subr.mxu0 0.0
        %1814 = vmatpush1.msra.mxu0 %v1747
        %1815 = vmatprep.subr.mxu0 0.0
        %1816 = vmatpush1.msra.mxu0 %v1748
        %1817 = vmatprep.subr.mxu0 0.0
        %1818 = vmatpush1.msra.mxu0 %v1749
        %1819 = vmatprep.subr.mxu0 0.0
        %1820 = vmatpush1.msra.mxu0 %v1750
        %1821 = vmatprep.subr.mxu0 0.0
        %1822 = vmatpush1.msra.mxu0 %v1751
        %1823 = vmatprep.subr.mxu0 0.0
        %1824 = vmatpush1.msra.mxu0 %v1752
        %1825 = vmatprep.subr.mxu0 0.0
        %1826 = vmatpush1.msra.mxu0 %v1753
        %1827 = vmatprep.subr.mxu0 0.0
        %1828 = vmatpush1.msra.mxu0 %v1754
        %1829 = vmatprep.subr.mxu0 0.0
        %1830 = vmatpush1.msra.mxu0 %v1755
        %1831 = vmatprep.subr.mxu0 0.0
        %1832 = vmatpush1.msra.mxu0 %v1756
        %1833 = vmatprep.subr.mxu0 0.0
        %1834 = vmatpush1.msra.mxu0 %v1757
        %1835 = vmatprep.subr.mxu0 0.0
        %1836 = vmatpush1.msra.mxu0 %v1758
        %1837 = vmatprep.subr.mxu0 0.0
        %1838 = vmatpush1.msra.mxu0 0.0
        %1839 = vmatprep.subr.mxu0 0.0
        %1840 = vmatpush1.msra.mxu0 0.0
        %1841 = vmatprep.subr.mxu0 0.0
        %1842 = vmatpush1.msra.mxu0 0.0
        %1843 = vmatprep.subr.mxu0 0.0
        %1844 = vmatpush1.msra.mxu0 0.0
        %1845 = vmatprep.subr.mxu0 0.0
        %1846 = vmatpush1.msra.mxu0 0.0
        %1847 = vmatprep.subr.mxu0 0.0
        %1848 = vmatpush1.msra.mxu0 0.0
        %1849 = vmatprep.subr.mxu0 0.0
        %1850 = vmatpush1.msra.mxu0 0.0
        %1851 = vmatprep.mubr.f32.mxu0 %v1781
        %1852 = vmatmul.mubr.f32.gmra.mrb[0].mxu0 %v1766
        %v1853 = vpop.f32.mrb[0].mxu0
        %v1854 = vadd.f32 0.0, %v1853
        %v1855 = vpop.f32.mrb[0].mxu0
        %1856 = vmatprep.mubr.f32.mxu0 %v1783
        %1857 = vmatmul.mubr.f32.gmra.mrb[0].mxu0 %v1771
        %v1858 = vpop.f32.mrb[0].mxu0
        %v1859 = vadd.f32 0.0, %v1858
        %v1860 = vpop.f32.mrb[0].mxu0
        %1861 = vmatprep.mubr.f32.mxu0 %v1785
        %1862 = vmatmul.mubr.f32.gmra.mrb[0].mxu0 %v1775
        %v1863 = vpop.f32.mrb[0].mxu0
        %v1864 = vadd.f32 0.0, %v1863
        %v1865 = vpop.f32.mrb[0].mxu0
        %1866 = vdwg.mxu0
        %v1867 = vadd.f32 %v1716, %v1854
        %v1868 = vadd.f32 %v1721, %v1859
        %v1869 = vadd.f32 %v1726, %v1864
        %v1870 = vld [vmem:[#allocation2] sm:$0xf8]
        %v1871 = vld [vmem:[#allocation2 + $0x8] sm:$0xf8]
        %v1872 = vld [vmem:[#allocation2 + $0x30] sm:$0x7]
        %v1873 = vld [vmem:[#allocation2 + $0x38] sm:$0x7]
        %s1874 = scalar_lea.vmem %s8, 600
        %v1875 = vld [vmem:[%s1874] sm:$0xff]
        %v1876 = vld [vmem:[%s1874 + $0x8] sm:$0xff]
        %v1877 = vld [vmem:[%s1874 + $0x10] sm:$0xff]
        %v1878 = vld [vmem:[%s1874 + $0x18] sm:$0xff]
        %v1879 = vld [vmem:[%s1874 + $0x20] sm:$0xff]
        %v1880 = vld [vmem:[%s1874 + $0x28] sm:$0xff]
        %v1881 = vld [vmem:[%s1874 + $0x30] sm:$0xff]
        %v1882 = vld [vmem:[%s1874 + $0x38] sm:$0xff]
        %v1883 = vld [vmem:[%s1874 + $0x40] sm:$0xff]
        %v1884 = vld [vmem:[%s1874 + $0x48] sm:$0xff]
        %v1885 = vld [vmem:[%s1874 + $0x50] sm:$0xff]
        %v1886 = vld [vmem:[%s1874 + $0x58] sm:$0xff]
        %v1887 = vld [vmem:[%s1874 + $0x60] sm:$0xff]
        %v1888 = vld [vmem:[%s1874 + $0x68] sm:$0xff]
        %v1889 = vld [vmem:[%s1874 + $0x70] sm:$0xff]
        %v1890 = vld [vmem:[%s1874 + $0x78] sm:$0xff]
        %v1891 = vld [vmem:[%s1874 + $0x80] sm:$0xff]
        %v1892 = vld [vmem:[%s1874 + $0x88] sm:$0xff]
        %v1893 = vld [vmem:[%s1874 + $0x90] sm:$0xff]
        %v1894 = vld [vmem:[%s1874 + $0x98] sm:$0xff]
        %v1895 = vld [vmem:[%s1874 + $0xa0] sm:$0xff]
        %v1896 = vld [vmem:[%s1874 + $0xa8] sm:$0xff]
        %v1897 = vld [vmem:[%s1874 + $0xb0] sm:$0xff]
        %v1898 = vld [vmem:[%s1874 + $0xb8] sm:$0xff]
        %v1899 = vld [vmem:[%s1874 + $0xc0] sm:$0xff]
        %v1904 = vrot.slane %v1870, 3
        %v1905 = vrot.slane %v1471, 3
        %v1906 = vsel %vm957, %v1904, %v1905
        %v1907 = vrot.slane %v1871, 3
        %v1908 = vrot.slane %v1472, 3
        %v1909 = vsel %vm957, %v1907, %v1908
        %v1910 = vrot.slane %v1473, 3
        %v1911 = vsel %vm957, %v1905, %v1910
        %v1912 = vrot.slane %v1474, 3
        %v1913 = vsel %vm957, %v1908, %v1912
        %v1914 = vrot.slane %v1872, 3
        %v1915 = vsel %vm957, %v1910, %v1914
        %v1916 = vrot.slane %v1873, 3
        %v1917 = vsel %vm957, %v1912, %v1916
        %v1921 = vsel %vm1431, %v1909, 0
        %v1923 = vsel %vm1431, %v1913, 0
        %v1925 = vsel %vm1431, %v1917, 0
        %1927 = vmatprep.subr.mxu0 0.0
        %1928 = vmatpush1.msra.mxu0 %v1875
        %1929 = vmatprep.subr.mxu0 0.0
        %1930 = vmatpush1.msra.mxu0 %v1876
        %1931 = vmatprep.subr.mxu0 0.0
        %1932 = vmatpush1.msra.mxu0 %v1877
        %1933 = vmatprep.subr.mxu0 0.0
        %1934 = vmatpush1.msra.mxu0 %v1878
        %1935 = vmatprep.subr.mxu0 0.0
        %1936 = vmatpush1.msra.mxu0 %v1879
        %1937 = vmatprep.subr.mxu0 0.0
        %1938 = vmatpush1.msra.mxu0 %v1880
        %1939 = vmatprep.subr.mxu0 0.0
        %1940 = vmatpush1.msra.mxu0 %v1881
        %1941 = vmatprep.subr.mxu0 0.0
        %1942 = vmatpush1.msra.mxu0 %v1882
        %1943 = vmatprep.subr.mxu0 0.0
        %1944 = vmatpush1.msra.mxu0 %v1883
        %1945 = vmatprep.subr.mxu0 0.0
        %1946 = vmatpush1.msra.mxu0 %v1884
        %1947 = vmatprep.subr.mxu0 0.0
        %1948 = vmatpush1.msra.mxu0 %v1885
        %1949 = vmatprep.subr.mxu0 0.0
        %1950 = vmatpush1.msra.mxu0 %v1886
        %1951 = vmatprep.subr.mxu0 0.0
        %1952 = vmatpush1.msra.mxu0 %v1887
        %1953 = vmatprep.subr.mxu0 0.0
        %1954 = vmatpush1.msra.mxu0 %v1888
        %1955 = vmatprep.subr.mxu0 0.0
        %1956 = vmatpush1.msra.mxu0 %v1889
        %1957 = vmatprep.subr.mxu0 0.0
        %1958 = vmatpush1.msra.mxu0 %v1890
        %1959 = vmatprep.subr.mxu0 0.0
        %1960 = vmatpush1.msra.mxu0 %v1891
        %1961 = vmatprep.subr.mxu0 0.0
        %1962 = vmatpush1.msra.mxu0 %v1892
        %1963 = vmatprep.subr.mxu0 0.0
        %1964 = vmatpush1.msra.mxu0 %v1893
        %1965 = vmatprep.subr.mxu0 0.0
        %1966 = vmatpush1.msra.mxu0 %v1894
        %1967 = vmatprep.subr.mxu0 0.0
        %1968 = vmatpush1.msra.mxu0 %v1895
        %1969 = vmatprep.subr.mxu0 0.0
        %1970 = vmatpush1.msra.mxu0 %v1896
        %1971 = vmatprep.subr.mxu0 0.0
        %1972 = vmatpush1.msra.mxu0 %v1897
        %1973 = vmatprep.subr.mxu0 0.0
        %1974 = vmatpush1.msra.mxu0 %v1898
        %1975 = vmatprep.subr.mxu0 0.0
        %1976 = vmatpush1.msra.mxu0 %v1899
        %1977 = vmatprep.subr.mxu0 0.0
        %1978 = vmatpush1.msra.mxu0 0.0
        %1979 = vmatprep.subr.mxu0 0.0
        %1980 = vmatpush1.msra.mxu0 0.0
        %1981 = vmatprep.subr.mxu0 0.0
        %1982 = vmatpush1.msra.mxu0 0.0
        %1983 = vmatprep.subr.mxu0 0.0
        %1984 = vmatpush1.msra.mxu0 0.0
        %1985 = vmatprep.subr.mxu0 0.0
        %1986 = vmatpush1.msra.mxu0 0.0
        %1987 = vmatprep.subr.mxu0 0.0
        %1988 = vmatpush1.msra.mxu0 0.0
        %1989 = vmatprep.subr.mxu0 0.0
        %1990 = vmatpush1.msra.mxu0 0.0
        %1991 = vmatprep.mubr.f32.mxu0 %v1921
        %1992 = vmatmul.mubr.f32.gmra.mrb[0].mxu0 %v1906
        %v1993 = vpop.f32.mrb[0].mxu0
        %v1994 = vadd.f32 0.0, %v1993
        %v1995 = vpop.f32.mrb[0].mxu0
        %1996 = vmatprep.mubr.f32.mxu0 %v1923
        %1997 = vmatmul.mubr.f32.gmra.mrb[0].mxu0 %v1911
        %v1998 = vpop.f32.mrb[0].mxu0
        %v1999 = vadd.f32 0.0, %v1998
        %v2000 = vpop.f32.mrb[0].mxu0
        %2001 = vmatprep.mubr.f32.mxu0 %v1925
        %2002 = vmatmul.mubr.f32.gmra.mrb[0].mxu0 %v1915
        %v2003 = vpop.f32.mrb[0].mxu0
        %v2004 = vadd.f32 0.0, %v2003
        %v2005 = vpop.f32.mrb[0].mxu0
        %2006 = vdwg.mxu0
        %v2007 = vadd.f32 %v1867, %v1994
        %v2008 = vadd.f32 %v1868, %v1999
        %v2009 = vadd.f32 %v1869, %v2004
        %v2010 = vld [vmem:[#allocation2] sm:$0xf0]
        %v2011 = vld [vmem:[#allocation2 + $0x8] sm:$0xf0]
        %v2012 = vld [vmem:[#allocation2 + $0x30] sm:$0xf]
        %v2013 = vld [vmem:[#allocation2 + $0x38] sm:$0xf]
        %s2014 = scalar_lea.vmem %s8, 800
        %v2015 = vld [vmem:[%s2014] sm:$0xff]
        %v2016 = vld [vmem:[%s2014 + $0x8] sm:$0xff]
        %v2017 = vld [vmem:[%s2014 + $0x10] sm:$0xff]
        %v2018 = vld [vmem:[%s2014 + $0x18] sm:$0xff]
        %v2019 = vld [vmem:[%s2014 + $0x20] sm:$0xff]
        %v2020 = vld [vmem:[%s2014 + $0x28] sm:$0xff]
        %v2021 = vld [vmem:[%s2014 + $0x30] sm:$0xff]
        %v2022 = vld [vmem:[%s2014 + $0x38] sm:$0xff]
        %v2023 = vld [vmem:[%s2014 + $0x40] sm:$0xff]
        %v2024 = vld [vmem:[%s2014 + $0x48] sm:$0xff]
        %v2025 = vld [vmem:[%s2014 + $0x50] sm:$0xff]
        %v2026 = vld [vmem:[%s2014 + $0x58] sm:$0xff]
        %v2027 = vld [vmem:[%s2014 + $0x60] sm:$0xff]
        %v2028 = vld [vmem:[%s2014 + $0x68] sm:$0xff]
        %v2029 = vld [vmem:[%s2014 + $0x70] sm:$0xff]
        %v2030 = vld [vmem:[%s2014 + $0x78] sm:$0xff]
        %v2031 = vld [vmem:[%s2014 + $0x80] sm:$0xff]
        %v2032 = vld [vmem:[%s2014 + $0x88] sm:$0xff]
        %v2033 = vld [vmem:[%s2014 + $0x90] sm:$0xff]
        %v2034 = vld [vmem:[%s2014 + $0x98] sm:$0xff]
        %v2035 = vld [vmem:[%s2014 + $0xa0] sm:$0xff]
        %v2036 = vld [vmem:[%s2014 + $0xa8] sm:$0xff]
        %v2037 = vld [vmem:[%s2014 + $0xb0] sm:$0xff]
        %v2038 = vld [vmem:[%s2014 + $0xb8] sm:$0xff]
        %v2039 = vld [vmem:[%s2014 + $0xc0] sm:$0xff]
        %v2044 = vrot.slane %v2010, 4
        %v2045 = vrot.slane %v1471, 4
        %v2046 = vsel %vm1121, %v2044, %v2045
        %v2047 = vrot.slane %v2011, 4
        %v2048 = vrot.slane %v1472, 4
        %v2049 = vsel %vm1121, %v2047, %v2048
        %v2050 = vrot.slane %v1473, 4
        %v2051 = vsel %vm1121, %v2045, %v2050
        %v2052 = vrot.slane %v1474, 4
        %v2053 = vsel %vm1121, %v2048, %v2052
        %v2054 = vrot.slane %v2012, 4
        %v2055 = vsel %vm1121, %v2050, %v2054
        %v2056 = vrot.slane %v2013, 4
        %v2057 = vsel %vm1121, %v2052, %v2056
        %v2061 = vsel %vm1431, %v2049, 0
        %v2063 = vsel %vm1431, %v2053, 0
        %v2065 = vsel %vm1431, %v2057, 0
        %2067 = vmatprep.subr.mxu0 0.0
        %2068 = vmatpush1.msra.mxu0 %v2015
        %2069 = vmatprep.subr.mxu0 0.0
        %2070 = vmatpush1.msra.mxu0 %v2016
        %2071 = vmatprep.subr.mxu0 0.0
        %2072 = vmatpush1.msra.mxu0 %v2017
        %2073 = vmatprep.subr.mxu0 0.0
        %2074 = vmatpush1.msra.mxu0 %v2018
        %2075 = vmatprep.subr.mxu0 0.0
        %2076 = vmatpush1.msra.mxu0 %v2019
        %2077 = vmatprep.subr.mxu0 0.0
        %2078 = vmatpush1.msra.mxu0 %v2020
        %2079 = vmatprep.subr.mxu0 0.0
        %2080 = vmatpush1.msra.mxu0 %v2021
        %2081 = vmatprep.subr.mxu0 0.0
        %2082 = vmatpush1.msra.mxu0 %v2022
        %2083 = vmatprep.subr.mxu0 0.0
        %2084 = vmatpush1.msra.mxu0 %v2023
        %2085 = vmatprep.subr.mxu0 0.0
        %2086 = vmatpush1.msra.mxu0 %v2024
        %2087 = vmatprep.subr.mxu0 0.0
        %2088 = vmatpush1.msra.mxu0 %v2025
        %2089 = vmatprep.subr.mxu0 0.0
        %2090 = vmatpush1.msra.mxu0 %v2026
        %2091 = vmatprep.subr.mxu0 0.0
        %2092 = vmatpush1.msra.mxu0 %v2027
        %2093 = vmatprep.subr.mxu0 0.0
        %2094 = vmatpush1.msra.mxu0 %v2028
        %2095 = vmatprep.subr.mxu0 0.0
        %2096 = vmatpush1.msra.mxu0 %v2029
        %2097 = vmatprep.subr.mxu0 0.0
        %2098 = vmatpush1.msra.mxu0 %v2030
        %2099 = vmatprep.subr.mxu0 0.0
        %2100 = vmatpush1.msra.mxu0 %v2031
        %2101 = vmatprep.subr.mxu0 0.0
        %2102 = vmatpush1.msra.mxu0 %v2032
        %2103 = vmatprep.subr.mxu0 0.0
        %2104 = vmatpush1.msra.mxu0 %v2033
        %2105 = vmatprep.subr.mxu0 0.0
        %2106 = vmatpush1.msra.mxu0 %v2034
        %2107 = vmatprep.subr.mxu0 0.0
        %2108 = vmatpush1.msra.mxu0 %v2035
        %2109 = vmatprep.subr.mxu0 0.0
        %2110 = vmatpush1.msra.mxu0 %v2036
        %2111 = vmatprep.subr.mxu0 0.0
        %2112 = vmatpush1.msra.mxu0 %v2037
        %2113 = vmatprep.subr.mxu0 0.0
        %2114 = vmatpush1.msra.mxu0 %v2038
        %2115 = vmatprep.subr.mxu0 0.0
        %2116 = vmatpush1.msra.mxu0 %v2039
        %2117 = vmatprep.subr.mxu0 0.0
        %2118 = vmatpush1.msra.mxu0 0.0
        %2119 = vmatprep.subr.mxu0 0.0
        %2120 = vmatpush1.msra.mxu0 0.0
        %2121 = vmatprep.subr.mxu0 0.0
        %2122 = vmatpush1.msra.mxu0 0.0
        %2123 = vmatprep.subr.mxu0 0.0
        %2124 = vmatpush1.msra.mxu0 0.0
        %2125 = vmatprep.subr.mxu0 0.0
        %2126 = vmatpush1.msra.mxu0 0.0
        %2127 = vmatprep.subr.mxu0 0.0
        %2128 = vmatpush1.msra.mxu0 0.0
        %2129 = vmatprep.subr.mxu0 0.0
        %2130 = vmatpush1.msra.mxu0 0.0
        %2131 = vmatprep.mubr.f32.mxu0 %v2061
        %2132 = vmatmul.mubr.f32.gmra.mrb[0].mxu0 %v2046
        %v2133 = vpop.f32.mrb[0].mxu0
        %v2134 = vadd.f32 0.0, %v2133
        %v2135 = vpop.f32.mrb[0].mxu0
        %2136 = vmatprep.mubr.f32.mxu0 %v2063
        %2137 = vmatmul.mubr.f32.gmra.mrb[0].mxu0 %v2051
        %v2138 = vpop.f32.mrb[0].mxu0
        %v2139 = vadd.f32 0.0, %v2138
        %v2140 = vpop.f32.mrb[0].mxu0
        %2141 = vmatprep.mubr.f32.mxu0 %v2065
        %2142 = vmatmul.mubr.f32.gmra.mrb[0].mxu0 %v2055
        %v2143 = vpop.f32.mrb[0].mxu0
        %v2144 = vadd.f32 0.0, %v2143
        %v2145 = vpop.f32.mrb[0].mxu0
        %2146 = vdwg.mxu0
        %v2147 = vadd.f32 %v2007, %v2134
        %v2148 = vadd.f32 %v2008, %v2139
        %v2149 = vadd.f32 %v2009, %v2144
        %v2150 = vld [vmem:[%s9] sm:$0x1]
        %v2152 = vlaneseq
        %v2153 = vshrl.u32 %v2152, 7
        %v2154 = vsub.s32 0, %v2153
        %v2155 = vrot.slane %v2150, %v2154
        %v2157 = vadd.f32 %v2147, %v2155
        %v2158 = vadd.f32 %v2148, %v2155
        %v2159 = vadd.f32 %v2149, %v2155
        %v2160 = vmax.f32 %v2157, 0.0
        %v2161 = vmax.f32 %v2158, 0.0
        %v2162 = vmax.f32 %v2159, 0.0
        %vm2163 = vcmask 982016
        %2164 = vst.msk [vmem:[#allocation3] sm:$0xff] %vm2163, 0.0
        %2165 = vst.msk [vmem:[#allocation3 + $0x8] sm:$0xff] %vm2163, 0.0
        %2166 = vst.msk [vmem:[#allocation3 + $0x10] sm:$0xff] %vm2163, 0.0
        %2167 = vst.msk [vmem:[#allocation3 + $0x18] sm:$0xff] %vm2163, 0.0
        %2168 = vst.msk [vmem:[#allocation3 + $0x4] sm:$0xff] %vm2163, %v2160
        %2169 = vst.msk [vmem:[#allocation3 + $0xc] sm:$0xff] %vm2163, %v2161
        %2170 = vst.msk [vmem:[#allocation3 + $0x14] sm:$0xff] %vm2163, %v2162
        %v2171 = vld [vmem:[#allocation3] sm:$0xff]
        %v2172 = vld [vmem:[#allocation3 + $0x8] sm:$0xff]
        %v2173 = vld [vmem:[#allocation3 + $0x10] sm:$0xff]
        %v2174 = vld [vmem:[#allocation3 + $0x18] sm:$0xf]
        %v2175 = vld [vmem:[%s10] sm:$0xff]
        %v2176 = vld [vmem:[%s10 + $0x8] sm:$0xff]
        %v2177 = vld [vmem:[%s10 + $0x10] sm:$0xff]
        %v2178 = vld [vmem:[%s10 + $0x18] sm:$0xff]
        %v2179 = vld [vmem:[%s10 + $0x20] sm:$0xff]
        %v2180 = vld [vmem:[%s10 + $0x28] sm:$0xff]
        %v2181 = vld [vmem:[%s10 + $0x30] sm:$0xff]
        %v2182 = vld [vmem:[%s10 + $0x38] sm:$0xff]
        %v2183 = vld [vmem:[%s10 + $0x40] sm:$0xff]
        %v2184 = vld [vmem:[%s10 + $0x48] sm:$0xff]
        %v2185 = vld [vmem:[%s10 + $0x50] sm:$0xff]
        %v2186 = vld [vmem:[%s10 + $0x58] sm:$0xff]
        %v2187 = vld [vmem:[%s10 + $0x60] sm:$0xff]
        %v2188 = vld [vmem:[%s10 + $0x68] sm:$0xff]
        %v2189 = vld [vmem:[%s10 + $0x70] sm:$0xff]
        %v2190 = vld [vmem:[#allocation3 + $0x1] sm:$0xff]
        %v2191 = vld [vmem:[#allocation3 + $0x9] sm:$0xff]
        %v2192 = vld [vmem:[#allocation3 + $0x11] sm:$0xff]
        %v2193 = vld [vmem:[#allocation3 + $0x19] sm:$0xf]
        %s2194 = scalar_lea.vmem %s10, 120
        %v2195 = vld [vmem:[%s2194] sm:$0xff]
        %v2196 = vld [vmem:[%s2194 + $0x8] sm:$0xff]
        %v2197 = vld [vmem:[%s2194 + $0x10] sm:$0xff]
        %v2198 = vld [vmem:[%s2194 + $0x18] sm:$0xff]
        %v2199 = vld [vmem:[%s2194 + $0x20] sm:$0xff]
        %v2200 = vld [vmem:[%s2194 + $0x28] sm:$0xff]
        %v2201 = vld [vmem:[%s2194 + $0x30] sm:$0xff]
        %v2202 = vld [vmem:[%s2194 + $0x38] sm:$0xff]
        %v2203 = vld [vmem:[%s2194 + $0x40] sm:$0xff]
        %v2204 = vld [vmem:[%s2194 + $0x48] sm:$0xff]
        %v2205 = vld [vmem:[%s2194 + $0x50] sm:$0xff]
        %v2206 = vld [vmem:[%s2194 + $0x58] sm:$0xff]
        %v2207 = vld [vmem:[%s2194 + $0x60] sm:$0xff]
        %v2208 = vld [vmem:[%s2194 + $0x68] sm:$0xff]
        %v2209 = vld [vmem:[%s2194 + $0x70] sm:$0xff]
        %v2211 = vsel %vm2163, %v2190, 0
        %v2214 = vsel %vm2163, %v2191, 0
        %v2217 = vsel %vm2163, %v2192, 0
        %v2220 = vsel %vm2163, %v2193, 0
        %2222 = vmatprep.subr.mxu0 0.0
        %2223 = vmatpush1.msra.mxu0 %v2195
        %2224 = vmatprep.subr.mxu0 0.0
        %2225 = vmatpush1.msra.mxu0 %v2196
        %2226 = vmatprep.subr.mxu0 0.0
        %2227 = vmatpush1.msra.mxu0 %v2197
        %2228 = vmatprep.subr.mxu0 0.0
        %2229 = vmatpush1.msra.mxu0 %v2198
        %2230 = vmatprep.subr.mxu0 0.0
        %2231 = vmatpush1.msra.mxu0 %v2199
        %2232 = vmatprep.subr.mxu0 0.0
        %2233 = vmatpush1.msra.mxu0 %v2200
        %2234 = vmatprep.subr.mxu0 0.0
        %2235 = vmatpush1.msra.mxu0 %v2201
        %2236 = vmatprep.subr.mxu0 0.0
        %2237 = vmatpush1.msra.mxu0 %v2202
        %2238 = vmatprep.subr.mxu0 0.0
        %2239 = vmatpush1.msra.mxu0 %v2203
        %2240 = vmatprep.subr.mxu0 0.0
        %2241 = vmatpush1.msra.mxu0 %v2204
        %2242 = vmatprep.subr.mxu0 0.0
        %2243 = vmatpush1.msra.mxu0 %v2205
        %2244 = vmatprep.subr.mxu0 0.0
        %2245 = vmatpush1.msra.mxu0 %v2206
        %2246 = vmatprep.subr.mxu0 0.0
        %2247 = vmatpush1.msra.mxu0 %v2207
        %2248 = vmatprep.subr.mxu0 0.0
        %2249 = vmatpush1.msra.mxu0 %v2208
        %2250 = vmatprep.subr.mxu0 0.0
        %2251 = vmatpush1.msra.mxu0 %v2209
        %2252 = vmatprep.subr.mxu0 0.0
        %2253 = vmatpush1.msra.mxu0 0.0
        %2254 = vmatprep.subr.mxu0 0.0
        %2255 = vmatpush1.msra.mxu0 0.0
        %2256 = vmatprep.subr.mxu0 0.0
        %2257 = vmatpush1.msra.mxu0 0.0
        %2258 = vmatprep.subr.mxu0 0.0
        %2259 = vmatpush1.msra.mxu0 0.0
        %2260 = vmatprep.subr.mxu0 0.0
        %2261 = vmatpush1.msra.mxu0 0.0
        %2262 = vmatprep.subr.mxu0 0.0
        %2263 = vmatpush1.msra.mxu0 0.0
        %2264 = vmatprep.subr.mxu0 0.0
        %2265 = vmatpush1.msra.mxu0 0.0
        %2266 = vmatprep.subr.mxu0 0.0
        %2267 = vmatpush1.msra.mxu0 0.0
        %2268 = vmatprep.subr.mxu0 0.0
        %2269 = vmatpush1.msra.mxu0 0.0
        %2270 = vmatprep.subr.mxu0 0.0
        %2271 = vmatpush1.msra.mxu0 0.0
        %2272 = vmatprep.subr.mxu0 0.0
        %2273 = vmatpush1.msra.mxu0 0.0
        %2274 = vmatprep.subr.mxu0 0.0
        %2275 = vmatpush1.msra.mxu0 0.0
        %2276 = vmatprep.subr.mxu0 0.0
        %2277 = vmatpush1.msra.mxu0 0.0
        %2278 = vmatprep.subr.mxu0 0.0
        %2279 = vmatpush1.msra.mxu0 0.0
        %2280 = vmatprep.subr.mxu0 0.0
        %2281 = vmatpush1.msra.mxu0 0.0
        %2282 = vmatprep.subr.mxu0 0.0
        %2283 = vmatpush1.msra.mxu0 0.0
        %2284 = vmatprep.subr.mxu0 0.0
        %2285 = vmatpush1.msra.mxu0 0.0
        %2286 = vmatprep.mubr.f32.mxu0 0.0
        %2287 = vmatmul.mubr.f32.gmra.mrb[0].mxu0 %v2211
        %v2288 = vpop.f32.mrb[0].mxu0
        %v2289 = vadd.f32 0.0, %v2288
        %v2290 = vpop.f32.mrb[0].mxu0
        %2291 = vmatprep.mubr.f32.mxu0 0.0
        %2292 = vmatmul.mubr.f32.gmra.mrb[0].mxu0 %v2214
        %v2293 = vpop.f32.mrb[0].mxu0
        %v2294 = vadd.f32 0.0, %v2293
        %v2295 = vpop.f32.mrb[0].mxu0
        %2296 = vmatprep.mubr.f32.mxu0 0.0
        %2297 = vmatmul.mubr.f32.gmra.mrb[0].mxu0 %v2217
        %v2298 = vpop.f32.mrb[0].mxu0
        %v2299 = vadd.f32 0.0, %v2298
        %v2300 = vpop.f32.mrb[0].mxu0
        %2301 = vmatprep.mubr.f32.mxu0 0.0
        %2302 = vmatmul.mubr.f32.gmra.mrb[0].mxu0 %v2220
        %v2303 = vpop.f32.mrb[0].mxu0
        %v2304 = vadd.f32 0.0, %v2303
        %v2305 = vpop.f32.mrb[0].mxu0
        %2306 = vdwg.mxu0
        %v2308 = vsel %vm2163, %v2171, 0
        %v2311 = vsel %vm2163, %v2172, 0
        %v2314 = vsel %vm2163, %v2173, 0
        %v2317 = vsel %vm2163, %v2174, 0
        %2319 = vmatprep.subr.mxu0 0.0
        %2320 = vmatpush1.msra.mxu0 %v2175
        %2321 = vmatprep.subr.mxu0 0.0
        %2322 = vmatpush1.msra.mxu0 %v2176
        %2323 = vmatprep.subr.mxu0 0.0
        %2324 = vmatpush1.msra.mxu0 %v2177
        %2325 = vmatprep.subr.mxu0 0.0
        %2326 = vmatpush1.msra.mxu0 %v2178
        %2327 = vmatprep.subr.mxu0 0.0
        %2328 = vmatpush1.msra.mxu0 %v2179
        %2329 = vmatprep.subr.mxu0 0.0
        %2330 = vmatpush1.msra.mxu0 %v2180
        %2331 = vmatprep.subr.mxu0 0.0
        %2332 = vmatpush1.msra.mxu0 %v2181
        %2333 = vmatprep.subr.mxu0 0.0
        %2334 = vmatpush1.msra.mxu0 %v2182
        %2335 = vmatprep.subr.mxu0 0.0
        %2336 = vmatpush1.msra.mxu0 %v2183
        %2337 = vmatprep.subr.mxu0 0.0
        %2338 = vmatpush1.msra.mxu0 %v2184
        %2339 = vmatprep.subr.mxu0 0.0
        %2340 = vmatpush1.msra.mxu0 %v2185
        %2341 = vmatprep.subr.mxu0 0.0
        %2342 = vmatpush1.msra.mxu0 %v2186
        %2343 = vmatprep.subr.mxu0 0.0
        %2344 = vmatpush1.msra.mxu0 %v2187
        %2345 = vmatprep.subr.mxu0 0.0
        %2346 = vmatpush1.msra.mxu0 %v2188
        %2347 = vmatprep.subr.mxu0 0.0
        %2348 = vmatpush1.msra.mxu0 %v2189
        %2349 = vmatprep.subr.mxu0 0.0
        %2350 = vmatpush1.msra.mxu0 0.0
        %2351 = vmatprep.subr.mxu0 0.0
        %2352 = vmatpush1.msra.mxu0 0.0
        %2353 = vmatprep.subr.mxu0 0.0
        %2354 = vmatpush1.msra.mxu0 0.0
        %2355 = vmatprep.subr.mxu0 0.0
        %2356 = vmatpush1.msra.mxu0 0.0
        %2357 = vmatprep.subr.mxu0 0.0
        %2358 = vmatpush1.msra.mxu0 0.0
        %2359 = vmatprep.subr.mxu0 0.0
        %2360 = vmatpush1.msra.mxu0 0.0
        %2361 = vmatprep.subr.mxu0 0.0
        %2362 = vmatpush1.msra.mxu0 0.0
        %2363 = vmatprep.subr.mxu0 0.0
        %2364 = vmatpush1.msra.mxu0 0.0
        %2365 = vmatprep.subr.mxu0 0.0
        %2366 = vmatpush1.msra.mxu0 0.0
        %2367 = vmatprep.subr.mxu0 0.0
        %2368 = vmatpush1.msra.mxu0 0.0
        %2369 = vmatprep.subr.mxu0 0.0
        %2370 = vmatpush1.msra.mxu0 0.0
        %2371 = vmatprep.subr.mxu0 0.0
        %2372 = vmatpush1.msra.mxu0 0.0
        %2373 = vmatprep.subr.mxu0 0.0
        %2374 = vmatpush1.msra.mxu0 0.0
        %2375 = vmatprep.subr.mxu0 0.0
        %2376 = vmatpush1.msra.mxu0 0.0
        %2377 = vmatprep.subr.mxu0 0.0
        %2378 = vmatpush1.msra.mxu0 0.0
        %2379 = vmatprep.subr.mxu0 0.0
        %2380 = vmatpush1.msra.mxu0 0.0
        %2381 = vmatprep.subr.mxu0 0.0
        %2382 = vmatpush1.msra.mxu0 0.0
        %2383 = vmatprep.mubr.f32.mxu0 0.0
        %2384 = vmatmul.mubr.f32.gmra.mrb[0].mxu0 %v2308
        %v2385 = vpop.f32.mrb[0].mxu0
        %v2386 = vadd.f32 %v2289, %v2385
        %v2387 = vpop.f32.mrb[0].mxu0
        %2388 = vmatprep.mubr.f32.mxu0 0.0
        %2389 = vmatmul.mubr.f32.gmra.mrb[0].mxu0 %v2311
        %v2390 = vpop.f32.mrb[0].mxu0
        %v2391 = vadd.f32 %v2294, %v2390
        %v2392 = vpop.f32.mrb[0].mxu0
        %2393 = vmatprep.mubr.f32.mxu0 0.0
        %2394 = vmatmul.mubr.f32.gmra.mrb[0].mxu0 %v2314
        %v2395 = vpop.f32.mrb[0].mxu0
        %v2396 = vadd.f32 %v2299, %v2395
        %v2397 = vpop.f32.mrb[0].mxu0
        %2398 = vmatprep.mubr.f32.mxu0 0.0
        %2399 = vmatmul.mubr.f32.gmra.mrb[0].mxu0 %v2317
        %v2400 = vpop.f32.mrb[0].mxu0
        %v2401 = vadd.f32 %v2304, %v2400
        %v2402 = vpop.f32.mrb[0].mxu0
        %2403 = vdwg.mxu0
        %v2404 = vld [vmem:[#allocation3 + $0x2] sm:$0xff]
        %v2405 = vld [vmem:[#allocation3 + $0xa] sm:$0xff]
        %v2406 = vld [vmem:[#allocation3 + $0x12] sm:$0xff]
        %v2407 = vld [vmem:[#allocation3 + $0x1a] sm:$0xf]
        %s2408 = scalar_lea.vmem %s10, 240
        %v2409 = vld [vmem:[%s2408] sm:$0xff]
        %v2410 = vld [vmem:[%s2408 + $0x8] sm:$0xff]
        %v2411 = vld [vmem:[%s2408 + $0x10] sm:$0xff]
        %v2412 = vld [vmem:[%s2408 + $0x18] sm:$0xff]
        %v2413 = vld [vmem:[%s2408 + $0x20] sm:$0xff]
        %v2414 = vld [vmem:[%s2408 + $0x28] sm:$0xff]
        %v2415 = vld [vmem:[%s2408 + $0x30] sm:$0xff]
        %v2416 = vld [vmem:[%s2408 + $0x38] sm:$0xff]
        %v2417 = vld [vmem:[%s2408 + $0x40] sm:$0xff]
        %v2418 = vld [vmem:[%s2408 + $0x48] sm:$0xff]
        %v2419 = vld [vmem:[%s2408 + $0x50] sm:$0xff]
        %v2420 = vld [vmem:[%s2408 + $0x58] sm:$0xff]
        %v2421 = vld [vmem:[%s2408 + $0x60] sm:$0xff]
        %v2422 = vld [vmem:[%s2408 + $0x68] sm:$0xff]
        %v2423 = vld [vmem:[%s2408 + $0x70] sm:$0xff]
        %v2425 = vsel %vm2163, %v2404, 0
        %v2428 = vsel %vm2163, %v2405, 0
        %v2431 = vsel %vm2163, %v2406, 0
        %v2434 = vsel %vm2163, %v2407, 0
        %2436 = vmatprep.subr.mxu0 0.0
        %2437 = vmatpush1.msra.mxu0 %v2409
        %2438 = vmatprep.subr.mxu0 0.0
        %2439 = vmatpush1.msra.mxu0 %v2410
        %2440 = vmatprep.subr.mxu0 0.0
        %2441 = vmatpush1.msra.mxu0 %v2411
        %2442 = vmatprep.subr.mxu0 0.0
        %2443 = vmatpush1.msra.mxu0 %v2412
        %2444 = vmatprep.subr.mxu0 0.0
        %2445 = vmatpush1.msra.mxu0 %v2413
        %2446 = vmatprep.subr.mxu0 0.0
        %2447 = vmatpush1.msra.mxu0 %v2414
        %2448 = vmatprep.subr.mxu0 0.0
        %2449 = vmatpush1.msra.mxu0 %v2415
        %2450 = vmatprep.subr.mxu0 0.0
        %2451 = vmatpush1.msra.mxu0 %v2416
        %2452 = vmatprep.subr.mxu0 0.0
        %2453 = vmatpush1.msra.mxu0 %v2417
        %2454 = vmatprep.subr.mxu0 0.0
        %2455 = vmatpush1.msra.mxu0 %v2418
        %2456 = vmatprep.subr.mxu0 0.0
        %2457 = vmatpush1.msra.mxu0 %v2419
        %2458 = vmatprep.subr.mxu0 0.0
        %2459 = vmatpush1.msra.mxu0 %v2420
        %2460 = vmatprep.subr.mxu0 0.0
        %2461 = vmatpush1.msra.mxu0 %v2421
        %2462 = vmatprep.subr.mxu0 0.0
        %2463 = vmatpush1.msra.mxu0 %v2422
        %2464 = vmatprep.subr.mxu0 0.0
        %2465 = vmatpush1.msra.mxu0 %v2423
        %2466 = vmatprep.subr.mxu0 0.0
        %2467 = vmatpush1.msra.mxu0 0.0
        %2468 = vmatprep.subr.mxu0 0.0
        %2469 = vmatpush1.msra.mxu0 0.0
        %2470 = vmatprep.subr.mxu0 0.0
        %2471 = vmatpush1.msra.mxu0 0.0
        %2472 = vmatprep.subr.mxu0 0.0
        %2473 = vmatpush1.msra.mxu0 0.0
        %2474 = vmatprep.subr.mxu0 0.0
        %2475 = vmatpush1.msra.mxu0 0.0
        %2476 = vmatprep.subr.mxu0 0.0
        %2477 = vmatpush1.msra.mxu0 0.0
        %2478 = vmatprep.subr.mxu0 0.0
        %2479 = vmatpush1.msra.mxu0 0.0
        %2480 = vmatprep.subr.mxu0 0.0
        %2481 = vmatpush1.msra.mxu0 0.0
        %2482 = vmatprep.subr.mxu0 0.0
        %2483 = vmatpush1.msra.mxu0 0.0
        %2484 = vmatprep.subr.mxu0 0.0
        %2485 = vmatpush1.msra.mxu0 0.0
        %2486 = vmatprep.subr.mxu0 0.0
        %2487 = vmatpush1.msra.mxu0 0.0
        %2488 = vmatprep.subr.mxu0 0.0
        %2489 = vmatpush1.msra.mxu0 0.0
        %2490 = vmatprep.subr.mxu0 0.0
        %2491 = vmatpush1.msra.mxu0 0.0
        %2492 = vmatprep.subr.mxu0 0.0
        %2493 = vmatpush1.msra.mxu0 0.0
        %2494 = vmatprep.subr.mxu0 0.0
        %2495 = vmatpush1.msra.mxu0 0.0
        %2496 = vmatprep.subr.mxu0 0.0
        %2497 = vmatpush1.msra.mxu0 0.0
        %2498 = vmatprep.subr.mxu0 0.0
        %2499 = vmatpush1.msra.mxu0 0.0
        %2500 = vmatprep.mubr.f32.mxu0 0.0
        %2501 = vmatmul.mubr.f32.gmra.mrb[0].mxu0 %v2425
        %v2502 = vpop.f32.mrb[0].mxu0
        %v2503 = vadd.f32 0.0, %v2502
        %v2504 = vpop.f32.mrb[0].mxu0
        %2505 = vmatprep.mubr.f32.mxu0 0.0
        %2506 = vmatmul.mubr.f32.gmra.mrb[0].mxu0 %v2428
        %v2507 = vpop.f32.mrb[0].mxu0
        %v2508 = vadd.f32 0.0, %v2507
        %v2509 = vpop.f32.mrb[0].mxu0
        %2510 = vmatprep.mubr.f32.mxu0 0.0
        %2511 = vmatmul.mubr.f32.gmra.mrb[0].mxu0 %v2431
        %v2512 = vpop.f32.mrb[0].mxu0
        %v2513 = vadd.f32 0.0, %v2512
        %v2514 = vpop.f32.mrb[0].mxu0
        %2515 = vmatprep.mubr.f32.mxu0 0.0
        %2516 = vmatmul.mubr.f32.gmra.mrb[0].mxu0 %v2434
        %v2517 = vpop.f32.mrb[0].mxu0
        %v2518 = vadd.f32 0.0, %v2517
        %v2519 = vpop.f32.mrb[0].mxu0
        %2520 = vdwg.mxu0
        %v2521 = vadd.f32 %v2386, %v2503
        %v2522 = vadd.f32 %v2391, %v2508
        %v2523 = vadd.f32 %v2396, %v2513
        %v2524 = vadd.f32 %v2401, %v2518
        %v2525 = vld [vmem:[#allocation3 + $0x3] sm:$0xff]
        %v2526 = vld [vmem:[#allocation3 + $0xb] sm:$0xff]
        %v2527 = vld [vmem:[#allocation3 + $0x13] sm:$0xff]
        %v2528 = vld [vmem:[#allocation3 + $0x1b] sm:$0xf]
        %s2529 = scalar_lea.vmem %s10, 360
        %v2530 = vld [vmem:[%s2529] sm:$0xff]
        %v2531 = vld [vmem:[%s2529 + $0x8] sm:$0xff]
        %v2532 = vld [vmem:[%s2529 + $0x10] sm:$0xff]
        %v2533 = vld [vmem:[%s2529 + $0x18] sm:$0xff]
        %v2534 = vld [vmem:[%s2529 + $0x20] sm:$0xff]
        %v2535 = vld [vmem:[%s2529 + $0x28] sm:$0xff]
        %v2536 = vld [vmem:[%s2529 + $0x30] sm:$0xff]
        %v2537 = vld [vmem:[%s2529 + $0x38] sm:$0xff]
        %v2538 = vld [vmem:[%s2529 + $0x40] sm:$0xff]
        %v2539 = vld [vmem:[%s2529 + $0x48] sm:$0xff]
        %v2540 = vld [vmem:[%s2529 + $0x50] sm:$0xff]
        %v2541 = vld [vmem:[%s2529 + $0x58] sm:$0xff]
        %v2542 = vld [vmem:[%s2529 + $0x60] sm:$0xff]
        %v2543 = vld [vmem:[%s2529 + $0x68] sm:$0xff]
        %v2544 = vld [vmem:[%s2529 + $0x70] sm:$0xff]
        %v2546 = vsel %vm2163, %v2525, 0
        %v2549 = vsel %vm2163, %v2526, 0
        %v2552 = vsel %vm2163, %v2527, 0
        %v2555 = vsel %vm2163, %v2528, 0
        %2557 = vmatprep.subr.mxu0 0.0
        %2558 = vmatpush1.msra.mxu0 %v2530
        %2559 = vmatprep.subr.mxu0 0.0
        %2560 = vmatpush1.msra.mxu0 %v2531
        %2561 = vmatprep.subr.mxu0 0.0
        %2562 = vmatpush1.msra.mxu0 %v2532
        %2563 = vmatprep.subr.mxu0 0.0
        %2564 = vmatpush1.msra.mxu0 %v2533
        %2565 = vmatprep.subr.mxu0 0.0
        %2566 = vmatpush1.msra.mxu0 %v2534
        %2567 = vmatprep.subr.mxu0 0.0
        %2568 = vmatpush1.msra.mxu0 %v2535
        %2569 = vmatprep.subr.mxu0 0.0
        %2570 = vmatpush1.msra.mxu0 %v2536
        %2571 = vmatprep.subr.mxu0 0.0
        %2572 = vmatpush1.msra.mxu0 %v2537
        %2573 = vmatprep.subr.mxu0 0.0
        %2574 = vmatpush1.msra.mxu0 %v2538
        %2575 = vmatprep.subr.mxu0 0.0
        %2576 = vmatpush1.msra.mxu0 %v2539
        %2577 = vmatprep.subr.mxu0 0.0
        %2578 = vmatpush1.msra.mxu0 %v2540
        %2579 = vmatprep.subr.mxu0 0.0
        %2580 = vmatpush1.msra.mxu0 %v2541
        %2581 = vmatprep.subr.mxu0 0.0
        %2582 = vmatpush1.msra.mxu0 %v2542
        %2583 = vmatprep.subr.mxu0 0.0
        %2584 = vmatpush1.msra.mxu0 %v2543
        %2585 = vmatprep.subr.mxu0 0.0
        %2586 = vmatpush1.msra.mxu0 %v2544
        %2587 = vmatprep.subr.mxu0 0.0
        %2588 = vmatpush1.msra.mxu0 0.0
        %2589 = vmatprep.subr.mxu0 0.0
        %2590 = vmatpush1.msra.mxu0 0.0
        %2591 = vmatprep.subr.mxu0 0.0
        %2592 = vmatpush1.msra.mxu0 0.0
        %2593 = vmatprep.subr.mxu0 0.0
        %2594 = vmatpush1.msra.mxu0 0.0
        %2595 = vmatprep.subr.mxu0 0.0
        %2596 = vmatpush1.msra.mxu0 0.0
        %2597 = vmatprep.subr.mxu0 0.0
        %2598 = vmatpush1.msra.mxu0 0.0
        %2599 = vmatprep.subr.mxu0 0.0
        %2600 = vmatpush1.msra.mxu0 0.0
        %2601 = vmatprep.subr.mxu0 0.0
        %2602 = vmatpush1.msra.mxu0 0.0
        %2603 = vmatprep.subr.mxu0 0.0
        %2604 = vmatpush1.msra.mxu0 0.0
        %2605 = vmatprep.subr.mxu0 0.0
        %2606 = vmatpush1.msra.mxu0 0.0
        %2607 = vmatprep.subr.mxu0 0.0
        %2608 = vmatpush1.msra.mxu0 0.0
        %2609 = vmatprep.subr.mxu0 0.0
        %2610 = vmatpush1.msra.mxu0 0.0
        %2611 = vmatprep.subr.mxu0 0.0
        %2612 = vmatpush1.msra.mxu0 0.0
        %2613 = vmatprep.subr.mxu0 0.0
        %2614 = vmatpush1.msra.mxu0 0.0
        %2615 = vmatprep.subr.mxu0 0.0
        %2616 = vmatpush1.msra.mxu0 0.0
        %2617 = vmatprep.subr.mxu0 0.0
        %2618 = vmatpush1.msra.mxu0 0.0
        %2619 = vmatprep.subr.mxu0 0.0
        %2620 = vmatpush1.msra.mxu0 0.0
        %2621 = vmatprep.mubr.f32.mxu0 0.0
        %2622 = vmatmul.mubr.f32.gmra.mrb[0].mxu0 %v2546
        %v2623 = vpop.f32.mrb[0].mxu0
        %v2624 = vadd.f32 0.0, %v2623
        %v2625 = vpop.f32.mrb[0].mxu0
        %2626 = vmatprep.mubr.f32.mxu0 0.0
        %2627 = vmatmul.mubr.f32.gmra.mrb[0].mxu0 %v2549
        %v2628 = vpop.f32.mrb[0].mxu0
        %v2629 = vadd.f32 0.0, %v2628
        %v2630 = vpop.f32.mrb[0].mxu0
        %2631 = vmatprep.mubr.f32.mxu0 0.0
        %2632 = vmatmul.mubr.f32.gmra.mrb[0].mxu0 %v2552
        %v2633 = vpop.f32.mrb[0].mxu0
        %v2634 = vadd.f32 0.0, %v2633
        %v2635 = vpop.f32.mrb[0].mxu0
        %2636 = vmatprep.mubr.f32.mxu0 0.0
        %2637 = vmatmul.mubr.f32.gmra.mrb[0].mxu0 %v2555
        %v2638 = vpop.f32.mrb[0].mxu0
        %v2639 = vadd.f32 0.0, %v2638
        %v2640 = vpop.f32.mrb[0].mxu0
        %2641 = vdwg.mxu0
        %v2642 = vadd.f32 %v2521, %v2624
        %v2643 = vadd.f32 %v2522, %v2629
        %v2644 = vadd.f32 %v2523, %v2634
        %v2645 = vadd.f32 %v2524, %v2639
        %v2646 = vld [vmem:[#allocation3 + $0x4] sm:$0xff]
        %v2647 = vld [vmem:[#allocation3 + $0xc] sm:$0xff]
        %v2648 = vld [vmem:[#allocation3 + $0x14] sm:$0xff]
        %v2649 = vld [vmem:[#allocation3 + $0x1c] sm:$0xf]
        %s2650 = scalar_lea.vmem %s10, 480
        %v2651 = vld [vmem:[%s2650] sm:$0xff]
        %v2652 = vld [vmem:[%s2650 + $0x8] sm:$0xff]
        %v2653 = vld [vmem:[%s2650 + $0x10] sm:$0xff]
        %v2654 = vld [vmem:[%s2650 + $0x18] sm:$0xff]
        %v2655 = vld [vmem:[%s2650 + $0x20] sm:$0xff]
        %v2656 = vld [vmem:[%s2650 + $0x28] sm:$0xff]
        %v2657 = vld [vmem:[%s2650 + $0x30] sm:$0xff]
        %v2658 = vld [vmem:[%s2650 + $0x38] sm:$0xff]
        %v2659 = vld [vmem:[%s2650 + $0x40] sm:$0xff]
        %v2660 = vld [vmem:[%s2650 + $0x48] sm:$0xff]
        %v2661 = vld [vmem:[%s2650 + $0x50] sm:$0xff]
        %v2662 = vld [vmem:[%s2650 + $0x58] sm:$0xff]
        %v2663 = vld [vmem:[%s2650 + $0x60] sm:$0xff]
        %v2664 = vld [vmem:[%s2650 + $0x68] sm:$0xff]
        %v2665 = vld [vmem:[%s2650 + $0x70] sm:$0xff]
        %v2667 = vsel %vm2163, %v2646, 0
        %v2670 = vsel %vm2163, %v2647, 0
        %v2673 = vsel %vm2163, %v2648, 0
        %v2676 = vsel %vm2163, %v2649, 0
        %2678 = vmatprep.subr.mxu0 0.0
        %2679 = vmatpush1.msra.mxu0 %v2651
        %2680 = vmatprep.subr.mxu0 0.0
        %2681 = vmatpush1.msra.mxu0 %v2652
        %2682 = vmatprep.subr.mxu0 0.0
        %2683 = vmatpush1.msra.mxu0 %v2653
        %2684 = vmatprep.subr.mxu0 0.0
        %2685 = vmatpush1.msra.mxu0 %v2654
        %2686 = vmatprep.subr.mxu0 0.0
        %2687 = vmatpush1.msra.mxu0 %v2655
        %2688 = vmatprep.subr.mxu0 0.0
        %2689 = vmatpush1.msra.mxu0 %v2656
        %2690 = vmatprep.subr.mxu0 0.0
        %2691 = vmatpush1.msra.mxu0 %v2657
        %2692 = vmatprep.subr.mxu0 0.0
        %2693 = vmatpush1.msra.mxu0 %v2658
        %2694 = vmatprep.subr.mxu0 0.0
        %2695 = vmatpush1.msra.mxu0 %v2659
        %2696 = vmatprep.subr.mxu0 0.0
        %2697 = vmatpush1.msra.mxu0 %v2660
        %2698 = vmatprep.subr.mxu0 0.0
        %2699 = vmatpush1.msra.mxu0 %v2661
        %2700 = vmatprep.subr.mxu0 0.0
        %2701 = vmatpush1.msra.mxu0 %v2662
        %2702 = vmatprep.subr.mxu0 0.0
        %2703 = vmatpush1.msra.mxu0 %v2663
        %2704 = vmatprep.subr.mxu0 0.0
        %2705 = vmatpush1.msra.mxu0 %v2664
        %2706 = vmatprep.subr.mxu0 0.0
        %2707 = vmatpush1.msra.mxu0 %v2665
        %2708 = vmatprep.subr.mxu0 0.0
        %2709 = vmatpush1.msra.mxu0 0.0
        %2710 = vmatprep.subr.mxu0 0.0
        %2711 = vmatpush1.msra.mxu0 0.0
        %2712 = vmatprep.subr.mxu0 0.0
        %2713 = vmatpush1.msra.mxu0 0.0
        %2714 = vmatprep.subr.mxu0 0.0
        %2715 = vmatpush1.msra.mxu0 0.0
        %2716 = vmatprep.subr.mxu0 0.0
        %2717 = vmatpush1.msra.mxu0 0.0
        %2718 = vmatprep.subr.mxu0 0.0
        %2719 = vmatpush1.msra.mxu0 0.0
        %2720 = vmatprep.subr.mxu0 0.0
        %2721 = vmatpush1.msra.mxu0 0.0
        %2722 = vmatprep.subr.mxu0 0.0
        %2723 = vmatpush1.msra.mxu0 0.0
        %2724 = vmatprep.subr.mxu0 0.0
        %2725 = vmatpush1.msra.mxu0 0.0
        %2726 = vmatprep.subr.mxu0 0.0
        %2727 = vmatpush1.msra.mxu0 0.0
        %2728 = vmatprep.subr.mxu0 0.0
        %2729 = vmatpush1.msra.mxu0 0.0
        %2730 = vmatprep.subr.mxu0 0.0
        %2731 = vmatpush1.msra.mxu0 0.0
        %2732 = vmatprep.subr.mxu0 0.0
        %2733 = vmatpush1.msra.mxu0 0.0
        %2734 = vmatprep.subr.mxu0 0.0
        %2735 = vmatpush1.msra.mxu0 0.0
        %2736 = vmatprep.subr.mxu0 0.0
        %2737 = vmatpush1.msra.mxu0 0.0
        %2738 = vmatprep.subr.mxu0 0.0
        %2739 = vmatpush1.msra.mxu0 0.0
        %2740 = vmatprep.subr.mxu0 0.0
        %2741 = vmatpush1.msra.mxu0 0.0
        %2742 = vmatprep.mubr.f32.mxu0 0.0
        %2743 = vmatmul.mubr.f32.gmra.mrb[0].mxu0 %v2667
        %v2744 = vpop.f32.mrb[0].mxu0
        %v2745 = vadd.f32 0.0, %v2744
        %v2746 = vpop.f32.mrb[0].mxu0
        %2747 = vmatprep.mubr.f32.mxu0 0.0
        %2748 = vmatmul.mubr.f32.gmra.mrb[0].mxu0 %v2670
        %v2749 = vpop.f32.mrb[0].mxu0
        %v2750 = vadd.f32 0.0, %v2749
        %v2751 = vpop.f32.mrb[0].mxu0
        %2752 = vmatprep.mubr.f32.mxu0 0.0
        %2753 = vmatmul.mubr.f32.gmra.mrb[0].mxu0 %v2673
        %v2754 = vpop.f32.mrb[0].mxu0
        %v2755 = vadd.f32 0.0, %v2754
        %v2756 = vpop.f32.mrb[0].mxu0
        %2757 = vmatprep.mubr.f32.mxu0 0.0
        %2758 = vmatmul.mubr.f32.gmra.mrb[0].mxu0 %v2676
        %v2759 = vpop.f32.mrb[0].mxu0
        %v2760 = vadd.f32 0.0, %v2759
        %v2761 = vpop.f32.mrb[0].mxu0
        %2762 = vdwg.mxu0
        %v2763 = vadd.f32 %v2642, %v2745
        %v2764 = vadd.f32 %v2643, %v2750
        %v2765 = vadd.f32 %v2644, %v2755
        %v2766 = vadd.f32 %v2645, %v2760
        %v2767 = vld [vmem:[%s11] sm:$0x1]
        %v2769 = vlaneseq
        %v2770 = vshrl.u32 %v2769, 7
        %v2771 = vsub.s32 0, %v2770
        %v2772 = vrot.slane %v2767, %v2771
        %v2774 = vadd.f32 %v2763, %v2772
        %v2775 = vadd.f32 %v2764, %v2772
        %v2776 = vadd.f32 %v2765, %v2772
        %v2777 = vadd.f32 %v2766, %v2772
        %v2778 = vsub.f32 0.0, %v2774
        %v2779 = vsub.f32 0.0, %v2775
        %v2780 = vsub.f32 0.0, %v2776
        %v2781 = vsub.f32 0.0, %v2777
        %v2782 = vmul.f32 %v2778, 1.442695
        %v2783 = vpow.pop %v2782
        %v2784 = vmul.f32 %v2779, 1.442695
        %v2785 = vpow.pop %v2784
        %v2786 = vmul.f32 %v2780, 1.442695
        %v2787 = vpow.pop %v2786
        %v2788 = vmul.f32 %v2781, 1.442695
        %v2789 = vpow.pop %v2788
        %v2790 = vadd.f32 %v2783, 1.0
        %v2791 = vadd.f32 %v2785, 1.0
        %v2792 = vadd.f32 %v2787, 1.0
        %v2793 = vadd.f32 %v2789, 1.0
        %v2794 = vrcp.pop %v2790
        %v2795 = vmul.f32 1.0, %v2794
        %v2796 = vrcp.pop %v2791
        %v2797 = vmul.f32 1.0, %v2796
        %v2798 = vrcp.pop %v2792
        %v2799 = vmul.f32 1.0, %v2798
        %v2800 = vrcp.pop %v2793
        %v2801 = vmul.f32 1.0, %v2800
        %vm2802 = vcmask 228352
        %2803 = vst.msk [vmem:[%s533] sm:$0xff] %vm2802, %v2795
        %2804 = vst.msk [vmem:[%s533 + $0x8] sm:$0xff] %vm2802, %v2797
        %2805 = vst.msk [vmem:[%s533 + $0x10] sm:$0xff] %vm2802, %v2799
        %vm2806 = vcmask 224256
        %2807 = vst.msk [vmem:[%s533 + $0x18] sm:$0xf] %vm2806, %v2801
        %p2808 = scmp.lt.s32.totalorder %s33, 1
        %s2809 = scalar_select %p2808, %s33, 1
        %s2810 = smul.addr %s2809, 4
        %s2811 = smul.addr %s2810, 8
        %s2812 = scalar_lea.vmem %s12, %s2811
        %s2813 = sand.u32 %s329, 1
        %s2814 = scalar_lea.sflag [#allocation5], %s2813
        %s2815 = sand.u32 %s329, 1
        %s2816 = scalar_lea.vmem [#allocation4], %s2815
        %s2817 = sand.u32 %s33, 1
        %s2818 = scalar_lea.sflag [#allocation7], %s2817
        %s2819 = sand.u32 %s355, 1
        %s2820 = scalar_lea.vmem [#allocation6], %s2819
        %s2821 = sand.u32 %s33, 1
        %s2822 = scalar_lea.sflag [#allocation7], %s2821
        %s2823 = sand.u32 %s381, 1
        %s2824 = scalar_lea.vmem [#allocation8], %s2823
        // Predicated region
        $region69: #{vae_forward.3} parent=67 // pred_check
          %p2825 = pneg %p313
        $region70: #{vae_forward.3} parent=67 // pred_check_branch
          %2827 = sbr.rel (%p2825) target = $region72
        $region71: #{vae_forward.3} parent=67 // pred_region
          _
        $region72: #{vae_forward.3} parent=67 // pred_fallthru
          _
        // Predicated region
        $region73: #{vae_forward.3} parent=67 // pred_check
          %p2828 = pneg %p339
        $region74: #{vae_forward.3} parent=67 // pred_check_branch
          %2830 = sbr.rel (%p2828) target = $region76
        $region75: #{vae_forward.3} parent=67 // pred_region
          %s2832 = ssub.s32 16, 16
          %2833 = vsyncadd %s2814, %s2832
          %s2834 = smul.addr %s33, 16
          %s2835 = scalar_lea.hbm %s13, %s2834
          %s2837 = sshll.u32 %s2816, 4
          %s2838 = int_to_ptr.vmem [resolvable:$true] %s2837
          %2840 = dma.vmem_to_hbm [thread:$0]  %s2838, 16, %s2835, %s2814
        $region76: #{vae_forward.3} parent=67 // pred_fallthru
          _
        // Predicated region
        $region77: #{vae_forward.3} parent=67 // pred_check
          %p2841 = pneg %p365
        $region78: #{vae_forward.3} parent=67 // pred_check_branch
          %2843 = sbr.rel (%p2841) target = $region80
        $region79: #{vae_forward.3} parent=67 // pred_region
          %s2845 = ssub.s32 16, 16
          %2846 = vsyncadd %s2818, %s2845
          %s2847 = smul.addr %s33, 16
          %s2848 = scalar_lea.hbm %s14, %s2847
          %s2850 = sshll.u32 %s2820, 4
          %s2851 = int_to_ptr.vmem [resolvable:$true] %s2850
          %2853 = dma.vmem_to_hbm [thread:$0]  %s2851, 16, %s2848, %s2818
        $region80: #{vae_forward.3} parent=67 // pred_fallthru
          _
        // Predicated region
        $region81: #{vae_forward.3} parent=67 // pred_check
          %p2854 = pneg %p391
        $region82: #{vae_forward.3} parent=67 // pred_check_branch
          %2856 = sbr.rel (%p2854) target = $region84
        $region83: #{vae_forward.3} parent=67 // pred_region
          %s2858 = ssub.s32 16, 16
          %2859 = vsyncadd %s2822, %s2858
          %s2860 = smul.addr %s33, 16
          %s2861 = scalar_lea.hbm %s15, %s2860
          %s2863 = sshll.u32 %s2824, 4
          %s2864 = int_to_ptr.vmem [resolvable:$true] %s2863
          %2866 = dma.vmem_to_hbm [thread:$0]  %s2864, 16, %s2861, %s2822
        $region84: #{vae_forward.3} parent=67 // pred_fallthru
          _
      $region68: #{vae_forward.3} parent=5 // pred_fallthru
        _
      %p2867 = scmp.le.s32.totalorder 2, %s28
      // Predicated region
      $region85: #{vae_forward.3} parent=5 // pred_check
        %p2868 = pneg %p2867
      $region86: #{vae_forward.3} parent=5 // pred_check_branch
        %2870 = sbr.rel (%p2868) target = $region88
      $region87: #{vae_forward.3} parent=5 // pred_region
        %s2871 = ssub.s32 %s28, 2
        // Predicated region
        $region89: #{vae_forward.3} parent=87 // pred_check
          %p2872 = pneg %p319
        $region90: #{vae_forward.3} parent=87 // pred_check_branch
          %2874 = sbr.rel (%p2872) target = $region92
        $region91: #{vae_forward.3} parent=87 // pred_region
          %p2875 = scmp.lt.s32.totalorder %s34, 1
          %s2876 = scalar_select %p2875, %s34, 1
          %s2877 = smul.addr %s2876, 4
          %s2878 = smul.addr %s2877, 8
          %s2879 = scalar_lea.vmem %s12, %s2878
        $region92: #{vae_forward.3} parent=87 // pred_fallthru
          _
        // Predicated region
        $region93: #{vae_forward.3} parent=87 // pred_check
          %p2880 = pneg %p345
        $region94: #{vae_forward.3} parent=87 // pred_check_branch
          %2882 = sbr.rel (%p2880) target = $region96
        $region95: #{vae_forward.3} parent=87 // pred_region
          %s2883 = sand.u32 %s330, 1
          %s2884 = scalar_lea.sflag [#allocation5], %s2883
          %s2885 = sand.u32 %s330, 1
          %s2886 = scalar_lea.vmem [#allocation4], %s2885
          %2887 = dma.done %s2884, 16
        $region96: #{vae_forward.3} parent=87 // pred_fallthru
          _
        // Predicated region
        $region97: #{vae_forward.3} parent=87 // pred_check
          %p2888 = pneg %p371
        $region98: #{vae_forward.3} parent=87 // pred_check_branch
          %2890 = sbr.rel (%p2888) target = $region100
        $region99: #{vae_forward.3} parent=87 // pred_region
          %s2891 = sand.u32 %s34, 1
          %s2892 = scalar_lea.sflag [#allocation7], %s2891
          %s2893 = sand.u32 %s356, 1
          %s2894 = scalar_lea.vmem [#allocation6], %s2893
          %2895 = dma.done %s2892, 16
        $region100: #{vae_forward.3} parent=87 // pred_fallthru
          _
        // Predicated region
        $region101: #{vae_forward.3} parent=87 // pred_check
          %p2896 = pneg %p397
        $region102: #{vae_forward.3} parent=87 // pred_check_branch
          %2898 = sbr.rel (%p2896) target = $region104
        $region103: #{vae_forward.3} parent=87 // pred_region
          %s2899 = sand.u32 %s34, 1
          %s2900 = scalar_lea.sflag [#allocation7], %s2899
          %s2901 = sand.u32 %s382, 1
          %s2902 = scalar_lea.vmem [#allocation8], %s2901
          %2903 = dma.done %s2900, 16
        $region104: #{vae_forward.3} parent=87 // pred_fallthru
          _
      $region88: #{vae_forward.3} parent=5 // pred_fallthru
        _
    $region6: #{vae_forward.3} parent=1 // loop_footer
      %s32 = sadd.s32 1, %s28
    $region7: #{vae_forward.3} parent=1 // loop_footer_branch
      %27 = sbr.rel target = $region3
    $region8: #{vae_forward.3} parent=1 // loop_exit
      _
    %2904 = vsyncpa [#allocation5], 1
    %s2905 = scalar_lea.sflag [#allocation5], 1
    %2906 = vsyncpa %s2905, 1
    %2907 = vsyncpa [#allocation7], 1
    %s2908 = scalar_lea.sflag [#allocation7], 1
    %2909 = vsyncpa %s2908, 1

</llo_original>
